<compile_context>
chip_gen: v6e
topology: v6e:2x2x1
jax: 0.10.0
libtpu: 0.0.40
codegen_flags: <defaults>
</compile_context>

<pallas_src>
import functools

import jax
import jax.numpy as jnp
from jax import lax
from jax.experimental import pallas as pl
from jax.experimental.pallas import tpu as pltpu

LANE = 128
TM_TARGET = 512              # row-tile target: bigger tiles -> far fewer ~0.35us grid steps
TK_TARGET = 512              # reduction-tile target (2-D fallback path only)
VMEM_SOFT_BUDGET = 24 << 20  # stay under the 32 MiB default scoped budget (64 MiB phys on v7x)


# ----------------------------------------------------------------------------
# Small helpers
# ----------------------------------------------------------------------------
def _round_up(n, m):
    return ((n + m - 1) // m) * m


def _pad2d(a, rows, cols):
    return jnp.pad(a, ((0, rows - a.shape[0]), (0, cols - a.shape[1])))


def plan_tiling(num_nodes, tm_target=TM_TARGET):
    """Pick (n_pad, tm): pad nodes to a multiple of the row tile; keep tile count even (v7x)."""
    n_min = _round_up(num_nodes, LANE)
    tm = max(LANE, (min(tm_target, n_min) // LANE) * LANE)
    n_pad = _round_up(num_nodes, tm)
    if ((n_pad // tm) % 2 == 1 and tm >= 2 * LANE and (tm // 2) % LANE == 0
            and n_pad % (tm // 2) == 0):
        tm //= 2  # even row-tile count so both v7x TensorCores get equal strips
    return n_pad, tm


def _pick_tile(n_pad, target):
    t = max(LANE, (min(target, n_pad) // LANE) * LANE)
    while n_pad % t != 0:
        t -= LANE
    return t


def use_collapsed_reduction(n_pad, tm, h_pad):
    """True if the (tm, n_pad) adj strip (double-buffered) + resident feature matrix fit VMEM."""
    adj_strip = 2 * tm * n_pad * 2        # double-buffered bf16 adjacency row strip
    feat_res = n_pad * h_pad * 2          # VMEM-resident bf16 feature matrix
    outs = 2 * tm * h_pad * 4             # double-buffered output tiles (f32 upper bound)
    misc = h_pad * h_pad * 2 + 8 * (tm + h_pad) * 4
    return adj_strip + feat_res + outs + misc <= VMEM_SOFT_BUDGET


# ----------------------------------------------------------------------------
# One-time graph preprocessing (hoisted out of the forward pass)
# ----------------------------------------------------------------------------
def build_graph_operators(edge_index, num_nodes):
    """Binary (A+I) and d^-1/2 -- PyG GCNConv gcn_norm with the degree scaling factored out."""
    # TODO(synk): real GCN graphs are ~0.1% dense; replace the dense (A+I) with block-sparse
    # aggregation driven by PrefetchScalarGridSpec (skip empty adjacency column blocks).
    src, dst = edge_index[0], edge_index[1]
    a = jnp.zeros((num_nodes, num_nodes), jnp.float32).at[dst, src].set(1.0)
    eye = jnp.eye(num_nodes, dtype=jnp.float32)
    a = a * (1.0 - eye) + eye                      # exactly one self-loop per node
    deg = jnp.sum(a, axis=1)
    dinv = jnp.where(deg > 0, 1.0 / jnp.sqrt(deg), 0.0)
    return a, dinv


def pad_graph_operators(a_binary, dinv, n_pad):
    """One-time pad/cast to kernel operand formats (no per-forward N^2 pad/cast)."""
    n = a_binary.shape[0]
    # Binary 0/1 entries are exact in bf16; the degree scaling stays f32 in-kernel.
    # TODO(synk): store (A+I) as int8 (v5e/v6e) or fp8 e4m3 (v7x) to halve adjacency HBM bytes.
    adj_pad = jnp.zeros((n_pad, n_pad), jnp.bfloat16).at[:n, :n].set(
        a_binary.astype(jnp.bfloat16))
    dinv_pad = jnp.zeros((n_pad, 1), jnp.float32).at[:n, 0].set(dinv)
    return adj_pad, dinv_pad


# ----------------------------------------------------------------------------
# Kernels
# ----------------------------------------------------------------------------
def feature_transform_kernel(x_ref, dinv_ref, w_ref, out_ref):
    # out = D^-1/2 (x_tile @ W1)  -- bf16 operands, f32 MXU accumulate, row scaling in f32.
    xw = jnp.dot(x_ref[...], w_ref[...], preferred_element_type=jnp.float32)
    out_ref[...] = (xw * dinv_ref[...]).astype(out_ref.dtype)


def _layer1_finalize(acc, dinv, bias, w2, out_ref):
    # h = relu(D^-1/2 acc + b1);  emit (D^-1/2 h) @ W2 -> the layer-2 aggregation RHS directly.
    h_act = jnp.maximum(acc * dinv + bias, 0.0)
    out_ref[...] = jnp.dot((h_act * dinv).astype(jnp.bfloat16), w2,
                           preferred_element_type=jnp.float32).astype(out_ref.dtype)


def _layer2_finalize(acc, dinv, bias, valid_cols, out_ref):
    # log_softmax(D^-1/2 acc + b2) over the first `valid_cols` lanes (the rest is padding).
    z = acc * dinv + bias
    col = lax.broadcasted_iota(jnp.int32, z.shape, 1)
    valid = col < valid_cols
    zm = jnp.where(valid, z, -1e30)
    m = jnp.max(zm, axis=1, keepdims=True)
    s = zm - m
    lse = jnp.log(jnp.sum(jnp.where(valid, jnp.exp(s), 0.0), axis=1, keepdims=True))
    out_ref[...] = (s - lse).astype(out_ref.dtype)


def layer1_collapsed_kernel(adj_ref, feat_ref, dinv_ref, b_ref, w2_ref, out_ref):
    acc = jnp.dot(adj_ref[...], feat_ref[...], preferred_element_type=jnp.float32)
    _layer1_finalize(acc, dinv_ref[...], b_ref[...], w2_ref[...], out_ref)


def layer1_reduction_kernel(adj_ref, feat_ref, dinv_ref, b_ref, w2_ref, out_ref, acc_ref):
    k = pl.program_id(1)

    @pl.when(k == 0)
    def _():
        acc_ref[...] = jnp.zeros_like(acc_ref)

    acc_ref[...] += jnp.dot(adj_ref[...], feat_ref[...], preferred_element_type=jnp.float32)

    @pl.when(k == pl.num_programs(1) - 1)
    def _():
        _layer1_finalize(acc_ref[...], dinv_ref[...], b_ref[...], w2_ref[...], out_ref)


def make_layer2_collapsed_kernel(valid_cols):
    def kernel(adj_ref, feat_ref, dinv_ref, b_ref, out_ref):
        acc = jnp.dot(adj_ref[...], feat_ref[...], preferred_element_type=jnp.float32)
        _layer2_finalize(acc, dinv_ref[...], b_ref[...], valid_cols, out_ref)

    return kernel


def make_layer2_reduction_kernel(valid_cols):
    def kernel(adj_ref, feat_ref, dinv_ref, b_ref, out_ref, acc_ref):
        k = pl.program_id(1)

        @pl.when(k == 0)
        def _():
            acc_ref[...] = jnp.zeros_like(acc_ref)

        acc_ref[...] += jnp.dot(adj_ref[...], feat_ref[...],
                                preferred_element_type=jnp.float32)

        @pl.when(k == pl.num_programs(1) - 1)
        def _():
            _layer2_finalize(acc_ref[...], dinv_ref[...], b_ref[...], valid_cols, out_ref)

    return kernel


# ----------------------------------------------------------------------------
# pallas_call wrappers
# ----------------------------------------------------------------------------
def feature_transform(x, dinv, w, tm):
    n, f = x.shape
    h = w.shape[1]
    return pl.pallas_call(
        feature_transform_kernel,
        out_shape=jax.ShapeDtypeStruct((n, h), jnp.bfloat16),
        grid=(n // tm,),
        in_specs=[
            pl.BlockSpec((tm, f), lambda i: (i, 0)),
            pl.BlockSpec((tm, 1), lambda i: (i, 0)),
            pl.BlockSpec((f, h), lambda i: (0, 0)),
        ],
        out_specs=pl.BlockSpec((tm, h), lambda i: (i, 0)),
        compiler_params=pltpu.CompilerParams(dimension_semantics=("parallel",)),
        cost_estimate=pl.CostEstimate(
            flops=2 * n * f * h, transcendentals=0,
            bytes_accessed=int(x.size * 2 + w.size * 2 + n * h * 2)),
    )(x, dinv, w)


def aggregate_layer1(adj, feat, dinv, bias, w2, tm, tk, collapsed):
    n_pad = adj.shape[0]
    h = feat.shape[1]
    c = w2.shape[1]
    cost = pl.CostEstimate(
        flops=2 * n_pad * n_pad * h + 2 * n_pad * h * c, transcendentals=0,
        bytes_accessed=int(adj.size * 2 + feat.size * 2 + n_pad * c * 2))
    if collapsed:
        # 1-D grid: whole adjacency row strip in one MXU dot, feature matrix VMEM-resident
        # (constant index map -> DMA'd once), no reduction loop / scratch accumulator.
        # NOTE: if profiling ever shows exposed adj DMA, add pipeline_mode=pl.Buffered(3) here.
        return pl.pallas_call(
            layer1_collapsed_kernel,
            out_shape=jax.ShapeDtypeStruct((n_pad, c), jnp.bfloat16),
            grid=(n_pad // tm,),
            in_specs=[
                pl.BlockSpec((tm, n_pad), lambda i: (i, 0)),   # adjacency row strip
                pl.BlockSpec((n_pad, h), lambda i: (0, 0)),    # resident feature matrix
                pl.BlockSpec((tm, 1), lambda i: (i, 0)),       # d^-1/2 rows
                pl.BlockSpec((1, h), lambda i: (0, 0)),        # bias (resident)
                pl.BlockSpec((h, c), lambda i: (0, 0)),        # W2 (resident, fused transform)
            ],
            out_specs=pl.BlockSpec((tm, c), lambda i: (i, 0)),
            compiler_params=pltpu.CompilerParams(dimension_semantics=("parallel",)),
            cost_estimate=cost,
        )(adj, feat, dinv, bias, w2)
    # Fallback for graphs whose adjacency row strip exceeds the VMEM budget:
    # 2-D grid (rows "parallel", adjacency-column reduction "arbitrary"), streamed feature
    # tiles, f32 scratch accumulator with pl.when init/finalize.
    return pl.pallas_call(
        layer1_reduction_kernel,
        out_shape=jax.ShapeDtypeStruct((n_pad, c), jnp.bfloat16),
        grid=(n_pad // tm, n_pad // tk),
        in_specs=[
            pl.BlockSpec((tm, tk), lambda i, k: (i, k)),
            pl.BlockSpec((tk, h), lambda i, k: (k, 0)),
            pl.BlockSpec((tm, 1), lambda i, k: (i, 0)),
            pl.BlockSpec((1, h), lambda i, k: (0, 0)),
            pl.BlockSpec((h, c), lambda i, k: (0, 0)),
        ],
        out_specs=pl.BlockSpec((tm, c), lambda i, k: (i, 0)),
        scratch_shapes=[pltpu.VMEM((tm, h), jnp.float32)],
        compiler_params=pltpu.CompilerParams(
            dimension_semantics=("parallel", "arbitrary")),
        cost_estimate=cost,
    )(adj, feat, dinv, bias, w2)


def aggregate_layer2(adj, feat, dinv, bias, tm, tk, collapsed, valid_cols):
    n_pad = adj.shape[0]
    c = feat.shape[1]
    cost = pl.CostEstimate(
        flops=2 * n_pad * n_pad * c, transcendentals=n_pad * c,
        bytes_accessed=int(adj.size * 2 + feat.size * 2 + n_pad * c * 4))
    if collapsed:
        return pl.pallas_call(
            make_layer2_collapsed_kernel(valid_cols),
            out_shape=jax.ShapeDtypeStruct((n_pad, c), jnp.float32),
            grid=(n_pad // tm,),
            in_specs=[
                pl.BlockSpec((tm, n_pad), lambda i: (i, 0)),
                pl.BlockSpec((n_pad, c), lambda i: (0, 0)),
                pl.BlockSpec((tm, 1), lambda i: (i, 0)),
                pl.BlockSpec((1, c), lambda i: (0, 0)),
            ],
            out_specs=pl.BlockSpec((tm, c), lambda i: (i, 0)),
            compiler_params=pltpu.CompilerParams(dimension_semantics=("parallel",)),
            cost_estimate=cost,
        )(adj, feat, dinv, bias)
    return pl.pallas_call(
        make_layer2_reduction_kernel(valid_cols),
        out_shape=jax.ShapeDtypeStruct((n_pad, c), jnp.float32),
        grid=(n_pad // tm, n_pad // tk),
        in_specs=[
            pl.BlockSpec((tm, tk), lambda i, k: (i, k)),
            pl.BlockSpec((tk, c), lambda i, k: (k, 0)),
            pl.BlockSpec((tm, 1), lambda i, k: (i, 0)),
            pl.BlockSpec((1, c), lambda i, k: (0, 0)),
        ],
        out_specs=pl.BlockSpec((tm, c), lambda i, k: (i, 0)),
        scratch_shapes=[pltpu.VMEM((tm, c), jnp.float32)],
        compiler_params=pltpu.CompilerParams(
            dimension_semantics=("parallel", "arbitrary")),
        cost_estimate=cost,
    )(adj, feat, dinv, bias)


# ----------------------------------------------------------------------------
# Forward pass
# ----------------------------------------------------------------------------
@functools.partial(jax.jit, static_argnames=("tm", "tk", "collapsed"))
def gcn_forward(adj_bin, dinv, x, w1, b1, w2, b2, *, tm, tk, collapsed):
    """log_softmax(A_n relu(A_n (x W1) + b1) W2 + b2), A_n = D^-1/2 (A+I) D^-1/2.

    adj_bin is the pre-padded bf16 binary (A+I); dinv is the padded (n_pad, 1) f32 D^-1/2.
    """
    n_pad = adj_bin.shape[0]
    N, F = x.shape
    H = w1.shape[1]
    C = w2.shape[1]
    f_pad = _round_up(F, LANE)
    h_pad = _round_up(H, LANE)
    c_pad = _round_up(C, LANE)

    # Small per-call pads (features / weights only -- the N^2 adjacency is preprocessed once).
    x_p = _pad2d(x, n_pad, f_pad).astype(jnp.bfloat16)
    w1_p = _pad2d(w1, f_pad, h_pad).astype(jnp.bfloat16)
    w2_p = _pad2d(w2, h_pad, c_pad).astype(jnp.bfloat16)
    b1_p = _pad2d(b1.reshape(1, H).astype(jnp.float32), 1, h_pad)
    b2_p = _pad2d(b2.reshape(1, C).astype(jnp.float32), 1, c_pad)

    # Layer-1 aggregation RHS:  D^-1/2 (x @ W1).
    feat1 = feature_transform(x_p, dinv, w1_p, tm)
    # Layer-1 aggregation with fused finalize: emits (D^-1/2 relu(D^-1/2 (A+I) feat1 + b1)) @ W2,
    # i.e. directly the layer-2 aggregation RHS (no extra pallas_call / HBM round trip for h).
    feat2 = aggregate_layer1(adj_bin, feat1, dinv, b1_p, w2_p, tm, tk, collapsed)
    # Dropout: module uses F.dropout(x, training=self.training); inference path is identity.
    # TODO(synk): training-mode dropout via pltpu.prng_seed/prng_random_bits if needed.
    # Layer-2 aggregation + bias + masked log_softmax.
    out = aggregate_layer2(adj_bin, feat2, dinv, b2_p, tm, tk, collapsed, C)
    return out[:N, :C]


def gcn_reference(adj_norm, x, w1, b1, w2, b2):
    h = adj_norm @ (x @ w1) + b1
    h = jnp.maximum(h, 0.0)
    z = adj_norm @ (h @ w2) + b2
    return jax.nn.log_softmax(z, axis=1)


if __name__ == "__main__":
    # Small synthetic "Cora-like" graph (non-multiple-of-128 node count exercises padding).
    N = 500        # nodes
    F_IN = 32      # num_node_features
    HIDDEN = 16    # GCNConv(num_node_features, 16)
    C = 7          # num_classes (Cora has 7)
    E = 2000       # directed edges

    key = jax.random.PRNGKey(0)
    k_x, k_e, k_w1, k_w2 = jax.random.split(key, 4)

    x = jax.random.normal(k_x, (N, F_IN), dtype=jnp.float32)
    edge_index = jax.random.randint(k_e, (2, E), 0, N, dtype=jnp.int32)

    # Deterministic Glorot-style parameter init (GCNConv weights) + zero biases.
    w1 = jax.random.uniform(k_w1, (F_IN, HIDDEN), jnp.float32, -1.0, 1.0) * jnp.sqrt(
        6.0 / (F_IN + HIDDEN))
    b1 = jnp.zeros((HIDDEN,), jnp.float32)
    w2 = jax.random.uniform(k_w2, (HIDDEN, C), jnp.float32, -1.0, 1.0) * jnp.sqrt(
        6.0 / (HIDDEN + C))
    b2 = jnp.zeros((C,), jnp.float32)

    # Tiling plan + one-time graph preprocessing (hoisted out of the forward).
    n_pad, tm = plan_tiling(N)
    h_pad = _round_up(HIDDEN, LANE)
    collapsed = use_collapsed_reduction(n_pad, tm, h_pad)
    tk = n_pad if collapsed else _pick_tile(n_pad, TK_TARGET)

    a_bin, dinv = build_graph_operators(edge_index, N)
    adj_pad, dinv_pad = pad_graph_operators(a_bin, dinv, n_pad)
    adj_pad, dinv_pad = jax.block_until_ready((adj_pad, dinv_pad))

    out = gcn_forward(adj_pad, dinv_pad, x, w1, b1, w2, b2,
                      tm=tm, tk=tk, collapsed=collapsed)
    out = jax.block_until_ready(out)

    assert out.shape == (N, C)

    # Sanity 1: rows of log_softmax must exp-sum to 1 (softmax done in f32 in-kernel).
    row_sums = jnp.sum(jnp.exp(out), axis=1)
    assert bool(jnp.all(jnp.abs(row_sums - 1.0) < 1e-3))

    # Sanity 2: close to the pure-JAX f32 reference.  The adjacency is exact (binary bf16 with
    # f32 degree scaling); remaining error is only from bf16 feature/weight operands.
    adj_norm = dinv[:, None] * a_bin * dinv[None, :]
    ref = gcn_reference(adj_norm, x, w1, b1, w2, b2)
    assert bool(jnp.max(jnp.abs(out - ref)) < 0.15)

    print("KERNEL_OK")
</pallas_src>

<mosaic_0001>
module attributes {stable_mosaic.version = 11 : i64} {
  func.func @feature_transform_kernel(%arg0: i32, %arg1: memref<256x128xbf16, #tpu.memory_space<vmem>>, %arg2: memref<256x1xf32, #tpu.memory_space<vmem>>, %arg3: memref<128x128xbf16, #tpu.memory_space<vmem>>, %arg4: memref<256x128xbf16, #tpu.memory_space<vmem>>) attributes {dimension_semantics = [#tpu.dimension_semantics<parallel>], iteration_bounds = array<i64: 2>, scalar_prefetch = 0 : i64, scratch_operands = 0 : i64, tpu.core_type = #tpu.core_type<tc>, window_params = [{transform_indices = @transform_0, window_bounds = array<i64: 256, 128>}, {transform_indices = @transform_1, window_bounds = array<i64: 256, 1>}, {pipeline_mode = #tpu.pipeline_mode<synchronous>, transform_indices = @transform_2, window_bounds = array<i64: 128, 128>}, {transform_indices = @transform_3, window_bounds = array<i64: 256, 128>}]} {
    %c0 = arith.constant 0 : index
    %c0_0 = arith.constant 0 : index
    %0 = vector.load %arg1[%c0, %c0_0] : memref<256x128xbf16, #tpu.memory_space<vmem>>, vector<256x128xbf16>
    %c0_1 = arith.constant 0 : index
    %c0_2 = arith.constant 0 : index
    %1 = vector.load %arg3[%c0_1, %c0_2] : memref<128x128xbf16, #tpu.memory_space<vmem>>, vector<128x128xbf16>
    %cst = arith.constant dense<0.000000e+00> : vector<256x128xf32>
    %2 = tpu.matmul %0, %1, %cst {dimension_numbers = #tpu.dot_dimension_numbers<[1], [0], [0], [1], [0, 0, 1, 1], [], []>} : vector<256x128xbf16>, vector<128x128xbf16>, vector<256x128xf32> -> vector<256x128xf32>
    %c0_3 = arith.constant 0 : index
    %c0_4 = arith.constant 0 : index
    %3 = vector.load %arg2[%c0_3, %c0_4] : memref<256x1xf32, #tpu.memory_space<vmem>>, vector<256x1xf32>
    %4 = vector.broadcast %3 : vector<256x1xf32> to vector<256x128xf32>
    %5 = arith.mulf %2, %4 : vector<256x128xf32>
    %6 = arith.truncf %5 : vector<256x128xf32> to vector<256x128xbf16>
    %c0_5 = arith.constant 0 : index
    %c0_6 = arith.constant 0 : index
    %7 = vector.load %arg4[%c0_5, %c0_6] : memref<256x128xbf16, #tpu.memory_space<vmem>>, vector<256x128xbf16>
    tpu.vector_store %arg4[%c0_5, %c0_6], %6 {strides = array<i32>} : memref<256x128xbf16, #tpu.memory_space<vmem>>, vector<256x128xbf16>,
    return
  }
  func.func @transform_0(%arg0: i32) -> (i32, i32) {
    %c0_i32 = arith.constant 0 : i32
    %c0_i32_0 = arith.constant 0 : i32
    return %arg0, %c0_i32 : i32, i32
  }
  func.func @transform_1(%arg0: i32) -> (i32, i32) {
    %c0_i32 = arith.constant 0 : i32
    %c0_i32_0 = arith.constant 0 : i32
    return %arg0, %c0_i32 : i32, i32
  }
  func.func @transform_2(%arg0: i32) -> (i32, i32) {
    %c0_i32 = arith.constant 0 : i32
    %c0_i32_0 = arith.constant 0 : i32
    %c0_i32_1 = arith.constant 0 : i32
    return %c0_i32, %c0_i32_0 : i32, i32
  }
  func.func @transform_3(%arg0: i32) -> (i32, i32) {
    %c0_i32 = arith.constant 0 : i32
    %c0_i32_0 = arith.constant 0 : i32
    return %arg0, %c0_i32 : i32, i32
  }
}

module attributes {stable_mosaic.version = 11 : i64} {
  func.func @layer1_collapsed_kernel(%arg0: i32, %arg1: memref<256x512xbf16, #tpu.memory_space<vmem>>, %arg2: memref<512x128xbf16, #tpu.memory_space<vmem>>, %arg3: memref<256x1xf32, #tpu.memory_space<vmem>>, %arg4: memref<1x128xf32, #tpu.memory_space<vmem>>, %arg5: memref<128x128xbf16, #tpu.memory_space<vmem>>, %arg6: memref<256x128xbf16, #tpu.memory_space<vmem>>) attributes {dimension_semantics = [#tpu.dimension_semantics<parallel>], iteration_bounds = array<i64: 2>, scalar_prefetch = 0 : i64, scratch_operands = 0 : i64, tpu.core_type = #tpu.core_type<tc>, window_params = [{transform_indices = @transform_0, window_bounds = array<i64: 256, 512>}, {pipeline_mode = #tpu.pipeline_mode<synchronous>, transform_indices = @transform_1, window_bounds = array<i64: 512, 128>}, {transform_indices = @transform_2, window_bounds = array<i64: 256, 1>}, {pipeline_mode = #tpu.pipeline_mode<synchronous>, transform_indices = @transform_3, window_bounds = array<i64: 1, 128>}, {pipeline_mode = #tpu.pipeline_mode<synchronous>, transform_indices = @transform_4, window_bounds = array<i64: 128, 128>}, {transform_indices = @transform_5, window_bounds = array<i64: 256, 128>}]} {
    %c0 = arith.constant 0 : index
    %c0_0 = arith.constant 0 : index
    %0 = vector.load %arg1[%c0, %c0_0] : memref<256x512xbf16, #tpu.memory_space<vmem>>, vector<256x512xbf16>
    %c0_1 = arith.constant 0 : index
    %c0_2 = arith.constant 0 : index
    %1 = vector.load %arg2[%c0_1, %c0_2] : memref<512x128xbf16, #tpu.memory_space<vmem>>, vector<512x128xbf16>
    %cst = arith.constant dense<0.000000e+00> : vector<256x128xf32>
    %2 = tpu.matmul %0, %1, %cst {dimension_numbers = #tpu.dot_dimension_numbers<[1], [0], [0], [1], [0, 0, 1, 1], [], []>} : vector<256x512xbf16>, vector<512x128xbf16>, vector<256x128xf32> -> vector<256x128xf32>
    %c0_3 = arith.constant 0 : index
    %c0_4 = arith.constant 0 : index
    %3 = vector.load %arg3[%c0_3, %c0_4] : memref<256x1xf32, #tpu.memory_space<vmem>>, vector<256x1xf32>
    %c0_5 = arith.constant 0 : index
    %c0_6 = arith.constant 0 : index
    %4 = vector.load %arg4[%c0_5, %c0_6] : memref<1x128xf32, #tpu.memory_space<vmem>>, vector<1x128xf32>
    %c0_7 = arith.constant 0 : index
    %c0_8 = arith.constant 0 : index
    %5 = vector.load %arg5[%c0_7, %c0_8] : memref<128x128xbf16, #tpu.memory_space<vmem>>, vector<128x128xbf16>
    %6 = vector.broadcast %3 : vector<256x1xf32> to vector<256x128xf32>
    %7 = arith.mulf %2, %6 : vector<256x128xf32>
    %8 = vector.broadcast %4 : vector<1x128xf32> to vector<256x128xf32>
    %9 = arith.addf %7, %8 : vector<256x128xf32>
    %cst_9 = arith.constant 0.000000e+00 : f32
    %10 = vector.broadcast %cst_9 : f32 to vector<256x128xf32>
    %11 = arith.maximumf %9, %10 : vector<256x128xf32>
    %12 = vector.broadcast %3 : vector<256x1xf32> to vector<256x128xf32>
    %13 = arith.mulf %11, %12 : vector<256x128xf32>
    %14 = arith.truncf %13 : vector<256x128xf32> to vector<256x128xbf16>
    %cst_10 = arith.constant dense<0.000000e+00> : vector<256x128xf32>
    %15 = tpu.matmul %14, %5, %cst_10 {dimension_numbers = #tpu.dot_dimension_numbers<[1], [0], [0], [1], [0, 0, 1, 1], [], []>} : vector<256x128xbf16>, vector<128x128xbf16>, vector<256x128xf32> -> vector<256x128xf32>
    %16 = arith.truncf %15 : vector<256x128xf32> to vector<256x128xbf16>
    %c0_11 = arith.constant 0 : index
    %c0_12 = arith.constant 0 : index
    %17 = vector.load %arg6[%c0_11, %c0_12] : memref<256x128xbf16, #tpu.memory_space<vmem>>, vector<256x128xbf16>
    tpu.vector_store %arg6[%c0_11, %c0_12], %16 {strides = array<i32>} : memref<256x128xbf16, #tpu.memory_space<vmem>>, vector<256x128xbf16>,
    return
  }
  func.func @transform_0(%arg0: i32) -> (i32, i32) {
    %c0_i32 = arith.constant 0 : i32
    %c0_i32_0 = arith.constant 0 : i32
    return %arg0, %c0_i32 : i32, i32
  }
  func.func @transform_1(%arg0: i32) -> (i32, i32) {
    %c0_i32 = arith.constant 0 : i32
    %c0_i32_0 = arith.constant 0 : i32
    %c0_i32_1 = arith.constant 0 : i32
    return %c0_i32, %c0_i32_0 : i32, i32
  }
  func.func @transform_2(%arg0: i32) -> (i32, i32) {
    %c0_i32 = arith.constant 0 : i32
    %c0_i32_0 = arith.constant 0 : i32
    return %arg0, %c0_i32 : i32, i32
  }
  func.func @transform_3(%arg0: i32) -> (i32, i32) {
    %c0_i32 = arith.constant 0 : i32
    %c0_i32_0 = arith.constant 0 : i32
    %c0_i32_1 = arith.constant 0 : i32
    return %c0_i32, %c0_i32_0 : i32, i32
  }
  func.func @transform_4(%arg0: i32) -> (i32, i32) {
    %c0_i32 = arith.constant 0 : i32
    %c0_i32_0 = arith.constant 0 : i32
    %c0_i32_1 = arith.constant 0 : i32
    return %c0_i32, %c0_i32_0 : i32, i32
  }
  func.func @transform_5(%arg0: i32) -> (i32, i32) {
    %c0_i32 = arith.constant 0 : i32
    %c0_i32_0 = arith.constant 0 : i32
    return %arg0, %c0_i32 : i32, i32
  }
}

module attributes {stable_mosaic.version = 11 : i64} {
  func.func @kernel(%arg0: i32, %arg1: memref<256x512xbf16, #tpu.memory_space<vmem>>, %arg2: memref<512x128xbf16, #tpu.memory_space<vmem>>, %arg3: memref<256x1xf32, #tpu.memory_space<vmem>>, %arg4: memref<1x128xf32, #tpu.memory_space<vmem>>, %arg5: memref<256x128xf32, #tpu.memory_space<vmem>>) attributes {dimension_semantics = [#tpu.dimension_semantics<parallel>], iteration_bounds = array<i64: 2>, scalar_prefetch = 0 : i64, scratch_operands = 0 : i64, tpu.core_type = #tpu.core_type<tc>, window_params = [{transform_indices = @transform_0, window_bounds = array<i64: 256, 512>}, {pipeline_mode = #tpu.pipeline_mode<synchronous>, transform_indices = @transform_1, window_bounds = array<i64: 512, 128>}, {transform_indices = @transform_2, window_bounds = array<i64: 256, 1>}, {pipeline_mode = #tpu.pipeline_mode<synchronous>, transform_indices = @transform_3, window_bounds = array<i64: 1, 128>}, {transform_indices = @transform_4, window_bounds = array<i64: 256, 128>}]} {
    %c0 = arith.constant 0 : index
    %c0_0 = arith.constant 0 : index
    %0 = vector.load %arg1[%c0, %c0_0] : memref<256x512xbf16, #tpu.memory_space<vmem>>, vector<256x512xbf16>
    %c0_1 = arith.constant 0 : index
    %c0_2 = arith.constant 0 : index
    %1 = vector.load %arg2[%c0_1, %c0_2] : memref<512x128xbf16, #tpu.memory_space<vmem>>, vector<512x128xbf16>
    %cst = arith.constant dense<0.000000e+00> : vector<256x128xf32>
    %2 = tpu.matmul %0, %1, %cst {dimension_numbers = #tpu.dot_dimension_numbers<[1], [0], [0], [1], [0, 0, 1, 1], [], []>} : vector<256x512xbf16>, vector<512x128xbf16>, vector<256x128xf32> -> vector<256x128xf32>
    %c0_3 = arith.constant 0 : index
    %c0_4 = arith.constant 0 : index
    %3 = vector.load %arg3[%c0_3, %c0_4] : memref<256x1xf32, #tpu.memory_space<vmem>>, vector<256x1xf32>
    %c0_5 = arith.constant 0 : index
    %c0_6 = arith.constant 0 : index
    %4 = vector.load %arg4[%c0_5, %c0_6] : memref<1x128xf32, #tpu.memory_space<vmem>>, vector<1x128xf32>
    %5 = vector.broadcast %3 : vector<256x1xf32> to vector<256x128xf32>
    %6 = arith.mulf %2, %5 : vector<256x128xf32>
    %7 = vector.broadcast %4 : vector<1x128xf32> to vector<256x128xf32>
    %8 = arith.addf %6, %7 : vector<256x128xf32>
    %9 = tpu.iota {dimensions = array<i32: 1>} : vector<256x128xi32>
    %c7_i32 = arith.constant 7 : i32
    %10 = vector.broadcast %c7_i32 : i32 to vector<256x128xi32>
    %11 = arith.cmpi slt, %9, %10 : vector<256x128xi32>
    %cst_7 = arith.constant -1.000000e+30 : f32
    %12 = vector.broadcast %cst_7 : f32 to vector<256x128xf32>
    %13 = arith.select %11, %8, %12 : vector<256x128xi1>, vector<256x128xf32>
    %cst_8 = arith.constant dense<0xFF800000> : vector<256xf32>
    %14 = vector.multi_reduction <maximumf>, %13, %cst_8 [1] : vector<256x128xf32> to vector<256xf32>
    %15 = vector.shape_cast %14 : vector<256xf32> to vector<256x1xf32>
    %16 = vector.broadcast %15 : vector<256x1xf32> to vector<256x128xf32>
    %17 = arith.subf %13, %16 : vector<256x128xf32>
    %18 = math.exp %17 : vector<256x128xf32>
    %cst_9 = arith.constant 0.000000e+00 : f32
    %19 = vector.broadcast %cst_9 : f32 to vector<256x128xf32>
    %20 = arith.select %11, %18, %19 : vector<256x128xi1>, vector<256x128xf32>
    %cst_10 = arith.constant dense<0.000000e+00> : vector<256xf32>
    %21 = vector.multi_reduction <add>, %20, %cst_10 [1] : vector<256x128xf32> to vector<256xf32>
    %22 = vector.shape_cast %21 : vector<256xf32> to vector<256x1xf32>
    %23 = math.log %22 : vector<256x1xf32>
    %24 = vector.broadcast %23 : vector<256x1xf32> to vector<256x128xf32>
    %25 = arith.subf %17, %24 : vector<256x128xf32>
    %c0_11 = arith.constant 0 : index
    %c0_12 = arith.constant 0 : index
    %26 = vector.load %arg5[%c0_11, %c0_12] : memref<256x128xf32, #tpu.memory_space<vmem>>, vector<256x128xf32>
    tpu.vector_store %arg5[%c0_11, %c0_12], %25 {strides = array<i32>} : memref<256x128xf32, #tpu.memory_space<vmem>>, vector<256x128xf32>,
    return
  }
  func.func @transform_0(%arg0: i32) -> (i32, i32) {
    %c0_i32 = arith.constant 0 : i32
    %c0_i32_0 = arith.constant 0 : i32
    return %arg0, %c0_i32 : i32, i32
  }
  func.func @transform_1(%arg0: i32) -> (i32, i32) {
    %c0_i32 = arith.constant 0 : i32
    %c0_i32_0 = arith.constant 0 : i32
    %c0_i32_1 = arith.constant 0 : i32
    return %c0_i32, %c0_i32_0 : i32, i32
  }
  func.func @transform_2(%arg0: i32) -> (i32, i32) {
    %c0_i32 = arith.constant 0 : i32
    %c0_i32_0 = arith.constant 0 : i32
    return %arg0, %c0_i32 : i32, i32
  }
  func.func @transform_3(%arg0: i32) -> (i32, i32) {
    %c0_i32 = arith.constant 0 : i32
    %c0_i32_0 = arith.constant 0 : i32
    %c0_i32_1 = arith.constant 0 : i32
    return %c0_i32, %c0_i32_0 : i32, i32
  }
  func.func @transform_4(%arg0: i32) -> (i32, i32) {
    %c0_i32 = arith.constant 0 : i32
    %c0_i32_0 = arith.constant 0 : i32
    return %arg0, %c0_i32 : i32, i32
  }
}

</mosaic_0001>

<llo_original>
// kernel: gcn_forward.3
$region0: #{gcn_forward.3}
  #allocation0 [shape = 'u32[]', space=smem, size = 0x4, offset = 0x4, fixed_abs, tag = 'smem constant byte address 0x4 - core index']
  #allocation1 [shape = 'u32[144,128]{1,0:T(1,128)}', space=vmem, size = 0x12000, scoped, tag = 'internal scratch']
  %s0 = inlined_call_operand.vmem [shape: bf16[512,128], index: 0, kind: input, shape index: {}]
  %s1 = inlined_call_operand.vmem [shape: f32[512,1], index: 1, kind: input, shape index: {}]
  %s2 = inlined_call_operand.vmem [shape: bf16[128,128], index: 2, kind: input, shape index: {}]
  %s3 = inlined_call_operand.vmem [shape: bf16[512,128], index: 3, kind: output, shape index: {}]
  %s4 = sld [smem:[#allocation0]]
  $region45: #{gcn_forward.3} parent=0
    _
  %s6 = ssub.s32 1, %s4
  %s7 = scalar_select 0, %s6, %s4
  loop: start=0, step=1, limit=4
  $region2: #{gcn_forward.3} parent=0 // loop_pre_header
    _
  $region3: #{gcn_forward.3} parent=0 // loop_header
    %s9 = sphi 0, %s13
    %p10 = scmp.ge.s32.totalorder %s9, 4
    %s19 = sphi 0, %s21
    %s22 = sphi 0, %s19
    %s23 = sphi 0, %s22
    %s39 = sphi 0, %s23
    %s45 = sphi 0, %s47
    %s48 = sphi 0, %s45
    %s49 = sphi 0, %s48
    %s65 = sphi 0, %s49
    %s69 = sphi 0, %s69
    %s71 = sphi 0, %s69
    %s72 = sphi 0, %s71
    %s86 = sphi 0, %s72
    %s92 = sphi 0, %s94
    %s95 = sphi 0, %s92
    %s96 = sphi 0, %s95
    %s112 = sphi 0, %s96
  $region4: #{gcn_forward.3} parent=0 // loop_header_branch
    %12 = sbr.rel (%p10) target = $region8
  $region5: #{gcn_forward.3} parent=0 // loop_body
    %s14 = ssub.s32 %s9, 1
    %s15 = ssub.s32 %s9, 2
    %s16 = sadd.s32 %s9, 1
    %s17 = ssub.s32 %s9, %s16
    %p18 = scmp.eq.s32.totalorder %s17, 0
    %s20 = sadd.s32 %s19, 1
    %s21 = scalar_select %p18, %s19, %s20
    %p24 = pneg %p18
    %p25 = scmp.eq.s32.totalorder %s9, 1
    %p26 = por %p24, %p25
    %p27 = scmp.ne.s32.totalorder %s19, %s22
    %p28 = scmp.eq.s32.totalorder %s9, 0
    %p29 = por %p27, %p28
    %p30 = scmp.ne.s32.totalorder %s19, %s22
    %p31 = scmp.eq.s32.totalorder %s14, 1
    %p32 = por %p30, %p31
    %p33 = scmp.ne.s32.totalorder %s22, %s23
    %p34 = scmp.eq.s32.totalorder %s14, 0
    %p35 = por %p33, %p34
    %p36 = scmp.ne.s32.totalorder %s22, %s23
    %p37 = scmp.eq.s32.totalorder %s15, 1
    %p38 = por %p36, %p37
    %p40 = scmp.ne.s32.totalorder %s23, %s39
    %p41 = scmp.eq.s32.totalorder %s15, 0
    %p42 = por %p40, %p41
    %s43 = ssub.s32 %s9, %s16
    %p44 = scmp.eq.s32.totalorder %s43, 0
    %s46 = sadd.s32 %s45, 1
    %s47 = scalar_select %p44, %s45, %s46
    %p50 = pneg %p44
    %p51 = scmp.eq.s32.totalorder %s9, 1
    %p52 = por %p50, %p51
    %p53 = scmp.ne.s32.totalorder %s45, %s48
    %p54 = scmp.eq.s32.totalorder %s9, 0
    %p55 = por %p53, %p54
    %p56 = scmp.ne.s32.totalorder %s45, %s48
    %p57 = scmp.eq.s32.totalorder %s14, 1
    %p58 = por %p56, %p57
    %p59 = scmp.ne.s32.totalorder %s48, %s49
    %p60 = scmp.eq.s32.totalorder %s14, 0
    %p61 = por %p59, %p60
    %p62 = scmp.ne.s32.totalorder %s48, %s49
    %p63 = scmp.eq.s32.totalorder %s15, 1
    %p64 = por %p62, %p63
    %p66 = scmp.ne.s32.totalorder %s49, %s65
    %p67 = scmp.eq.s32.totalorder %s15, 0
    %p68 = por %p66, %p67
    %s70 = sadd.s32 %s69, 1
    %p73 = scmp.eq.s32.totalorder %s9, 1
    %p74 = scmp.ne.s32.totalorder %s69, %s71
    %p75 = scmp.eq.s32.totalorder %s9, 0
    %p76 = por %p74, %p75
    %p77 = scmp.ne.s32.totalorder %s69, %s71
    %p78 = scmp.eq.s32.totalorder %s14, 1
    %p79 = por %p77, %p78
    %p80 = scmp.ne.s32.totalorder %s71, %s72
    %p81 = scmp.eq.s32.totalorder %s14, 0
    %p82 = por %p80, %p81
    %p83 = scmp.ne.s32.totalorder %s71, %s72
    %p84 = scmp.eq.s32.totalorder %s15, 1
    %p85 = por %p83, %p84
    %p87 = scmp.ne.s32.totalorder %s72, %s86
    %p88 = scmp.eq.s32.totalorder %s15, 0
    %p89 = por %p87, %p88
    %s90 = ssub.s32 %s9, %s16
    %p91 = scmp.eq.s32.totalorder %s90, 0
    %s93 = sadd.s32 %s92, 1
    %s94 = scalar_select %p91, %s92, %s93
    %p97 = pneg %p91
    %p98 = scmp.eq.s32.totalorder %s9, 1
    %p99 = por %p97, %p98
    %p100 = scmp.ne.s32.totalorder %s92, %s95
    %p101 = scmp.eq.s32.totalorder %s9, 0
    %p102 = por %p100, %p101
    %p103 = scmp.ne.s32.totalorder %s92, %s95
    %p104 = scmp.eq.s32.totalorder %s14, 1
    %p105 = por %p103, %p104
    %p106 = scmp.ne.s32.totalorder %s95, %s96
    %p107 = scmp.eq.s32.totalorder %s14, 0
    %p108 = por %p106, %p107
    %p109 = scmp.ne.s32.totalorder %s95, %s96
    %p110 = scmp.eq.s32.totalorder %s15, 1
    %p111 = por %p109, %p110
    %p113 = scmp.ne.s32.totalorder %s96, %s112
    %p114 = scmp.eq.s32.totalorder %s15, 0
    %p115 = por %p113, %p114
    %p116 = scmp.le.s32.totalorder 1, %s9
    %p117 = scmp.lt.s32.totalorder %s9, 3
    %p118 = pnand %p116, %p117
    %p119 = pneg %p118
    // Predicated region
    $region9: #{gcn_forward.3} parent=5 // pred_check
      _
    $region10: #{gcn_forward.3} parent=5 // pred_check_branch
      %121 = sbr.rel (%p118) target = $region12
    $region11: #{gcn_forward.3} parent=5 // pred_region
      %s122 = ssub.s32 %s9, 1
      // Predicated region
      $region13: #{gcn_forward.3} parent=11 // pred_check
        %p123 = pneg %p82
      $region14: #{gcn_forward.3} parent=11 // pred_check_branch
        %125 = sbr.rel (%p123) target = $region16
      $region15: #{gcn_forward.3} parent=11 // pred_region
        _
      $region16: #{gcn_forward.3} parent=11 // pred_fallthru
        _
    $region12: #{gcn_forward.3} parent=5 // pred_fallthru
      _
    %p126 = scmp.lt.s32.totalorder %s9, 2
    // Predicated region
    $region17: #{gcn_forward.3} parent=5 // pred_check
      %p127 = pneg %p126
    $region18: #{gcn_forward.3} parent=5 // pred_check_branch
      %129 = sbr.rel (%p127) target = $region20
    $region19: #{gcn_forward.3} parent=5 // pred_region
      // Predicated region
      $region21: #{gcn_forward.3} parent=19 // pred_check
        %p130 = pneg %p29
      $region22: #{gcn_forward.3} parent=19 // pred_check_branch
        %132 = sbr.rel (%p130) target = $region24
      $region23: #{gcn_forward.3} parent=19 // pred_region
        %s133 = smul.u32 32, %s9
        %p134 = scmp.lt.s32.totalorder %s133, 63
        %s135 = scalar_select %p134, %s133, 63
        %s136 = smul.addr %s135, 4
        %s137 = scalar_lea.vmem %s0, %s136
        %s138 = smul.u32 32, %s9
      $region24: #{gcn_forward.3} parent=19 // pred_fallthru
        _
      // Predicated region
      $region25: #{gcn_forward.3} parent=19 // pred_check
        %p139 = pneg %p55
      $region26: #{gcn_forward.3} parent=19 // pred_check_branch
        %141 = sbr.rel (%p139) target = $region28
      $region27: #{gcn_forward.3} parent=19 // pred_region
        %s142 = smul.u32 32, %s9
        %p143 = scmp.lt.s32.totalorder %s142, 63
        %s144 = scalar_select %p143, %s142, 63
        %s145 = smul.addr %s144, 8
        %s146 = scalar_lea.vmem %s1, %s145
        %s147 = smul.u32 32, %s9
      $region28: #{gcn_forward.3} parent=19 // pred_fallthru
        _
    $region20: #{gcn_forward.3} parent=5 // pred_fallthru
      _
    %p148 = scmp.le.s32.totalorder 1, %s9
    %p149 = scmp.lt.s32.totalorder %s9, 3
    %p150 = pnand %p148, %p149
    %p151 = pneg %p150
    // Predicated region
    $region29: #{gcn_forward.3} parent=5 // pred_check
      _
    $region30: #{gcn_forward.3} parent=5 // pred_check_branch
      %153 = sbr.rel (%p150) target = $region32
    $region31: #{gcn_forward.3} parent=5 // pred_region
      %s154 = ssub.s32 %s9, 1
      %s155 = smul.u32 32, %s14
      %p156 = scmp.lt.s32.totalorder %s155, 63
      %s157 = scalar_select %p156, %s155, 63
      %s158 = smul.addr %s157, 4
      %s159 = scalar_lea.vmem %s0, %s158
      %p160 = pneg %p35
      %p161 = pneg %p32
      %s162 = smul.u32 32, %s14
      %p163 = scmp.lt.s32.totalorder %s162, 63
      %s164 = scalar_select %p163, %s162, 63
      %s165 = smul.addr %s164, 8
      %s166 = scalar_lea.vmem %s1, %s165
      %p167 = pneg %p61
      %p168 = pneg %p58
      %p169 = pneg %p82
      %p170 = pneg %p79
      %p171 = pneg %p108
      %p172 = pneg %p105
      %s173 = smul.u32 32, %s14
      %p174 = scmp.lt.s32.totalorder %s173, 63
      %s175 = scalar_select %p174, %s173, 63
      %s176 = smul.addr %s175, 4
      %s177 = scalar_lea.vmem %s3, %s176
      %s178 = smul.u32 32, %s14
      %p179 = scmp.lt.s32.totalorder %s178, 63
      %s180 = scalar_select %p179, %s178, 63
      %s181 = smul.addr %s180, 4
      %s182 = scalar_lea.vmem %s0, %s181
      %s183 = smul.u32 32, %s14
      %s184 = smul.u32 32, %s14
      %p185 = scmp.lt.s32.totalorder %s184, 63
      %s186 = scalar_select %p185, %s184, 63
      %s187 = smul.addr %s186, 8
      %s188 = scalar_lea.vmem %s1, %s187
      %s189 = smul.u32 32, %s14
      %s190 = smul.u32 32, %s14
      %p191 = scmp.lt.s32.totalorder %s190, 63
      %s192 = scalar_select %p191, %s190, 63
      %s193 = smul.addr %s192, 4
      %s194 = scalar_lea.vmem %s3, %s193
      %s195 = smul.u32 32, %s14
      %v197 = vld [vmem:[%s182] sm:$0xf]
      %v198 = vld [vmem:[%s182 + $0x4] sm:$0xf]
      %v199 = vld [vmem:[%s182 + $0x8] sm:$0xf]
      %v200 = vld [vmem:[%s182 + $0xc] sm:$0xf]
      %v201 = vld [vmem:[%s182 + $0x10] sm:$0xf]
      %v202 = vld [vmem:[%s182 + $0x14] sm:$0xf]
      %v203 = vld [vmem:[%s182 + $0x18] sm:$0xf]
      %v204 = vld [vmem:[%s182 + $0x1c] sm:$0xf]
      %v205 = vld [vmem:[%s182 + $0x20] sm:$0xf]
      %v206 = vld [vmem:[%s182 + $0x24] sm:$0xf]
      %v207 = vld [vmem:[%s182 + $0x28] sm:$0xf]
      %v208 = vld [vmem:[%s182 + $0x2c] sm:$0xf]
      %v209 = vld [vmem:[%s182 + $0x30] sm:$0xf]
      %v210 = vld [vmem:[%s182 + $0x34] sm:$0xf]
      %v211 = vld [vmem:[%s182 + $0x38] sm:$0xf]
      %v212 = vld [vmem:[%s182 + $0x3c] sm:$0xf]
      %v213 = vld [vmem:[%s182 + $0x40] sm:$0xf]
      %v214 = vld [vmem:[%s182 + $0x44] sm:$0xf]
      %v215 = vld [vmem:[%s182 + $0x48] sm:$0xf]
      %v216 = vld [vmem:[%s182 + $0x4c] sm:$0xf]
      %v217 = vld [vmem:[%s182 + $0x50] sm:$0xf]
      %v218 = vld [vmem:[%s182 + $0x54] sm:$0xf]
      %v219 = vld [vmem:[%s182 + $0x58] sm:$0xf]
      %v220 = vld [vmem:[%s182 + $0x5c] sm:$0xf]
      %v221 = vld [vmem:[%s182 + $0x60] sm:$0xf]
      %v222 = vld [vmem:[%s182 + $0x64] sm:$0xf]
      %v223 = vld [vmem:[%s182 + $0x68] sm:$0xf]
      %v224 = vld [vmem:[%s182 + $0x6c] sm:$0xf]
      %v225 = vld [vmem:[%s182 + $0x70] sm:$0xf]
      %v226 = vld [vmem:[%s182 + $0x74] sm:$0xf]
      %v227 = vld [vmem:[%s182 + $0x78] sm:$0xf]
      %v228 = vld [vmem:[%s182 + $0x7c] sm:$0xf]
      %v229 = vld [vmem:[%s2] sm:$0xf]
      %v230 = vld [vmem:[%s2 + $0x4] sm:$0xf]
      %v231 = vld [vmem:[%s2 + $0x8] sm:$0xf]
      %v232 = vld [vmem:[%s2 + $0xc] sm:$0xf]
      %v233 = vld [vmem:[%s2 + $0x10] sm:$0xf]
      %v234 = vld [vmem:[%s2 + $0x14] sm:$0xf]
      %v235 = vld [vmem:[%s2 + $0x18] sm:$0xf]
      %v236 = vld [vmem:[%s2 + $0x1c] sm:$0xf]
      %v237 = vld [vmem:[%s2 + $0x20] sm:$0xf]
      %v238 = vld [vmem:[%s2 + $0x24] sm:$0xf]
      %v239 = vld [vmem:[%s2 + $0x28] sm:$0xf]
      %v240 = vld [vmem:[%s2 + $0x2c] sm:$0xf]
      %v241 = vld [vmem:[%s2 + $0x30] sm:$0xf]
      %v242 = vld [vmem:[%s2 + $0x34] sm:$0xf]
      %v243 = vld [vmem:[%s2 + $0x38] sm:$0xf]
      %v244 = vld [vmem:[%s2 + $0x3c] sm:$0xf]
      %v277 = vunpack.c.l.b16 %v197
      %v278 = vunpack.c.l.b16 %v198
      %v279 = vunpack.c.l.b16 %v199
      %v280 = vunpack.c.l.b16 %v200
      %v281 = vunpack.c.l.b16 %v201
      %v282 = vunpack.c.l.b16 %v202
      %v283 = vunpack.c.l.b16 %v203
      %v284 = vunpack.c.l.b16 %v204
      %v285 = vunpack.c.l.b16 %v205
      %v286 = vunpack.c.l.b16 %v206
      %v287 = vunpack.c.l.b16 %v207
      %v288 = vunpack.c.l.b16 %v208
      %v289 = vunpack.c.l.b16 %v209
      %v290 = vunpack.c.l.b16 %v210
      %v291 = vunpack.c.l.b16 %v211
      %v292 = vunpack.c.l.b16 %v212
      %v293 = vunpack.c.l.b16 %v213
      %v294 = vunpack.c.l.b16 %v214
      %v295 = vunpack.c.l.b16 %v215
      %v296 = vunpack.c.l.b16 %v216
      %v297 = vunpack.c.l.b16 %v217
      %v298 = vunpack.c.l.b16 %v218
      %v299 = vunpack.c.l.b16 %v219
      %v300 = vunpack.c.l.b16 %v220
      %v301 = vunpack.c.l.b16 %v221
      %v302 = vunpack.c.l.b16 %v222
      %v303 = vunpack.c.l.b16 %v223
      %v304 = vunpack.c.l.b16 %v224
      %v305 = vunpack.c.l.b16 %v225
      %v306 = vunpack.c.l.b16 %v226
      %v307 = vunpack.c.l.b16 %v227
      %v308 = vunpack.c.l.b16 %v228
      %v309 = vpack.c.b16 %v278, %v277
      %v310 = vpack.c.b16 %v280, %v279
      %v311 = vpack.c.b16 %v282, %v281
      %v312 = vpack.c.b16 %v284, %v283
      %v313 = vpack.c.b16 %v286, %v285
      %v314 = vpack.c.b16 %v288, %v287
      %v315 = vpack.c.b16 %v290, %v289
      %v316 = vpack.c.b16 %v292, %v291
      %v317 = vpack.c.b16 %v294, %v293
      %v318 = vpack.c.b16 %v296, %v295
      %v319 = vpack.c.b16 %v298, %v297
      %v320 = vpack.c.b16 %v300, %v299
      %v321 = vpack.c.b16 %v302, %v301
      %v322 = vpack.c.b16 %v304, %v303
      %v323 = vpack.c.b16 %v306, %v305
      %v324 = vpack.c.b16 %v308, %v307
      %v357 = vunpack.c.l.b16 %v229
      %v358 = vunpack.c.l.b16 %v230
      %v359 = vunpack.c.l.b16 %v231
      %v360 = vunpack.c.l.b16 %v232
      %v361 = vunpack.c.l.b16 %v233
      %v362 = vunpack.c.l.b16 %v234
      %v363 = vunpack.c.l.b16 %v235
      %v364 = vunpack.c.l.b16 %v236
      %v365 = vunpack.c.l.b16 %v237
      %v366 = vunpack.c.l.b16 %v238
      %v367 = vunpack.c.l.b16 %v239
      %v368 = vunpack.c.l.b16 %v240
      %v369 = vunpack.c.l.b16 %v241
      %v370 = vunpack.c.l.b16 %v242
      %v371 = vunpack.c.l.b16 %v243
      %v372 = vunpack.c.l.b16 %v244
      %v373 = vpack.c.b16 %v358, %v357
      %v374 = vpack.c.b16 %v360, %v359
      %v375 = vpack.c.b16 %v362, %v361
      %v376 = vpack.c.b16 %v364, %v363
      %v377 = vpack.c.b16 %v366, %v365
      %v378 = vpack.c.b16 %v368, %v367
      %v379 = vpack.c.b16 %v370, %v369
      %v380 = vpack.c.b16 %v372, %v371
      %389 = vmatprep.subr.bf16.mxu0 0
      %390 = vmatpush1.bf16.msra.mxu0 %v380
      %391 = vmatprep.subr.bf16.mxu0 0
      %392 = vmatpush1.bf16.msra.mxu0 %v379
      %393 = vmatprep.subr.bf16.mxu0 0
      %394 = vmatpush1.bf16.msra.mxu0 %v378
      %395 = vmatprep.subr.bf16.mxu0 0
      %396 = vmatpush1.bf16.msra.mxu0 %v377
      %397 = vmatprep.subr.bf16.mxu0 0
      %398 = vmatpush1.bf16.msra.mxu0 %v376
      %399 = vmatprep.subr.bf16.mxu0 0
      %400 = vmatpush1.bf16.msra.mxu0 %v375
      %401 = vmatprep.subr.bf16.mxu0 0
      %402 = vmatpush1.bf16.msra.mxu0 %v374
      %403 = vmatprep.subr.bf16.mxu0 0
      %404 = vmatpush1.bf16.msra.mxu0 %v373
      %405 = vmatprep.subr.bf16.mxu0 0
      %406 = vmatpush2.bf16.msra.mxu0 0
      %407 = vmatprep.subr.bf16.mxu0 0
      %408 = vmatpush2.bf16.msra.mxu0 0
      %409 = vmatprep.subr.bf16.mxu0 0
      %410 = vmatpush2.bf16.msra.mxu0 0
      %411 = vmatprep.subr.bf16.mxu0 0
      %412 = vmatpush2.bf16.msra.mxu0 0
      %413 = vmatprep.subr.bf16.mxu0 0
      %414 = vmatpush2.bf16.msra.mxu0 0
      %415 = vmatprep.subr.bf16.mxu0 0
      %416 = vmatpush2.bf16.msra.mxu0 0
      %417 = vmatprep.subr.bf16.mxu0 0
      %418 = vmatpush2.bf16.msra.mxu0 0
      %419 = vmatprep.subr.bf16.mxu0 0
      %420 = vmatpush2.bf16.msra.mxu0 0
      %421 = vmatprep.mubr.bf16.mxu0 0
      %422 = vmatmul.mubr.bf16.gmra.mxu0 %v309
      %v423 = vpop.f32.mrf.mxu0
      %v424 = vadd.f32 0.0, %v423
      %v425 = vpop.f32.mrf.mxu0
      %v426 = vpop.f32.mrf.mxu0
      %v427 = vadd.f32 0.0, %v426
      %v428 = vpop.f32.mrf.mxu0
      %429 = vmatprep.mubr.bf16.mxu0 0
      %430 = vmatmul.mubr.bf16.gmra.mxu0 %v310
      %v431 = vpop.f32.mrf.mxu0
      %v432 = vadd.f32 0.0, %v431
      %v433 = vpop.f32.mrf.mxu0
      %v434 = vpop.f32.mrf.mxu0
      %v435 = vadd.f32 0.0, %v434
      %v436 = vpop.f32.mrf.mxu0
      %437 = vmatprep.mubr.bf16.mxu0 0
      %438 = vmatmul.mubr.bf16.gmra.mxu0 %v311
      %v439 = vpop.f32.mrf.mxu0
      %v440 = vadd.f32 0.0, %v439
      %v441 = vpop.f32.mrf.mxu0
      %v442 = vpop.f32.mrf.mxu0
      %v443 = vadd.f32 0.0, %v442
      %v444 = vpop.f32.mrf.mxu0
      %445 = vmatprep.mubr.bf16.mxu0 0
      %446 = vmatmul.mubr.bf16.gmra.mxu0 %v312
      %v447 = vpop.f32.mrf.mxu0
      %v448 = vadd.f32 0.0, %v447
      %v449 = vpop.f32.mrf.mxu0
      %v450 = vpop.f32.mrf.mxu0
      %v451 = vadd.f32 0.0, %v450
      %v452 = vpop.f32.mrf.mxu0
      %453 = vmatprep.mubr.bf16.mxu0 0
      %454 = vmatmul.mubr.bf16.gmra.mxu0 %v313
      %v455 = vpop.f32.mrf.mxu0
      %v456 = vadd.f32 0.0, %v455
      %v457 = vpop.f32.mrf.mxu0
      %v458 = vpop.f32.mrf.mxu0
      %v459 = vadd.f32 0.0, %v458
      %v460 = vpop.f32.mrf.mxu0
      %461 = vmatprep.mubr.bf16.mxu0 0
      %462 = vmatmul.mubr.bf16.gmra.mxu0 %v314
      %v463 = vpop.f32.mrf.mxu0
      %v464 = vadd.f32 0.0, %v463
      %v465 = vpop.f32.mrf.mxu0
      %v466 = vpop.f32.mrf.mxu0
      %v467 = vadd.f32 0.0, %v466
      %v468 = vpop.f32.mrf.mxu0
      %469 = vmatprep.mubr.bf16.mxu0 0
      %470 = vmatmul.mubr.bf16.gmra.mxu0 %v315
      %v471 = vpop.f32.mrf.mxu0
      %v472 = vadd.f32 0.0, %v471
      %v473 = vpop.f32.mrf.mxu0
      %v474 = vpop.f32.mrf.mxu0
      %v475 = vadd.f32 0.0, %v474
      %v476 = vpop.f32.mrf.mxu0
      %477 = vmatprep.mubr.bf16.mxu0 0
      %478 = vmatmul.mubr.bf16.gmra.mxu0 %v316
      %v479 = vpop.f32.mrf.mxu0
      %v480 = vadd.f32 0.0, %v479
      %v481 = vpop.f32.mrf.mxu0
      %v482 = vpop.f32.mrf.mxu0
      %v483 = vadd.f32 0.0, %v482
      %v484 = vpop.f32.mrf.mxu0
      %485 = vmatprep.mubr.bf16.mxu0 0
      %486 = vmatmul.mubr.bf16.gmra.mxu0 %v317
      %v487 = vpop.f32.mrf.mxu0
      %v488 = vadd.f32 0.0, %v487
      %v489 = vpop.f32.mrf.mxu0
      %v490 = vpop.f32.mrf.mxu0
      %v491 = vadd.f32 0.0, %v490
      %v492 = vpop.f32.mrf.mxu0
      %493 = vmatprep.mubr.bf16.mxu0 0
      %494 = vmatmul.mubr.bf16.gmra.mxu0 %v318
      %v495 = vpop.f32.mrf.mxu0
      %v496 = vadd.f32 0.0, %v495
      %v497 = vpop.f32.mrf.mxu0
      %v498 = vpop.f32.mrf.mxu0
      %v499 = vadd.f32 0.0, %v498
      %v500 = vpop.f32.mrf.mxu0
      %501 = vmatprep.mubr.bf16.mxu0 0
      %502 = vmatmul.mubr.bf16.gmra.mxu0 %v319
      %v503 = vpop.f32.mrf.mxu0
      %v504 = vadd.f32 0.0, %v503
      %v505 = vpop.f32.mrf.mxu0
      %v506 = vpop.f32.mrf.mxu0
      %v507 = vadd.f32 0.0, %v506
      %v508 = vpop.f32.mrf.mxu0
      %509 = vmatprep.mubr.bf16.mxu0 0
      %510 = vmatmul.mubr.bf16.gmra.mxu0 %v320
      %v511 = vpop.f32.mrf.mxu0
      %v512 = vadd.f32 0.0, %v511
      %v513 = vpop.f32.mrf.mxu0
      %v514 = vpop.f32.mrf.mxu0
      %v515 = vadd.f32 0.0, %v514
      %v516 = vpop.f32.mrf.mxu0
      %517 = vmatprep.mubr.bf16.mxu0 0
      %518 = vmatmul.mubr.bf16.gmra.mxu0 %v321
      %v519 = vpop.f32.mrf.mxu0
      %v520 = vadd.f32 0.0, %v519
      %v521 = vpop.f32.mrf.mxu0
      %v522 = vpop.f32.mrf.mxu0
      %v523 = vadd.f32 0.0, %v522
      %v524 = vpop.f32.mrf.mxu0
      %525 = vmatprep.mubr.bf16.mxu0 0
      %526 = vmatmul.mubr.bf16.gmra.mxu0 %v322
      %v527 = vpop.f32.mrf.mxu0
      %v528 = vadd.f32 0.0, %v527
      %v529 = vpop.f32.mrf.mxu0
      %v530 = vpop.f32.mrf.mxu0
      %v531 = vadd.f32 0.0, %v530
      %v532 = vpop.f32.mrf.mxu0
      %533 = vmatprep.mubr.bf16.mxu0 0
      %534 = vmatmul.mubr.bf16.gmra.mxu0 %v323
      %v535 = vpop.f32.mrf.mxu0
      %v536 = vadd.f32 0.0, %v535
      %v537 = vpop.f32.mrf.mxu0
      %v538 = vpop.f32.mrf.mxu0
      %v539 = vadd.f32 0.0, %v538
      %v540 = vpop.f32.mrf.mxu0
      %541 = vmatprep.mubr.bf16.mxu0 0
      %542 = vmatmul.mubr.bf16.gmra.mxu0 %v324
      %v543 = vpop.f32.mrf.mxu0
      %v544 = vadd.f32 0.0, %v543
      %v545 = vpop.f32.mrf.mxu0
      %v546 = vpop.f32.mrf.mxu0
      %v547 = vadd.f32 0.0, %v546
      %v548 = vpop.f32.mrf.mxu0
      %549 = vdwg.mxu0
      %v550 = vld [vmem:[%s188] sm:$0xff]
      %v551 = vld [vmem:[%s188 + $0x8] sm:$0xff]
      %v552 = vld [vmem:[%s188 + $0x10] sm:$0xff]
      %v553 = vld [vmem:[%s188 + $0x18] sm:$0xff]
      %v554 = vld [vmem:[%s188 + $0x20] sm:$0xff]
      %v555 = vld [vmem:[%s188 + $0x28] sm:$0xff]
      %v556 = vld [vmem:[%s188 + $0x30] sm:$0xff]
      %v557 = vld [vmem:[%s188 + $0x38] sm:$0xff]
      %v558 = vld [vmem:[%s188 + $0x40] sm:$0xff]
      %v559 = vld [vmem:[%s188 + $0x48] sm:$0xff]
      %v560 = vld [vmem:[%s188 + $0x50] sm:$0xff]
      %v561 = vld [vmem:[%s188 + $0x58] sm:$0xff]
      %v562 = vld [vmem:[%s188 + $0x60] sm:$0xff]
      %v563 = vld [vmem:[%s188 + $0x68] sm:$0xff]
      %v564 = vld [vmem:[%s188 + $0x70] sm:$0xff]
      %v565 = vld [vmem:[%s188 + $0x78] sm:$0xff]
      %v566 = vld [vmem:[%s188 + $0x80] sm:$0xff]
      %v567 = vld [vmem:[%s188 + $0x88] sm:$0xff]
      %v568 = vld [vmem:[%s188 + $0x90] sm:$0xff]
      %v569 = vld [vmem:[%s188 + $0x98] sm:$0xff]
      %v570 = vld [vmem:[%s188 + $0xa0] sm:$0xff]
      %v571 = vld [vmem:[%s188 + $0xa8] sm:$0xff]
      %v572 = vld [vmem:[%s188 + $0xb0] sm:$0xff]
      %v573 = vld [vmem:[%s188 + $0xb8] sm:$0xff]
      %v574 = vld [vmem:[%s188 + $0xc0] sm:$0xff]
      %v575 = vld [vmem:[%s188 + $0xc8] sm:$0xff]
      %v576 = vld [vmem:[%s188 + $0xd0] sm:$0xff]
      %v577 = vld [vmem:[%s188 + $0xd8] sm:$0xff]
      %v578 = vld [vmem:[%s188 + $0xe0] sm:$0xff]
      %v579 = vld [vmem:[%s188 + $0xe8] sm:$0xff]
      %v580 = vld [vmem:[%s188 + $0xf0] sm:$0xff]
      %v581 = vld [vmem:[%s188 + $0xf8] sm:$0xff]
      %583 = vset.pattern.permute.xlu0 0
      %584 = vperm.xlu0 %583, %v550
      %v585 = vpop.permute.xlu0 %584
      %588 = vset.pattern.permute.xlu0 0
      %589 = vperm.xlu0 %588, %v551
      %v590 = vpop.permute.xlu0 %589
      %593 = vset.pattern.permute.xlu0 0
      %594 = vperm.xlu0 %593, %v552
      %v595 = vpop.permute.xlu0 %594
      %598 = vset.pattern.permute.xlu0 0
      %599 = vperm.xlu0 %598, %v553
      %v600 = vpop.permute.xlu0 %599
      %603 = vset.pattern.permute.xlu0 0
      %604 = vperm.xlu0 %603, %v554
      %v605 = vpop.permute.xlu0 %604
      %608 = vset.pattern.permute.xlu0 0
      %609 = vperm.xlu0 %608, %v555
      %v610 = vpop.permute.xlu0 %609
      %613 = vset.pattern.permute.xlu0 0
      %614 = vperm.xlu0 %613, %v556
      %v615 = vpop.permute.xlu0 %614
      %618 = vset.pattern.permute.xlu0 0
      %619 = vperm.xlu0 %618, %v557
      %v620 = vpop.permute.xlu0 %619
      %623 = vset.pattern.permute.xlu0 0
      %624 = vperm.xlu0 %623, %v558
      %v625 = vpop.permute.xlu0 %624
      %628 = vset.pattern.permute.xlu0 0
      %629 = vperm.xlu0 %628, %v559
      %v630 = vpop.permute.xlu0 %629
      %633 = vset.pattern.permute.xlu0 0
      %634 = vperm.xlu0 %633, %v560
      %v635 = vpop.permute.xlu0 %634
      %638 = vset.pattern.permute.xlu0 0
      %639 = vperm.xlu0 %638, %v561
      %v640 = vpop.permute.xlu0 %639
      %643 = vset.pattern.permute.xlu0 0
      %644 = vperm.xlu0 %643, %v562
      %v645 = vpop.permute.xlu0 %644
      %648 = vset.pattern.permute.xlu0 0
      %649 = vperm.xlu0 %648, %v563
      %v650 = vpop.permute.xlu0 %649
      %653 = vset.pattern.permute.xlu0 0
      %654 = vperm.xlu0 %653, %v564
      %v655 = vpop.permute.xlu0 %654
      %658 = vset.pattern.permute.xlu0 0
      %659 = vperm.xlu0 %658, %v565
      %v660 = vpop.permute.xlu0 %659
      %663 = vset.pattern.permute.xlu0 0
      %664 = vperm.xlu0 %663, %v566
      %v665 = vpop.permute.xlu0 %664
      %668 = vset.pattern.permute.xlu0 0
      %669 = vperm.xlu0 %668, %v567
      %v670 = vpop.permute.xlu0 %669
      %673 = vset.pattern.permute.xlu0 0
      %674 = vperm.xlu0 %673, %v568
      %v675 = vpop.permute.xlu0 %674
      %678 = vset.pattern.permute.xlu0 0
      %679 = vperm.xlu0 %678, %v569
      %v680 = vpop.permute.xlu0 %679
      %683 = vset.pattern.permute.xlu0 0
      %684 = vperm.xlu0 %683, %v570
      %v685 = vpop.permute.xlu0 %684
      %688 = vset.pattern.permute.xlu0 0
      %689 = vperm.xlu0 %688, %v571
      %v690 = vpop.permute.xlu0 %689
      %693 = vset.pattern.permute.xlu0 0
      %694 = vperm.xlu0 %693, %v572
      %v695 = vpop.permute.xlu0 %694
      %698 = vset.pattern.permute.xlu0 0
      %699 = vperm.xlu0 %698, %v573
      %v700 = vpop.permute.xlu0 %699
      %703 = vset.pattern.permute.xlu0 0
      %704 = vperm.xlu0 %703, %v574
      %v705 = vpop.permute.xlu0 %704
      %708 = vset.pattern.permute.xlu0 0
      %709 = vperm.xlu0 %708, %v575
      %v710 = vpop.permute.xlu0 %709
      %713 = vset.pattern.permute.xlu0 0
      %714 = vperm.xlu0 %713, %v576
      %v715 = vpop.permute.xlu0 %714
      %718 = vset.pattern.permute.xlu0 0
      %719 = vperm.xlu0 %718, %v577
      %v720 = vpop.permute.xlu0 %719
      %723 = vset.pattern.permute.xlu0 0
      %724 = vperm.xlu0 %723, %v578
      %v725 = vpop.permute.xlu0 %724
      %728 = vset.pattern.permute.xlu0 0
      %729 = vperm.xlu0 %728, %v579
      %v730 = vpop.permute.xlu0 %729
      %733 = vset.pattern.permute.xlu0 0
      %734 = vperm.xlu0 %733, %v580
      %v735 = vpop.permute.xlu0 %734
      %738 = vset.pattern.permute.xlu0 0
      %739 = vperm.xlu0 %738, %v581
      %v740 = vpop.permute.xlu0 %739
      %v742 = vmul.f32 %v424, %v585
      %v743 = vmul.f32 %v427, %v590
      %v744 = vmul.f32 %v432, %v595
      %v745 = vmul.f32 %v435, %v600
      %v746 = vmul.f32 %v440, %v605
      %v747 = vmul.f32 %v443, %v610
      %v748 = vmul.f32 %v448, %v615
      %v749 = vmul.f32 %v451, %v620
      %v750 = vmul.f32 %v456, %v625
      %v751 = vmul.f32 %v459, %v630
      %v752 = vmul.f32 %v464, %v635
      %v753 = vmul.f32 %v467, %v640
      %v754 = vmul.f32 %v472, %v645
      %v755 = vmul.f32 %v475, %v650
      %v756 = vmul.f32 %v480, %v655
      %v757 = vmul.f32 %v483, %v660
      %v758 = vmul.f32 %v488, %v665
      %v759 = vmul.f32 %v491, %v670
      %v760 = vmul.f32 %v496, %v675
      %v761 = vmul.f32 %v499, %v680
      %v762 = vmul.f32 %v504, %v685
      %v763 = vmul.f32 %v507, %v690
      %v764 = vmul.f32 %v512, %v695
      %v765 = vmul.f32 %v515, %v700
      %v766 = vmul.f32 %v520, %v705
      %v767 = vmul.f32 %v523, %v710
      %v768 = vmul.f32 %v528, %v715
      %v769 = vmul.f32 %v531, %v720
      %v770 = vmul.f32 %v536, %v725
      %v771 = vmul.f32 %v539, %v730
      %v772 = vmul.f32 %v544, %v735
      %v773 = vmul.f32 %v547, %v740
      %v774 = vpack.c.bf16 %v743, %v742
      %v775 = vpack.c.bf16 %v745, %v744
      %v776 = vpack.c.bf16 %v747, %v746
      %v777 = vpack.c.bf16 %v749, %v748
      %v778 = vpack.c.bf16 %v751, %v750
      %v779 = vpack.c.bf16 %v753, %v752
      %v780 = vpack.c.bf16 %v755, %v754
      %v781 = vpack.c.bf16 %v757, %v756
      %v782 = vpack.c.bf16 %v759, %v758
      %v783 = vpack.c.bf16 %v761, %v760
      %v784 = vpack.c.bf16 %v763, %v762
      %v785 = vpack.c.bf16 %v765, %v764
      %v786 = vpack.c.bf16 %v767, %v766
      %v787 = vpack.c.bf16 %v769, %v768
      %v788 = vpack.c.bf16 %v771, %v770
      %v789 = vpack.c.bf16 %v773, %v772
      %v806 = vunpack.c.l.b16 %v774
      %v807 = vunpack.c.h.b16 %v774
      %v808 = vunpack.c.l.b16 %v775
      %v809 = vunpack.c.h.b16 %v775
      %v810 = vunpack.c.l.b16 %v776
      %v811 = vunpack.c.h.b16 %v776
      %v812 = vunpack.c.l.b16 %v777
      %v813 = vunpack.c.h.b16 %v777
      %v814 = vunpack.c.l.b16 %v778
      %v815 = vunpack.c.h.b16 %v778
      %v816 = vunpack.c.l.b16 %v779
      %v817 = vunpack.c.h.b16 %v779
      %v818 = vunpack.c.l.b16 %v780
      %v819 = vunpack.c.h.b16 %v780
      %v820 = vunpack.c.l.b16 %v781
      %v821 = vunpack.c.h.b16 %v781
      %v822 = vunpack.c.l.b16 %v782
      %v823 = vunpack.c.h.b16 %v782
      %v824 = vunpack.c.l.b16 %v783
      %v825 = vunpack.c.h.b16 %v783
      %v826 = vunpack.c.l.b16 %v784
      %v827 = vunpack.c.h.b16 %v784
      %v828 = vunpack.c.l.b16 %v785
      %v829 = vunpack.c.h.b16 %v785
      %v830 = vunpack.c.l.b16 %v786
      %v831 = vunpack.c.h.b16 %v786
      %v832 = vunpack.c.l.b16 %v787
      %v833 = vunpack.c.h.b16 %v787
      %v834 = vunpack.c.l.b16 %v788
      %v835 = vunpack.c.h.b16 %v788
      %v836 = vunpack.c.l.b16 %v789
      %v837 = vunpack.c.h.b16 %v789
      %v838 = vpack.c.b16 %v806, %v806
      %v839 = vpack.c.b16 %v807, %v807
      %v840 = vpack.c.b16 %v808, %v808
      %v841 = vpack.c.b16 %v809, %v809
      %v842 = vpack.c.b16 %v810, %v810
      %v843 = vpack.c.b16 %v811, %v811
      %v844 = vpack.c.b16 %v812, %v812
      %v845 = vpack.c.b16 %v813, %v813
      %v846 = vpack.c.b16 %v814, %v814
      %v847 = vpack.c.b16 %v815, %v815
      %v848 = vpack.c.b16 %v816, %v816
      %v849 = vpack.c.b16 %v817, %v817
      %v850 = vpack.c.b16 %v818, %v818
      %v851 = vpack.c.b16 %v819, %v819
      %v852 = vpack.c.b16 %v820, %v820
      %v853 = vpack.c.b16 %v821, %v821
      %v854 = vpack.c.b16 %v822, %v822
      %v855 = vpack.c.b16 %v823, %v823
      %v856 = vpack.c.b16 %v824, %v824
      %v857 = vpack.c.b16 %v825, %v825
      %v858 = vpack.c.b16 %v826, %v826
      %v859 = vpack.c.b16 %v827, %v827
      %v860 = vpack.c.b16 %v828, %v828
      %v861 = vpack.c.b16 %v829, %v829
      %v862 = vpack.c.b16 %v830, %v830
      %v863 = vpack.c.b16 %v831, %v831
      %v864 = vpack.c.b16 %v832, %v832
      %v865 = vpack.c.b16 %v833, %v833
      %v866 = vpack.c.b16 %v834, %v834
      %v867 = vpack.c.b16 %v835, %v835
      %v868 = vpack.c.b16 %v836, %v836
      %v869 = vpack.c.b16 %v837, %v837
      %902 = vst [vmem:[%s194] sm:$0xf] %v838
      %903 = vst [vmem:[%s194 + $0x4] sm:$0xf] %v839
      %904 = vst [vmem:[%s194 + $0x8] sm:$0xf] %v840
      %905 = vst [vmem:[%s194 + $0xc] sm:$0xf] %v841
      %906 = vst [vmem:[%s194 + $0x10] sm:$0xf] %v842
      %907 = vst [vmem:[%s194 + $0x14] sm:$0xf] %v843
      %908 = vst [vmem:[%s194 + $0x18] sm:$0xf] %v844
      %909 = vst [vmem:[%s194 + $0x1c] sm:$0xf] %v845
      %910 = vst [vmem:[%s194 + $0x20] sm:$0xf] %v846
      %911 = vst [vmem:[%s194 + $0x24] sm:$0xf] %v847
      %912 = vst [vmem:[%s194 + $0x28] sm:$0xf] %v848
      %913 = vst [vmem:[%s194 + $0x2c] sm:$0xf] %v849
      %914 = vst [vmem:[%s194 + $0x30] sm:$0xf] %v850
      %915 = vst [vmem:[%s194 + $0x34] sm:$0xf] %v851
      %916 = vst [vmem:[%s194 + $0x38] sm:$0xf] %v852
      %917 = vst [vmem:[%s194 + $0x3c] sm:$0xf] %v853
      %918 = vst [vmem:[%s194 + $0x40] sm:$0xf] %v854
      %919 = vst [vmem:[%s194 + $0x44] sm:$0xf] %v855
      %920 = vst [vmem:[%s194 + $0x48] sm:$0xf] %v856
      %921 = vst [vmem:[%s194 + $0x4c] sm:$0xf] %v857
      %922 = vst [vmem:[%s194 + $0x50] sm:$0xf] %v858
      %923 = vst [vmem:[%s194 + $0x54] sm:$0xf] %v859
      %924 = vst [vmem:[%s194 + $0x58] sm:$0xf] %v860
      %925 = vst [vmem:[%s194 + $0x5c] sm:$0xf] %v861
      %926 = vst [vmem:[%s194 + $0x60] sm:$0xf] %v862
      %927 = vst [vmem:[%s194 + $0x64] sm:$0xf] %v863
      %928 = vst [vmem:[%s194 + $0x68] sm:$0xf] %v864
      %929 = vst [vmem:[%s194 + $0x6c] sm:$0xf] %v865
      %930 = vst [vmem:[%s194 + $0x70] sm:$0xf] %v866
      %931 = vst [vmem:[%s194 + $0x74] sm:$0xf] %v867
      %932 = vst [vmem:[%s194 + $0x78] sm:$0xf] %v868
      %933 = vst [vmem:[%s194 + $0x7c] sm:$0xf] %v869
      %s934 = smul.u32 32, %s14
      %p935 = scmp.lt.s32.totalorder %s934, 63
      %s936 = scalar_select %p935, %s934, 63
      %s937 = smul.addr %s936, 4
      %s938 = scalar_lea.vmem %s3, %s937
      // Predicated region
      $region33: #{gcn_forward.3} parent=31 // pred_check
        %p939 = pneg %p105
      $region34: #{gcn_forward.3} parent=31 // pred_check_branch
        %941 = sbr.rel (%p939) target = $region36
      $region35: #{gcn_forward.3} parent=31 // pred_region
        %s942 = smul.u32 32, %s14
      $region36: #{gcn_forward.3} parent=31 // pred_fallthru
        _
    $region32: #{gcn_forward.3} parent=5 // pred_fallthru
      _
    %p943 = scmp.le.s32.totalorder 2, %s9
    // Predicated region
    $region37: #{gcn_forward.3} parent=5 // pred_check
      %p944 = pneg %p943
    $region38: #{gcn_forward.3} parent=5 // pred_check_branch
      %946 = sbr.rel (%p944) target = $region40
    $region39: #{gcn_forward.3} parent=5 // pred_region
      %s947 = ssub.s32 %s9, 2
      // Predicated region
      $region41: #{gcn_forward.3} parent=39 // pred_check
        %p948 = pneg %p111
      $region42: #{gcn_forward.3} parent=39 // pred_check_branch
        %950 = sbr.rel (%p948) target = $region44
      $region43: #{gcn_forward.3} parent=39 // pred_region
        %s951 = smul.u32 32, %s15
        %p952 = scmp.lt.s32.totalorder %s951, 63
        %s953 = scalar_select %p952, %s951, 63
        %s954 = smul.addr %s953, 4
        %s955 = scalar_lea.vmem %s3, %s954
      $region44: #{gcn_forward.3} parent=39 // pred_fallthru
        _
    $region40: #{gcn_forward.3} parent=5 // pred_fallthru
      _
  $region6: #{gcn_forward.3} parent=0 // loop_footer
    %s13 = sadd.s32 1, %s9
  $region7: #{gcn_forward.3} parent=0 // loop_footer_branch
    %8 = sbr.rel target = $region3
  $region8: #{gcn_forward.3} parent=0 // loop_exit
    _

// kernel: gcn_forward.5
$region0: #{gcn_forward.5}
  #allocation0 [shape = 'u32[]', space=smem, size = 0x4, offset = 0x4, fixed_abs, tag = 'smem constant byte address 0x4 - core index']
  #allocation1 [shape = 'u32[144,128]{1,0:T(1,128)}', space=vmem, size = 0x12000, scoped, tag = 'internal scratch']
  %s0 = inlined_call_operand.vmem [shape: bf16[512,512], index: 0, kind: input, shape index: {}]
  %s1 = inlined_call_operand.vmem [shape: bf16[512,128], index: 1, kind: input, shape index: {}]
  %s2 = inlined_call_operand.vmem [shape: f32[512,1], index: 2, kind: input, shape index: {}]
  %s3 = inlined_call_operand.vmem [shape: f32[1,128], index: 3, kind: input, shape index: {}]
  %s4 = inlined_call_operand.vmem [shape: f32[512,128], index: 4, kind: output, shape index: {}]
  %s5 = sld [smem:[#allocation0]]
  $region49: #{gcn_forward.5} parent=0
    _
  %s7 = ssub.s32 1, %s5
  %s8 = scalar_select 0, %s7, %s5
  loop: start=0, step=1, limit=4
  $region2: #{gcn_forward.5} parent=0 // loop_pre_header
    _
  $region3: #{gcn_forward.5} parent=0 // loop_header
    %s10 = sphi 0, %s14
    %p11 = scmp.ge.s32.totalorder %s10, 4
    %s20 = sphi 0, %s22
    %s23 = sphi 0, %s20
    %s24 = sphi 0, %s23
    %s40 = sphi 0, %s24
    %s44 = sphi 0, %s44
    %s46 = sphi 0, %s44
    %s47 = sphi 0, %s46
    %s61 = sphi 0, %s47
    %s67 = sphi 0, %s69
    %s70 = sphi 0, %s67
    %s71 = sphi 0, %s70
    %s87 = sphi 0, %s71
    %s91 = sphi 0, %s91
    %s93 = sphi 0, %s91
    %s94 = sphi 0, %s93
    %s108 = sphi 0, %s94
    %s114 = sphi 0, %s116
    %s117 = sphi 0, %s114
    %s118 = sphi 0, %s117
    %s134 = sphi 0, %s118
  $region4: #{gcn_forward.5} parent=0 // loop_header_branch
    %13 = sbr.rel (%p11) target = $region8
  $region5: #{gcn_forward.5} parent=0 // loop_body
    %s15 = ssub.s32 %s10, 1
    %s16 = ssub.s32 %s10, 2
    %s17 = sadd.s32 %s10, 1
    %s18 = ssub.s32 %s10, %s17
    %p19 = scmp.eq.s32.totalorder %s18, 0
    %s21 = sadd.s32 %s20, 1
    %s22 = scalar_select %p19, %s20, %s21
    %p25 = pneg %p19
    %p26 = scmp.eq.s32.totalorder %s10, 1
    %p27 = por %p25, %p26
    %p28 = scmp.ne.s32.totalorder %s20, %s23
    %p29 = scmp.eq.s32.totalorder %s10, 0
    %p30 = por %p28, %p29
    %p31 = scmp.ne.s32.totalorder %s20, %s23
    %p32 = scmp.eq.s32.totalorder %s15, 1
    %p33 = por %p31, %p32
    %p34 = scmp.ne.s32.totalorder %s23, %s24
    %p35 = scmp.eq.s32.totalorder %s15, 0
    %p36 = por %p34, %p35
    %p37 = scmp.ne.s32.totalorder %s23, %s24
    %p38 = scmp.eq.s32.totalorder %s16, 1
    %p39 = por %p37, %p38
    %p41 = scmp.ne.s32.totalorder %s24, %s40
    %p42 = scmp.eq.s32.totalorder %s16, 0
    %p43 = por %p41, %p42
    %s45 = sadd.s32 %s44, 1
    %p48 = scmp.eq.s32.totalorder %s10, 1
    %p49 = scmp.ne.s32.totalorder %s44, %s46
    %p50 = scmp.eq.s32.totalorder %s10, 0
    %p51 = por %p49, %p50
    %p52 = scmp.ne.s32.totalorder %s44, %s46
    %p53 = scmp.eq.s32.totalorder %s15, 1
    %p54 = por %p52, %p53
    %p55 = scmp.ne.s32.totalorder %s46, %s47
    %p56 = scmp.eq.s32.totalorder %s15, 0
    %p57 = por %p55, %p56
    %p58 = scmp.ne.s32.totalorder %s46, %s47
    %p59 = scmp.eq.s32.totalorder %s16, 1
    %p60 = por %p58, %p59
    %p62 = scmp.ne.s32.totalorder %s47, %s61
    %p63 = scmp.eq.s32.totalorder %s16, 0
    %p64 = por %p62, %p63
    %s65 = ssub.s32 %s10, %s17
    %p66 = scmp.eq.s32.totalorder %s65, 0
    %s68 = sadd.s32 %s67, 1
    %s69 = scalar_select %p66, %s67, %s68
    %p72 = pneg %p66
    %p73 = scmp.eq.s32.totalorder %s10, 1
    %p74 = por %p72, %p73
    %p75 = scmp.ne.s32.totalorder %s67, %s70
    %p76 = scmp.eq.s32.totalorder %s10, 0
    %p77 = por %p75, %p76
    %p78 = scmp.ne.s32.totalorder %s67, %s70
    %p79 = scmp.eq.s32.totalorder %s15, 1
    %p80 = por %p78, %p79
    %p81 = scmp.ne.s32.totalorder %s70, %s71
    %p82 = scmp.eq.s32.totalorder %s15, 0
    %p83 = por %p81, %p82
    %p84 = scmp.ne.s32.totalorder %s70, %s71
    %p85 = scmp.eq.s32.totalorder %s16, 1
    %p86 = por %p84, %p85
    %p88 = scmp.ne.s32.totalorder %s71, %s87
    %p89 = scmp.eq.s32.totalorder %s16, 0
    %p90 = por %p88, %p89
    %s92 = sadd.s32 %s91, 1
    %p95 = scmp.eq.s32.totalorder %s10, 1
    %p96 = scmp.ne.s32.totalorder %s91, %s93
    %p97 = scmp.eq.s32.totalorder %s10, 0
    %p98 = por %p96, %p97
    %p99 = scmp.ne.s32.totalorder %s91, %s93
    %p100 = scmp.eq.s32.totalorder %s15, 1
    %p101 = por %p99, %p100
    %p102 = scmp.ne.s32.totalorder %s93, %s94
    %p103 = scmp.eq.s32.totalorder %s15, 0
    %p104 = por %p102, %p103
    %p105 = scmp.ne.s32.totalorder %s93, %s94
    %p106 = scmp.eq.s32.totalorder %s16, 1
    %p107 = por %p105, %p106
    %p109 = scmp.ne.s32.totalorder %s94, %s108
    %p110 = scmp.eq.s32.totalorder %s16, 0
    %p111 = por %p109, %p110
    %s112 = ssub.s32 %s10, %s17
    %p113 = scmp.eq.s32.totalorder %s112, 0
    %s115 = sadd.s32 %s114, 1
    %s116 = scalar_select %p113, %s114, %s115
    %p119 = pneg %p113
    %p120 = scmp.eq.s32.totalorder %s10, 1
    %p121 = por %p119, %p120
    %p122 = scmp.ne.s32.totalorder %s114, %s117
    %p123 = scmp.eq.s32.totalorder %s10, 0
    %p124 = por %p122, %p123
    %p125 = scmp.ne.s32.totalorder %s114, %s117
    %p126 = scmp.eq.s32.totalorder %s15, 1
    %p127 = por %p125, %p126
    %p128 = scmp.ne.s32.totalorder %s117, %s118
    %p129 = scmp.eq.s32.totalorder %s15, 0
    %p130 = por %p128, %p129
    %p131 = scmp.ne.s32.totalorder %s117, %s118
    %p132 = scmp.eq.s32.totalorder %s16, 1
    %p133 = por %p131, %p132
    %p135 = scmp.ne.s32.totalorder %s118, %s134
    %p136 = scmp.eq.s32.totalorder %s16, 0
    %p137 = por %p135, %p136
    %p138 = scmp.le.s32.totalorder 1, %s10
    %p139 = scmp.lt.s32.totalorder %s10, 3
    %p140 = pnand %p138, %p139
    %p141 = pneg %p140
    // Predicated region
    $region9: #{gcn_forward.5} parent=5 // pred_check
      _
    $region10: #{gcn_forward.5} parent=5 // pred_check_branch
      %143 = sbr.rel (%p140) target = $region12
    $region11: #{gcn_forward.5} parent=5 // pred_region
      %s144 = ssub.s32 %s10, 1
      // Predicated region
      $region13: #{gcn_forward.5} parent=11 // pred_check
        %p145 = pneg %p57
      $region14: #{gcn_forward.5} parent=11 // pred_check_branch
        %147 = sbr.rel (%p145) target = $region16
      $region15: #{gcn_forward.5} parent=11 // pred_region
        _
      $region16: #{gcn_forward.5} parent=11 // pred_fallthru
        _
      // Predicated region
      $region17: #{gcn_forward.5} parent=11 // pred_check
        %p148 = pneg %p104
      $region18: #{gcn_forward.5} parent=11 // pred_check_branch
        %150 = sbr.rel (%p148) target = $region20
      $region19: #{gcn_forward.5} parent=11 // pred_region
        _
      $region20: #{gcn_forward.5} parent=11 // pred_fallthru
        _
    $region12: #{gcn_forward.5} parent=5 // pred_fallthru
      _
    %p151 = scmp.lt.s32.totalorder %s10, 2
    // Predicated region
    $region21: #{gcn_forward.5} parent=5 // pred_check
      %p152 = pneg %p151
    $region22: #{gcn_forward.5} parent=5 // pred_check_branch
      %154 = sbr.rel (%p152) target = $region24
    $region23: #{gcn_forward.5} parent=5 // pred_region
      // Predicated region
      $region25: #{gcn_forward.5} parent=23 // pred_check
        %p155 = pneg %p30
      $region26: #{gcn_forward.5} parent=23 // pred_check_branch
        %157 = sbr.rel (%p155) target = $region28
      $region27: #{gcn_forward.5} parent=23 // pred_region
        %s158 = smul.u32 32, %s10
        %p159 = scmp.lt.s32.totalorder %s158, 63
        %s160 = scalar_select %p159, %s158, 63
        %s161 = smul.addr %s160, 4
        %s162 = smul.addr %s161, 4
        %s163 = scalar_lea.vmem %s0, %s162
        %s164 = smul.u32 32, %s10
      $region28: #{gcn_forward.5} parent=23 // pred_fallthru
        _
      // Predicated region
      $region29: #{gcn_forward.5} parent=23 // pred_check
        %p165 = pneg %p77
      $region30: #{gcn_forward.5} parent=23 // pred_check_branch
        %167 = sbr.rel (%p165) target = $region32
      $region31: #{gcn_forward.5} parent=23 // pred_region
        %s168 = smul.u32 32, %s10
        %p169 = scmp.lt.s32.totalorder %s168, 63
        %s170 = scalar_select %p169, %s168, 63
        %s171 = smul.addr %s170, 8
        %s172 = scalar_lea.vmem %s2, %s171
        %s173 = smul.u32 32, %s10
      $region32: #{gcn_forward.5} parent=23 // pred_fallthru
        _
    $region24: #{gcn_forward.5} parent=5 // pred_fallthru
      _
    %p174 = scmp.le.s32.totalorder 1, %s10
    %p175 = scmp.lt.s32.totalorder %s10, 3
    %p176 = pnand %p174, %p175
    %p177 = pneg %p176
    // Predicated region
    $region33: #{gcn_forward.5} parent=5 // pred_check
      _
    $region34: #{gcn_forward.5} parent=5 // pred_check_branch
      %179 = sbr.rel (%p176) target = $region36
    $region35: #{gcn_forward.5} parent=5 // pred_region
      %s180 = ssub.s32 %s10, 1
      %s181 = smul.u32 32, %s15
      %p182 = scmp.lt.s32.totalorder %s181, 63
      %s183 = scalar_select %p182, %s181, 63
      %s184 = smul.addr %s183, 4
      %s185 = smul.addr %s184, 4
      %s186 = scalar_lea.vmem %s0, %s185
      %p187 = pneg %p36
      %p188 = pneg %p33
      %p189 = pneg %p57
      %p190 = pneg %p54
      %s191 = smul.u32 32, %s15
      %p192 = scmp.lt.s32.totalorder %s191, 63
      %s193 = scalar_select %p192, %s191, 63
      %s194 = smul.addr %s193, 8
      %s195 = scalar_lea.vmem %s2, %s194
      %p196 = pneg %p83
      %p197 = pneg %p80
      %p198 = pneg %p104
      %p199 = pneg %p101
      %p200 = pneg %p130
      %p201 = pneg %p127
      %s202 = smul.u32 32, %s15
      %p203 = scmp.lt.s32.totalorder %s202, 63
      %s204 = scalar_select %p203, %s202, 63
      %s205 = smul.addr %s204, 8
      %s206 = scalar_lea.vmem %s4, %s205
      %s207 = smul.u32 32, %s15
      %p208 = scmp.lt.s32.totalorder %s207, 63
      %s209 = scalar_select %p208, %s207, 63
      %s210 = smul.addr %s209, 4
      %s211 = smul.addr %s210, 4
      %s212 = scalar_lea.vmem %s0, %s211
      %s213 = smul.u32 32, %s15
      %s214 = smul.u32 32, %s15
      %p215 = scmp.lt.s32.totalorder %s214, 63
      %s216 = scalar_select %p215, %s214, 63
      %s217 = smul.addr %s216, 8
      %s218 = scalar_lea.vmem %s2, %s217
      %s219 = smul.u32 32, %s15
      %s220 = smul.u32 32, %s15
      %p221 = scmp.lt.s32.totalorder %s220, 63
      %s222 = scalar_select %p221, %s220, 63
      %s223 = smul.addr %s222, 8
      %s224 = scalar_lea.vmem %s4, %s223
      %s225 = smul.u32 32, %s15
      %v227 = vld [vmem:[%s212] sm:$0xff]
      %v228 = vld [vmem:[%s212 + $0x8] sm:$0xff]
      %v229 = vld [vmem:[%s212 + $0x10] sm:$0xff]
      %v230 = vld [vmem:[%s212 + $0x18] sm:$0xff]
      %v231 = vld [vmem:[%s212 + $0x20] sm:$0xff]
      %v232 = vld [vmem:[%s212 + $0x28] sm:$0xff]
      %v233 = vld [vmem:[%s212 + $0x30] sm:$0xff]
      %v234 = vld [vmem:[%s212 + $0x38] sm:$0xff]
      %v235 = vld [vmem:[%s212 + $0x40] sm:$0xff]
      %v236 = vld [vmem:[%s212 + $0x48] sm:$0xff]
      %v237 = vld [vmem:[%s212 + $0x50] sm:$0xff]
      %v238 = vld [vmem:[%s212 + $0x58] sm:$0xff]
      %v239 = vld [vmem:[%s212 + $0x60] sm:$0xff]
      %v240 = vld [vmem:[%s212 + $0x68] sm:$0xff]
      %v241 = vld [vmem:[%s212 + $0x70] sm:$0xff]
      %v242 = vld [vmem:[%s212 + $0x78] sm:$0xff]
      %v243 = vld [vmem:[%s212 + $0x80] sm:$0xff]
      %v244 = vld [vmem:[%s212 + $0x88] sm:$0xff]
      %v245 = vld [vmem:[%s212 + $0x90] sm:$0xff]
      %v246 = vld [vmem:[%s212 + $0x98] sm:$0xff]
      %v247 = vld [vmem:[%s212 + $0xa0] sm:$0xff]
      %v248 = vld [vmem:[%s212 + $0xa8] sm:$0xff]
      %v249 = vld [vmem:[%s212 + $0xb0] sm:$0xff]
      %v250 = vld [vmem:[%s212 + $0xb8] sm:$0xff]
      %v251 = vld [vmem:[%s212 + $0xc0] sm:$0xff]
      %v252 = vld [vmem:[%s212 + $0xc8] sm:$0xff]
      %v253 = vld [vmem:[%s212 + $0xd0] sm:$0xff]
      %v254 = vld [vmem:[%s212 + $0xd8] sm:$0xff]
      %v255 = vld [vmem:[%s212 + $0xe0] sm:$0xff]
      %v256 = vld [vmem:[%s212 + $0xe8] sm:$0xff]
      %v257 = vld [vmem:[%s212 + $0xf0] sm:$0xff]
      %v258 = vld [vmem:[%s212 + $0xf8] sm:$0xff]
      %v259 = vld [vmem:[%s212 + $0x100] sm:$0xff]
      %v260 = vld [vmem:[%s212 + $0x108] sm:$0xff]
      %v261 = vld [vmem:[%s212 + $0x110] sm:$0xff]
      %v262 = vld [vmem:[%s212 + $0x118] sm:$0xff]
      %v263 = vld [vmem:[%s212 + $0x120] sm:$0xff]
      %v264 = vld [vmem:[%s212 + $0x128] sm:$0xff]
      %v265 = vld [vmem:[%s212 + $0x130] sm:$0xff]
      %v266 = vld [vmem:[%s212 + $0x138] sm:$0xff]
      %v267 = vld [vmem:[%s212 + $0x140] sm:$0xff]
      %v268 = vld [vmem:[%s212 + $0x148] sm:$0xff]
      %v269 = vld [vmem:[%s212 + $0x150] sm:$0xff]
      %v270 = vld [vmem:[%s212 + $0x158] sm:$0xff]
      %v271 = vld [vmem:[%s212 + $0x160] sm:$0xff]
      %v272 = vld [vmem:[%s212 + $0x168] sm:$0xff]
      %v273 = vld [vmem:[%s212 + $0x170] sm:$0xff]
      %v274 = vld [vmem:[%s212 + $0x178] sm:$0xff]
      %v275 = vld [vmem:[%s212 + $0x180] sm:$0xff]
      %v276 = vld [vmem:[%s212 + $0x188] sm:$0xff]
      %v277 = vld [vmem:[%s212 + $0x190] sm:$0xff]
      %v278 = vld [vmem:[%s212 + $0x198] sm:$0xff]
      %v279 = vld [vmem:[%s212 + $0x1a0] sm:$0xff]
      %v280 = vld [vmem:[%s212 + $0x1a8] sm:$0xff]
      %v281 = vld [vmem:[%s212 + $0x1b0] sm:$0xff]
      %v282 = vld [vmem:[%s212 + $0x1b8] sm:$0xff]
      %v283 = vld [vmem:[%s212 + $0x1c0] sm:$0xff]
      %v284 = vld [vmem:[%s212 + $0x1c8] sm:$0xff]
      %v285 = vld [vmem:[%s212 + $0x1d0] sm:$0xff]
      %v286 = vld [vmem:[%s212 + $0x1d8] sm:$0xff]
      %v287 = vld [vmem:[%s212 + $0x1e0] sm:$0xff]
      %v288 = vld [vmem:[%s212 + $0x1e8] sm:$0xff]
      %v289 = vld [vmem:[%s212 + $0x1f0] sm:$0xff]
      %v290 = vld [vmem:[%s212 + $0x1f8] sm:$0xff]
      %v291 = vld [vmem:[%s1] sm:$0xf]
      %v292 = vld [vmem:[%s1 + $0x4] sm:$0xf]
      %v293 = vld [vmem:[%s1 + $0x8] sm:$0xf]
      %v294 = vld [vmem:[%s1 + $0xc] sm:$0xf]
      %v295 = vld [vmem:[%s1 + $0x10] sm:$0xf]
      %v296 = vld [vmem:[%s1 + $0x14] sm:$0xf]
      %v297 = vld [vmem:[%s1 + $0x18] sm:$0xf]
      %v298 = vld [vmem:[%s1 + $0x1c] sm:$0xf]
      %v299 = vld [vmem:[%s1 + $0x20] sm:$0xf]
      %v300 = vld [vmem:[%s1 + $0x24] sm:$0xf]
      %v301 = vld [vmem:[%s1 + $0x28] sm:$0xf]
      %v302 = vld [vmem:[%s1 + $0x2c] sm:$0xf]
      %v303 = vld [vmem:[%s1 + $0x30] sm:$0xf]
      %v304 = vld [vmem:[%s1 + $0x34] sm:$0xf]
      %v305 = vld [vmem:[%s1 + $0x38] sm:$0xf]
      %v306 = vld [vmem:[%s1 + $0x3c] sm:$0xf]
      %v307 = vld [vmem:[%s1 + $0x40] sm:$0xf]
      %v308 = vld [vmem:[%s1 + $0x44] sm:$0xf]
      %v309 = vld [vmem:[%s1 + $0x48] sm:$0xf]
      %v310 = vld [vmem:[%s1 + $0x4c] sm:$0xf]
      %v311 = vld [vmem:[%s1 + $0x50] sm:$0xf]
      %v312 = vld [vmem:[%s1 + $0x54] sm:$0xf]
      %v313 = vld [vmem:[%s1 + $0x58] sm:$0xf]
      %v314 = vld [vmem:[%s1 + $0x5c] sm:$0xf]
      %v315 = vld [vmem:[%s1 + $0x60] sm:$0xf]
      %v316 = vld [vmem:[%s1 + $0x64] sm:$0xf]
      %v317 = vld [vmem:[%s1 + $0x68] sm:$0xf]
      %v318 = vld [vmem:[%s1 + $0x6c] sm:$0xf]
      %v319 = vld [vmem:[%s1 + $0x70] sm:$0xf]
      %v320 = vld [vmem:[%s1 + $0x74] sm:$0xf]
      %v321 = vld [vmem:[%s1 + $0x78] sm:$0xf]
      %v322 = vld [vmem:[%s1 + $0x7c] sm:$0xf]
      %v323 = vld [vmem:[%s1 + $0x80] sm:$0xf]
      %v324 = vld [vmem:[%s1 + $0x84] sm:$0xf]
      %v325 = vld [vmem:[%s1 + $0x88] sm:$0xf]
      %v326 = vld [vmem:[%s1 + $0x8c] sm:$0xf]
      %v327 = vld [vmem:[%s1 + $0x90] sm:$0xf]
      %v328 = vld [vmem:[%s1 + $0x94] sm:$0xf]
      %v329 = vld [vmem:[%s1 + $0x98] sm:$0xf]
      %v330 = vld [vmem:[%s1 + $0x9c] sm:$0xf]
      %v331 = vld [vmem:[%s1 + $0xa0] sm:$0xf]
      %v332 = vld [vmem:[%s1 + $0xa4] sm:$0xf]
      %v333 = vld [vmem:[%s1 + $0xa8] sm:$0xf]
      %v334 = vld [vmem:[%s1 + $0xac] sm:$0xf]
      %v335 = vld [vmem:[%s1 + $0xb0] sm:$0xf]
      %v336 = vld [vmem:[%s1 + $0xb4] sm:$0xf]
      %v337 = vld [vmem:[%s1 + $0xb8] sm:$0xf]
      %v338 = vld [vmem:[%s1 + $0xbc] sm:$0xf]
      %v339 = vld [vmem:[%s1 + $0xc0] sm:$0xf]
      %v340 = vld [vmem:[%s1 + $0xc4] sm:$0xf]
      %v341 = vld [vmem:[%s1 + $0xc8] sm:$0xf]
      %v342 = vld [vmem:[%s1 + $0xcc] sm:$0xf]
      %v343 = vld [vmem:[%s1 + $0xd0] sm:$0xf]
      %v344 = vld [vmem:[%s1 + $0xd4] sm:$0xf]
      %v345 = vld [vmem:[%s1 + $0xd8] sm:$0xf]
      %v346 = vld [vmem:[%s1 + $0xdc] sm:$0xf]
      %v347 = vld [vmem:[%s1 + $0xe0] sm:$0xf]
      %v348 = vld [vmem:[%s1 + $0xe4] sm:$0xf]
      %v349 = vld [vmem:[%s1 + $0xe8] sm:$0xf]
      %v350 = vld [vmem:[%s1 + $0xec] sm:$0xf]
      %v351 = vld [vmem:[%s1 + $0xf0] sm:$0xf]
      %v352 = vld [vmem:[%s1 + $0xf4] sm:$0xf]
      %v353 = vld [vmem:[%s1 + $0xf8] sm:$0xf]
      %v354 = vld [vmem:[%s1 + $0xfc] sm:$0xf]
      %v419 = vunpack.c.l.b16 %v227
      %v420 = vunpack.c.h.b16 %v227
      %v421 = vunpack.c.l.b16 %v228
      %v422 = vunpack.c.h.b16 %v228
      %v423 = vunpack.c.l.b16 %v229
      %v424 = vunpack.c.h.b16 %v229
      %v425 = vunpack.c.l.b16 %v230
      %v426 = vunpack.c.h.b16 %v230
      %v427 = vunpack.c.l.b16 %v231
      %v428 = vunpack.c.h.b16 %v231
      %v429 = vunpack.c.l.b16 %v232
      %v430 = vunpack.c.h.b16 %v232
      %v431 = vunpack.c.l.b16 %v233
      %v432 = vunpack.c.h.b16 %v233
      %v433 = vunpack.c.l.b16 %v234
      %v434 = vunpack.c.h.b16 %v234
      %v435 = vunpack.c.l.b16 %v235
      %v436 = vunpack.c.h.b16 %v235
      %v437 = vunpack.c.l.b16 %v236
      %v438 = vunpack.c.h.b16 %v236
      %v439 = vunpack.c.l.b16 %v237
      %v440 = vunpack.c.h.b16 %v237
      %v441 = vunpack.c.l.b16 %v238
      %v442 = vunpack.c.h.b16 %v238
      %v443 = vunpack.c.l.b16 %v239
      %v444 = vunpack.c.h.b16 %v239
      %v445 = vunpack.c.l.b16 %v240
      %v446 = vunpack.c.h.b16 %v240
      %v447 = vunpack.c.l.b16 %v241
      %v448 = vunpack.c.h.b16 %v241
      %v449 = vunpack.c.l.b16 %v242
      %v450 = vunpack.c.h.b16 %v242
      %v451 = vunpack.c.l.b16 %v243
      %v452 = vunpack.c.h.b16 %v243
      %v453 = vunpack.c.l.b16 %v244
      %v454 = vunpack.c.h.b16 %v244
      %v455 = vunpack.c.l.b16 %v245
      %v456 = vunpack.c.h.b16 %v245
      %v457 = vunpack.c.l.b16 %v246
      %v458 = vunpack.c.h.b16 %v246
      %v459 = vunpack.c.l.b16 %v247
      %v460 = vunpack.c.h.b16 %v247
      %v461 = vunpack.c.l.b16 %v248
      %v462 = vunpack.c.h.b16 %v248
      %v463 = vunpack.c.l.b16 %v249
      %v464 = vunpack.c.h.b16 %v249
      %v465 = vunpack.c.l.b16 %v250
      %v466 = vunpack.c.h.b16 %v250
      %v467 = vunpack.c.l.b16 %v251
      %v468 = vunpack.c.h.b16 %v251
      %v469 = vunpack.c.l.b16 %v252
      %v470 = vunpack.c.h.b16 %v252
      %v471 = vunpack.c.l.b16 %v253
      %v472 = vunpack.c.h.b16 %v253
      %v473 = vunpack.c.l.b16 %v254
      %v474 = vunpack.c.h.b16 %v254
      %v475 = vunpack.c.l.b16 %v255
      %v476 = vunpack.c.h.b16 %v255
      %v477 = vunpack.c.l.b16 %v256
      %v478 = vunpack.c.h.b16 %v256
      %v479 = vunpack.c.l.b16 %v257
      %v480 = vunpack.c.h.b16 %v257
      %v481 = vunpack.c.l.b16 %v258
      %v482 = vunpack.c.h.b16 %v258
      %v483 = vunpack.c.l.b16 %v259
      %v484 = vunpack.c.h.b16 %v259
      %v485 = vunpack.c.l.b16 %v260
      %v486 = vunpack.c.h.b16 %v260
      %v487 = vunpack.c.l.b16 %v261
      %v488 = vunpack.c.h.b16 %v261
      %v489 = vunpack.c.l.b16 %v262
      %v490 = vunpack.c.h.b16 %v262
      %v491 = vunpack.c.l.b16 %v263
      %v492 = vunpack.c.h.b16 %v263
      %v493 = vunpack.c.l.b16 %v264
      %v494 = vunpack.c.h.b16 %v264
      %v495 = vunpack.c.l.b16 %v265
      %v496 = vunpack.c.h.b16 %v265
      %v497 = vunpack.c.l.b16 %v266
      %v498 = vunpack.c.h.b16 %v266
      %v499 = vunpack.c.l.b16 %v267
      %v500 = vunpack.c.h.b16 %v267
      %v501 = vunpack.c.l.b16 %v268
      %v502 = vunpack.c.h.b16 %v268
      %v503 = vunpack.c.l.b16 %v269
      %v504 = vunpack.c.h.b16 %v269
      %v505 = vunpack.c.l.b16 %v270
      %v506 = vunpack.c.h.b16 %v270
      %v507 = vunpack.c.l.b16 %v271
      %v508 = vunpack.c.h.b16 %v271
      %v509 = vunpack.c.l.b16 %v272
      %v510 = vunpack.c.h.b16 %v272
      %v511 = vunpack.c.l.b16 %v273
      %v512 = vunpack.c.h.b16 %v273
      %v513 = vunpack.c.l.b16 %v274
      %v514 = vunpack.c.h.b16 %v274
      %v515 = vunpack.c.l.b16 %v275
      %v516 = vunpack.c.h.b16 %v275
      %v517 = vunpack.c.l.b16 %v276
      %v518 = vunpack.c.h.b16 %v276
      %v519 = vunpack.c.l.b16 %v277
      %v520 = vunpack.c.h.b16 %v277
      %v521 = vunpack.c.l.b16 %v278
      %v522 = vunpack.c.h.b16 %v278
      %v523 = vunpack.c.l.b16 %v279
      %v524 = vunpack.c.h.b16 %v279
      %v525 = vunpack.c.l.b16 %v280
      %v526 = vunpack.c.h.b16 %v280
      %v527 = vunpack.c.l.b16 %v281
      %v528 = vunpack.c.h.b16 %v281
      %v529 = vunpack.c.l.b16 %v282
      %v530 = vunpack.c.h.b16 %v282
      %v531 = vunpack.c.l.b16 %v283
      %v532 = vunpack.c.h.b16 %v283
      %v533 = vunpack.c.l.b16 %v284
      %v534 = vunpack.c.h.b16 %v284
      %v535 = vunpack.c.l.b16 %v285
      %v536 = vunpack.c.h.b16 %v285
      %v537 = vunpack.c.l.b16 %v286
      %v538 = vunpack.c.h.b16 %v286
      %v539 = vunpack.c.l.b16 %v287
      %v540 = vunpack.c.h.b16 %v287
      %v541 = vunpack.c.l.b16 %v288
      %v542 = vunpack.c.h.b16 %v288
      %v543 = vunpack.c.l.b16 %v289
      %v544 = vunpack.c.h.b16 %v289
      %v545 = vunpack.c.l.b16 %v290
      %v546 = vunpack.c.h.b16 %v290
      %v547 = vpack.c.b16 %v423, %v419
      %v548 = vpack.c.b16 %v424, %v420
      %v549 = vpack.c.b16 %v425, %v421
      %v550 = vpack.c.b16 %v426, %v422
      %v551 = vpack.c.b16 %v431, %v427
      %v552 = vpack.c.b16 %v432, %v428
      %v553 = vpack.c.b16 %v433, %v429
      %v554 = vpack.c.b16 %v434, %v430
      %v555 = vpack.c.b16 %v439, %v435
      %v556 = vpack.c.b16 %v440, %v436
      %v557 = vpack.c.b16 %v441, %v437
      %v558 = vpack.c.b16 %v442, %v438
      %v559 = vpack.c.b16 %v447, %v443
      %v560 = vpack.c.b16 %v448, %v444
      %v561 = vpack.c.b16 %v449, %v445
      %v562 = vpack.c.b16 %v450, %v446
      %v563 = vpack.c.b16 %v455, %v451
      %v564 = vpack.c.b16 %v456, %v452
      %v565 = vpack.c.b16 %v457, %v453
      %v566 = vpack.c.b16 %v458, %v454
      %v567 = vpack.c.b16 %v463, %v459
      %v568 = vpack.c.b16 %v464, %v460
      %v569 = vpack.c.b16 %v465, %v461
      %v570 = vpack.c.b16 %v466, %v462
      %v571 = vpack.c.b16 %v471, %v467
      %v572 = vpack.c.b16 %v472, %v468
      %v573 = vpack.c.b16 %v473, %v469
      %v574 = vpack.c.b16 %v474, %v470
      %v575 = vpack.c.b16 %v479, %v475
      %v576 = vpack.c.b16 %v480, %v476
      %v577 = vpack.c.b16 %v481, %v477
      %v578 = vpack.c.b16 %v482, %v478
      %v579 = vpack.c.b16 %v487, %v483
      %v580 = vpack.c.b16 %v488, %v484
      %v581 = vpack.c.b16 %v489, %v485
      %v582 = vpack.c.b16 %v490, %v486
      %v583 = vpack.c.b16 %v495, %v491
      %v584 = vpack.c.b16 %v496, %v492
      %v585 = vpack.c.b16 %v497, %v493
      %v586 = vpack.c.b16 %v498, %v494
      %v587 = vpack.c.b16 %v503, %v499
      %v588 = vpack.c.b16 %v504, %v500
      %v589 = vpack.c.b16 %v505, %v501
      %v590 = vpack.c.b16 %v506, %v502
      %v591 = vpack.c.b16 %v511, %v507
      %v592 = vpack.c.b16 %v512, %v508
      %v593 = vpack.c.b16 %v513, %v509
      %v594 = vpack.c.b16 %v514, %v510
      %v595 = vpack.c.b16 %v519, %v515
      %v596 = vpack.c.b16 %v520, %v516
      %v597 = vpack.c.b16 %v521, %v517
      %v598 = vpack.c.b16 %v522, %v518
      %v599 = vpack.c.b16 %v527, %v523
      %v600 = vpack.c.b16 %v528, %v524
      %v601 = vpack.c.b16 %v529, %v525
      %v602 = vpack.c.b16 %v530, %v526
      %v603 = vpack.c.b16 %v535, %v531
      %v604 = vpack.c.b16 %v536, %v532
      %v605 = vpack.c.b16 %v537, %v533
      %v606 = vpack.c.b16 %v538, %v534
      %v607 = vpack.c.b16 %v543, %v539
      %v608 = vpack.c.b16 %v544, %v540
      %v609 = vpack.c.b16 %v545, %v541
      %v610 = vpack.c.b16 %v546, %v542
      %v739 = vunpack.c.l.b16 %v291
      %v740 = vunpack.c.l.b16 %v292
      %v741 = vunpack.c.l.b16 %v293
      %v742 = vunpack.c.l.b16 %v294
      %v743 = vunpack.c.l.b16 %v295
      %v744 = vunpack.c.l.b16 %v296
      %v745 = vunpack.c.l.b16 %v297
      %v746 = vunpack.c.l.b16 %v298
      %v747 = vunpack.c.l.b16 %v299
      %v748 = vunpack.c.l.b16 %v300
      %v749 = vunpack.c.l.b16 %v301
      %v750 = vunpack.c.l.b16 %v302
      %v751 = vunpack.c.l.b16 %v303
      %v752 = vunpack.c.l.b16 %v304
      %v753 = vunpack.c.l.b16 %v305
      %v754 = vunpack.c.l.b16 %v306
      %v755 = vunpack.c.l.b16 %v307
      %v756 = vunpack.c.l.b16 %v308
      %v757 = vunpack.c.l.b16 %v309
      %v758 = vunpack.c.l.b16 %v310
      %v759 = vunpack.c.l.b16 %v311
      %v760 = vunpack.c.l.b16 %v312
      %v761 = vunpack.c.l.b16 %v313
      %v762 = vunpack.c.l.b16 %v314
      %v763 = vunpack.c.l.b16 %v315
      %v764 = vunpack.c.l.b16 %v316
      %v765 = vunpack.c.l.b16 %v317
      %v766 = vunpack.c.l.b16 %v318
      %v767 = vunpack.c.l.b16 %v319
      %v768 = vunpack.c.l.b16 %v320
      %v769 = vunpack.c.l.b16 %v321
      %v770 = vunpack.c.l.b16 %v322
      %v771 = vunpack.c.l.b16 %v323
      %v772 = vunpack.c.l.b16 %v324
      %v773 = vunpack.c.l.b16 %v325
      %v774 = vunpack.c.l.b16 %v326
      %v775 = vunpack.c.l.b16 %v327
      %v776 = vunpack.c.l.b16 %v328
      %v777 = vunpack.c.l.b16 %v329
      %v778 = vunpack.c.l.b16 %v330
      %v779 = vunpack.c.l.b16 %v331
      %v780 = vunpack.c.l.b16 %v332
      %v781 = vunpack.c.l.b16 %v333
      %v782 = vunpack.c.l.b16 %v334
      %v783 = vunpack.c.l.b16 %v335
      %v784 = vunpack.c.l.b16 %v336
      %v785 = vunpack.c.l.b16 %v337
      %v786 = vunpack.c.l.b16 %v338
      %v787 = vunpack.c.l.b16 %v339
      %v788 = vunpack.c.l.b16 %v340
      %v789 = vunpack.c.l.b16 %v341
      %v790 = vunpack.c.l.b16 %v342
      %v791 = vunpack.c.l.b16 %v343
      %v792 = vunpack.c.l.b16 %v344
      %v793 = vunpack.c.l.b16 %v345
      %v794 = vunpack.c.l.b16 %v346
      %v795 = vunpack.c.l.b16 %v347
      %v796 = vunpack.c.l.b16 %v348
      %v797 = vunpack.c.l.b16 %v349
      %v798 = vunpack.c.l.b16 %v350
      %v799 = vunpack.c.l.b16 %v351
      %v800 = vunpack.c.l.b16 %v352
      %v801 = vunpack.c.l.b16 %v353
      %v802 = vunpack.c.l.b16 %v354
      %v803 = vpack.c.b16 %v740, %v739
      %v804 = vpack.c.b16 %v742, %v741
      %v805 = vpack.c.b16 %v744, %v743
      %v806 = vpack.c.b16 %v746, %v745
      %v807 = vpack.c.b16 %v748, %v747
      %v808 = vpack.c.b16 %v750, %v749
      %v809 = vpack.c.b16 %v752, %v751
      %v810 = vpack.c.b16 %v754, %v753
      %v811 = vpack.c.b16 %v756, %v755
      %v812 = vpack.c.b16 %v758, %v757
      %v813 = vpack.c.b16 %v760, %v759
      %v814 = vpack.c.b16 %v762, %v761
      %v815 = vpack.c.b16 %v764, %v763
      %v816 = vpack.c.b16 %v766, %v765
      %v817 = vpack.c.b16 %v768, %v767
      %v818 = vpack.c.b16 %v770, %v769
      %v819 = vpack.c.b16 %v772, %v771
      %v820 = vpack.c.b16 %v774, %v773
      %v821 = vpack.c.b16 %v776, %v775
      %v822 = vpack.c.b16 %v778, %v777
      %v823 = vpack.c.b16 %v780, %v779
      %v824 = vpack.c.b16 %v782, %v781
      %v825 = vpack.c.b16 %v784, %v783
      %v826 = vpack.c.b16 %v786, %v785
      %v827 = vpack.c.b16 %v788, %v787
      %v828 = vpack.c.b16 %v790, %v789
      %v829 = vpack.c.b16 %v792, %v791
      %v830 = vpack.c.b16 %v794, %v793
      %v831 = vpack.c.b16 %v796, %v795
      %v832 = vpack.c.b16 %v798, %v797
      %v833 = vpack.c.b16 %v800, %v799
      %v834 = vpack.c.b16 %v802, %v801
      %867 = vmatprep.subr.bf16.mxu0 0
      %868 = vmatpush1.bf16.msra.mxu0 %v810
      %869 = vmatprep.subr.bf16.mxu0 0
      %870 = vmatpush1.bf16.msra.mxu0 %v809
      %871 = vmatprep.subr.bf16.mxu0 0
      %872 = vmatpush1.bf16.msra.mxu0 %v808
      %873 = vmatprep.subr.bf16.mxu0 0
      %874 = vmatpush1.bf16.msra.mxu0 %v807
      %875 = vmatprep.subr.bf16.mxu0 0
      %876 = vmatpush1.bf16.msra.mxu0 %v806
      %877 = vmatprep.subr.bf16.mxu0 0
      %878 = vmatpush1.bf16.msra.mxu0 %v805
      %879 = vmatprep.subr.bf16.mxu0 0
      %880 = vmatpush1.bf16.msra.mxu0 %v804
      %881 = vmatprep.subr.bf16.mxu0 0
      %882 = vmatpush1.bf16.msra.mxu0 %v803
      %883 = vmatprep.subr.bf16.mxu0 0
      %884 = vmatpush2.bf16.msra.mxu0 %v818
      %885 = vmatprep.subr.bf16.mxu0 0
      %886 = vmatpush2.bf16.msra.mxu0 %v817
      %887 = vmatprep.subr.bf16.mxu0 0
      %888 = vmatpush2.bf16.msra.mxu0 %v816
      %889 = vmatprep.subr.bf16.mxu0 0
      %890 = vmatpush2.bf16.msra.mxu0 %v815
      %891 = vmatprep.subr.bf16.mxu0 0
      %892 = vmatpush2.bf16.msra.mxu0 %v814
      %893 = vmatprep.subr.bf16.mxu0 0
      %894 = vmatpush2.bf16.msra.mxu0 %v813
      %895 = vmatprep.subr.bf16.mxu0 0
      %896 = vmatpush2.bf16.msra.mxu0 %v812
      %897 = vmatprep.subr.bf16.mxu0 0
      %898 = vmatpush2.bf16.msra.mxu0 %v811
      %899 = vmatprep.mubr.bf16.mxu0 %v548
      %900 = vmatmul.mubr.bf16.gmra.mxu0 %v547
      %v901 = vpop.f32.mrf.mxu0
      %v902 = vadd.f32 0.0, %v901
      %v903 = vpop.f32.mrf.mxu0
      %v904 = vpop.f32.mrf.mxu0
      %v905 = vadd.f32 0.0, %v904
      %v906 = vpop.f32.mrf.mxu0
      %907 = vmatprep.mubr.bf16.mxu0 %v552
      %908 = vmatmul.mubr.bf16.gmra.mxu0 %v551
      %v909 = vpop.f32.mrf.mxu0
      %v910 = vadd.f32 0.0, %v909
      %v911 = vpop.f32.mrf.mxu0
      %v912 = vpop.f32.mrf.mxu0
      %v913 = vadd.f32 0.0, %v912
      %v914 = vpop.f32.mrf.mxu0
      %915 = vmatprep.mubr.bf16.mxu0 %v556
      %916 = vmatmul.mubr.bf16.gmra.mxu0 %v555
      %v917 = vpop.f32.mrf.mxu0
      %v918 = vadd.f32 0.0, %v917
      %v919 = vpop.f32.mrf.mxu0
      %v920 = vpop.f32.mrf.mxu0
      %v921 = vadd.f32 0.0, %v920
      %v922 = vpop.f32.mrf.mxu0
      %923 = vmatprep.mubr.bf16.mxu0 %v560
      %924 = vmatmul.mubr.bf16.gmra.mxu0 %v559
      %v925 = vpop.f32.mrf.mxu0
      %v926 = vadd.f32 0.0, %v925
      %v927 = vpop.f32.mrf.mxu0
      %v928 = vpop.f32.mrf.mxu0
      %v929 = vadd.f32 0.0, %v928
      %v930 = vpop.f32.mrf.mxu0
      %931 = vmatprep.mubr.bf16.mxu0 %v564
      %932 = vmatmul.mubr.bf16.gmra.mxu0 %v563
      %v933 = vpop.f32.mrf.mxu0
      %v934 = vadd.f32 0.0, %v933
      %v935 = vpop.f32.mrf.mxu0
      %v936 = vpop.f32.mrf.mxu0
      %v937 = vadd.f32 0.0, %v936
      %v938 = vpop.f32.mrf.mxu0
      %939 = vmatprep.mubr.bf16.mxu0 %v568
      %940 = vmatmul.mubr.bf16.gmra.mxu0 %v567
      %v941 = vpop.f32.mrf.mxu0
      %v942 = vadd.f32 0.0, %v941
      %v943 = vpop.f32.mrf.mxu0
      %v944 = vpop.f32.mrf.mxu0
      %v945 = vadd.f32 0.0, %v944
      %v946 = vpop.f32.mrf.mxu0
      %947 = vmatprep.mubr.bf16.mxu0 %v572
      %948 = vmatmul.mubr.bf16.gmra.mxu0 %v571
      %v949 = vpop.f32.mrf.mxu0
      %v950 = vadd.f32 0.0, %v949
      %v951 = vpop.f32.mrf.mxu0
      %v952 = vpop.f32.mrf.mxu0
      %v953 = vadd.f32 0.0, %v952
      %v954 = vpop.f32.mrf.mxu0
      %955 = vmatprep.mubr.bf16.mxu0 %v576
      %956 = vmatmul.mubr.bf16.gmra.mxu0 %v575
      %v957 = vpop.f32.mrf.mxu0
      %v958 = vadd.f32 0.0, %v957
      %v959 = vpop.f32.mrf.mxu0
      %v960 = vpop.f32.mrf.mxu0
      %v961 = vadd.f32 0.0, %v960
      %v962 = vpop.f32.mrf.mxu0
      %963 = vmatprep.mubr.bf16.mxu0 %v580
      %964 = vmatmul.mubr.bf16.gmra.mxu0 %v579
      %v965 = vpop.f32.mrf.mxu0
      %v966 = vadd.f32 0.0, %v965
      %v967 = vpop.f32.mrf.mxu0
      %v968 = vpop.f32.mrf.mxu0
      %v969 = vadd.f32 0.0, %v968
      %v970 = vpop.f32.mrf.mxu0
      %971 = vmatprep.mubr.bf16.mxu0 %v584
      %972 = vmatmul.mubr.bf16.gmra.mxu0 %v583
      %v973 = vpop.f32.mrf.mxu0
      %v974 = vadd.f32 0.0, %v973
      %v975 = vpop.f32.mrf.mxu0
      %v976 = vpop.f32.mrf.mxu0
      %v977 = vadd.f32 0.0, %v976
      %v978 = vpop.f32.mrf.mxu0
      %979 = vmatprep.mubr.bf16.mxu0 %v588
      %980 = vmatmul.mubr.bf16.gmra.mxu0 %v587
      %v981 = vpop.f32.mrf.mxu0
      %v982 = vadd.f32 0.0, %v981
      %v983 = vpop.f32.mrf.mxu0
      %v984 = vpop.f32.mrf.mxu0
      %v985 = vadd.f32 0.0, %v984
      %v986 = vpop.f32.mrf.mxu0
      %987 = vmatprep.mubr.bf16.mxu0 %v592
      %988 = vmatmul.mubr.bf16.gmra.mxu0 %v591
      %v989 = vpop.f32.mrf.mxu0
      %v990 = vadd.f32 0.0, %v989
      %v991 = vpop.f32.mrf.mxu0
      %v992 = vpop.f32.mrf.mxu0
      %v993 = vadd.f32 0.0, %v992
      %v994 = vpop.f32.mrf.mxu0
      %995 = vmatprep.mubr.bf16.mxu0 %v596
      %996 = vmatmul.mubr.bf16.gmra.mxu0 %v595
      %v997 = vpop.f32.mrf.mxu0
      %v998 = vadd.f32 0.0, %v997
      %v999 = vpop.f32.mrf.mxu0
      %v1000 = vpop.f32.mrf.mxu0
      %v1001 = vadd.f32 0.0, %v1000
      %v1002 = vpop.f32.mrf.mxu0
      %1003 = vmatprep.mubr.bf16.mxu0 %v600
      %1004 = vmatmul.mubr.bf16.gmra.mxu0 %v599
      %v1005 = vpop.f32.mrf.mxu0
      %v1006 = vadd.f32 0.0, %v1005
      %v1007 = vpop.f32.mrf.mxu0
      %v1008 = vpop.f32.mrf.mxu0
      %v1009 = vadd.f32 0.0, %v1008
      %v1010 = vpop.f32.mrf.mxu0
      %1011 = vmatprep.mubr.bf16.mxu0 %v604
      %1012 = vmatmul.mubr.bf16.gmra.mxu0 %v603
      %v1013 = vpop.f32.mrf.mxu0
      %v1014 = vadd.f32 0.0, %v1013
      %v1015 = vpop.f32.mrf.mxu0
      %v1016 = vpop.f32.mrf.mxu0
      %v1017 = vadd.f32 0.0, %v1016
      %v1018 = vpop.f32.mrf.mxu0
      %1019 = vmatprep.mubr.bf16.mxu0 %v608
      %1020 = vmatmul.mubr.bf16.gmra.mxu0 %v607
      %v1021 = vpop.f32.mrf.mxu0
      %v1022 = vadd.f32 0.0, %v1021
      %v1023 = vpop.f32.mrf.mxu0
      %v1024 = vpop.f32.mrf.mxu0
      %v1025 = vadd.f32 0.0, %v1024
      %v1026 = vpop.f32.mrf.mxu0
      %1027 = vdwg.mxu0
      %1028 = vmatprep.subr.bf16.mxu0 0
      %1029 = vmatpush1.bf16.msra.mxu0 %v826
      %1030 = vmatprep.subr.bf16.mxu0 0
      %1031 = vmatpush1.bf16.msra.mxu0 %v825
      %1032 = vmatprep.subr.bf16.mxu0 0
      %1033 = vmatpush1.bf16.msra.mxu0 %v824
      %1034 = vmatprep.subr.bf16.mxu0 0
      %1035 = vmatpush1.bf16.msra.mxu0 %v823
      %1036 = vmatprep.subr.bf16.mxu0 0
      %1037 = vmatpush1.bf16.msra.mxu0 %v822
      %1038 = vmatprep.subr.bf16.mxu0 0
      %1039 = vmatpush1.bf16.msra.mxu0 %v821
      %1040 = vmatprep.subr.bf16.mxu0 0
      %1041 = vmatpush1.bf16.msra.mxu0 %v820
      %1042 = vmatprep.subr.bf16.mxu0 0
      %1043 = vmatpush1.bf16.msra.mxu0 %v819
      %1044 = vmatprep.subr.bf16.mxu0 0
      %1045 = vmatpush2.bf16.msra.mxu0 %v834
      %1046 = vmatprep.subr.bf16.mxu0 0
      %1047 = vmatpush2.bf16.msra.mxu0 %v833
      %1048 = vmatprep.subr.bf16.mxu0 0
      %1049 = vmatpush2.bf16.msra.mxu0 %v832
      %1050 = vmatprep.subr.bf16.mxu0 0
      %1051 = vmatpush2.bf16.msra.mxu0 %v831
      %1052 = vmatprep.subr.bf16.mxu0 0
      %1053 = vmatpush2.bf16.msra.mxu0 %v830
      %1054 = vmatprep.subr.bf16.mxu0 0
      %1055 = vmatpush2.bf16.msra.mxu0 %v829
      %1056 = vmatprep.subr.bf16.mxu0 0
      %1057 = vmatpush2.bf16.msra.mxu0 %v828
      %1058 = vmatprep.subr.bf16.mxu0 0
      %1059 = vmatpush2.bf16.msra.mxu0 %v827
      %1060 = vmatprep.mubr.bf16.mxu0 %v550
      %1061 = vmatmul.mubr.bf16.gmra.mxu0 %v549
      %v1062 = vpop.f32.mrf.mxu0
      %v1063 = vadd.f32 %v902, %v1062
      %v1064 = vpop.f32.mrf.mxu0
      %v1065 = vpop.f32.mrf.mxu0
      %v1066 = vadd.f32 %v905, %v1065
      %v1067 = vpop.f32.mrf.mxu0
      %1068 = vmatprep.mubr.bf16.mxu0 %v554
      %1069 = vmatmul.mubr.bf16.gmra.mxu0 %v553
      %v1070 = vpop.f32.mrf.mxu0
      %v1071 = vadd.f32 %v910, %v1070
      %v1072 = vpop.f32.mrf.mxu0
      %v1073 = vpop.f32.mrf.mxu0
      %v1074 = vadd.f32 %v913, %v1073
      %v1075 = vpop.f32.mrf.mxu0
      %1076 = vmatprep.mubr.bf16.mxu0 %v558
      %1077 = vmatmul.mubr.bf16.gmra.mxu0 %v557
      %v1078 = vpop.f32.mrf.mxu0
      %v1079 = vadd.f32 %v918, %v1078
      %v1080 = vpop.f32.mrf.mxu0
      %v1081 = vpop.f32.mrf.mxu0
      %v1082 = vadd.f32 %v921, %v1081
      %v1083 = vpop.f32.mrf.mxu0
      %1084 = vmatprep.mubr.bf16.mxu0 %v562
      %1085 = vmatmul.mubr.bf16.gmra.mxu0 %v561
      %v1086 = vpop.f32.mrf.mxu0
      %v1087 = vadd.f32 %v926, %v1086
      %v1088 = vpop.f32.mrf.mxu0
      %v1089 = vpop.f32.mrf.mxu0
      %v1090 = vadd.f32 %v929, %v1089
      %v1091 = vpop.f32.mrf.mxu0
      %1092 = vmatprep.mubr.bf16.mxu0 %v566
      %1093 = vmatmul.mubr.bf16.gmra.mxu0 %v565
      %v1094 = vpop.f32.mrf.mxu0
      %v1095 = vadd.f32 %v934, %v1094
      %v1096 = vpop.f32.mrf.mxu0
      %v1097 = vpop.f32.mrf.mxu0
      %v1098 = vadd.f32 %v937, %v1097
      %v1099 = vpop.f32.mrf.mxu0
      %1100 = vmatprep.mubr.bf16.mxu0 %v570
      %1101 = vmatmul.mubr.bf16.gmra.mxu0 %v569
      %v1102 = vpop.f32.mrf.mxu0
      %v1103 = vadd.f32 %v942, %v1102
      %v1104 = vpop.f32.mrf.mxu0
      %v1105 = vpop.f32.mrf.mxu0
      %v1106 = vadd.f32 %v945, %v1105
      %v1107 = vpop.f32.mrf.mxu0
      %1108 = vmatprep.mubr.bf16.mxu0 %v574
      %1109 = vmatmul.mubr.bf16.gmra.mxu0 %v573
      %v1110 = vpop.f32.mrf.mxu0
      %v1111 = vadd.f32 %v950, %v1110
      %v1112 = vpop.f32.mrf.mxu0
      %v1113 = vpop.f32.mrf.mxu0
      %v1114 = vadd.f32 %v953, %v1113
      %v1115 = vpop.f32.mrf.mxu0
      %1116 = vmatprep.mubr.bf16.mxu0 %v578
      %1117 = vmatmul.mubr.bf16.gmra.mxu0 %v577
      %v1118 = vpop.f32.mrf.mxu0
      %v1119 = vadd.f32 %v958, %v1118
      %v1120 = vpop.f32.mrf.mxu0
      %v1121 = vpop.f32.mrf.mxu0
      %v1122 = vadd.f32 %v961, %v1121
      %v1123 = vpop.f32.mrf.mxu0
      %1124 = vmatprep.mubr.bf16.mxu0 %v582
      %1125 = vmatmul.mubr.bf16.gmra.mxu0 %v581
      %v1126 = vpop.f32.mrf.mxu0
      %v1127 = vadd.f32 %v966, %v1126
      %v1128 = vpop.f32.mrf.mxu0
      %v1129 = vpop.f32.mrf.mxu0
      %v1130 = vadd.f32 %v969, %v1129
      %v1131 = vpop.f32.mrf.mxu0
      %1132 = vmatprep.mubr.bf16.mxu0 %v586
      %1133 = vmatmul.mubr.bf16.gmra.mxu0 %v585
      %v1134 = vpop.f32.mrf.mxu0
      %v1135 = vadd.f32 %v974, %v1134
      %v1136 = vpop.f32.mrf.mxu0
      %v1137 = vpop.f32.mrf.mxu0
      %v1138 = vadd.f32 %v977, %v1137
      %v1139 = vpop.f32.mrf.mxu0
      %1140 = vmatprep.mubr.bf16.mxu0 %v590
      %1141 = vmatmul.mubr.bf16.gmra.mxu0 %v589
      %v1142 = vpop.f32.mrf.mxu0
      %v1143 = vadd.f32 %v982, %v1142
      %v1144 = vpop.f32.mrf.mxu0
      %v1145 = vpop.f32.mrf.mxu0
      %v1146 = vadd.f32 %v985, %v1145
      %v1147 = vpop.f32.mrf.mxu0
      %1148 = vmatprep.mubr.bf16.mxu0 %v594
      %1149 = vmatmul.mubr.bf16.gmra.mxu0 %v593
      %v1150 = vpop.f32.mrf.mxu0
      %v1151 = vadd.f32 %v990, %v1150
      %v1152 = vpop.f32.mrf.mxu0
      %v1153 = vpop.f32.mrf.mxu0
      %v1154 = vadd.f32 %v993, %v1153
      %v1155 = vpop.f32.mrf.mxu0
      %1156 = vmatprep.mubr.bf16.mxu0 %v598
      %1157 = vmatmul.mubr.bf16.gmra.mxu0 %v597
      %v1158 = vpop.f32.mrf.mxu0
      %v1159 = vadd.f32 %v998, %v1158
      %v1160 = vpop.f32.mrf.mxu0
      %v1161 = vpop.f32.mrf.mxu0
      %v1162 = vadd.f32 %v1001, %v1161
      %v1163 = vpop.f32.mrf.mxu0
      %1164 = vmatprep.mubr.bf16.mxu0 %v602
      %1165 = vmatmul.mubr.bf16.gmra.mxu0 %v601
      %v1166 = vpop.f32.mrf.mxu0
      %v1167 = vadd.f32 %v1006, %v1166
      %v1168 = vpop.f32.mrf.mxu0
      %v1169 = vpop.f32.mrf.mxu0
      %v1170 = vadd.f32 %v1009, %v1169
      %v1171 = vpop.f32.mrf.mxu0
      %1172 = vmatprep.mubr.bf16.mxu0 %v606
      %1173 = vmatmul.mubr.bf16.gmra.mxu0 %v605
      %v1174 = vpop.f32.mrf.mxu0
      %v1175 = vadd.f32 %v1014, %v1174
      %v1176 = vpop.f32.mrf.mxu0
      %v1177 = vpop.f32.mrf.mxu0
      %v1178 = vadd.f32 %v1017, %v1177
      %v1179 = vpop.f32.mrf.mxu0
      %1180 = vmatprep.mubr.bf16.mxu0 %v610
      %1181 = vmatmul.mubr.bf16.gmra.mxu0 %v609
      %v1182 = vpop.f32.mrf.mxu0
      %v1183 = vadd.f32 %v1022, %v1182
      %v1184 = vpop.f32.mrf.mxu0
      %v1185 = vpop.f32.mrf.mxu0
      %v1186 = vadd.f32 %v1025, %v1185
      %v1187 = vpop.f32.mrf.mxu0
      %1188 = vdwg.mxu0
      %v1189 = vld [vmem:[%s218] sm:$0xff]
      %v1190 = vld [vmem:[%s218 + $0x8] sm:$0xff]
      %v1191 = vld [vmem:[%s218 + $0x10] sm:$0xff]
      %v1192 = vld [vmem:[%s218 + $0x18] sm:$0xff]
      %v1193 = vld [vmem:[%s218 + $0x20] sm:$0xff]
      %v1194 = vld [vmem:[%s218 + $0x28] sm:$0xff]
      %v1195 = vld [vmem:[%s218 + $0x30] sm:$0xff]
      %v1196 = vld [vmem:[%s218 + $0x38] sm:$0xff]
      %v1197 = vld [vmem:[%s218 + $0x40] sm:$0xff]
      %v1198 = vld [vmem:[%s218 + $0x48] sm:$0xff]
      %v1199 = vld [vmem:[%s218 + $0x50] sm:$0xff]
      %v1200 = vld [vmem:[%s218 + $0x58] sm:$0xff]
      %v1201 = vld [vmem:[%s218 + $0x60] sm:$0xff]
      %v1202 = vld [vmem:[%s218 + $0x68] sm:$0xff]
      %v1203 = vld [vmem:[%s218 + $0x70] sm:$0xff]
      %v1204 = vld [vmem:[%s218 + $0x78] sm:$0xff]
      %v1205 = vld [vmem:[%s218 + $0x80] sm:$0xff]
      %v1206 = vld [vmem:[%s218 + $0x88] sm:$0xff]
      %v1207 = vld [vmem:[%s218 + $0x90] sm:$0xff]
      %v1208 = vld [vmem:[%s218 + $0x98] sm:$0xff]
      %v1209 = vld [vmem:[%s218 + $0xa0] sm:$0xff]
      %v1210 = vld [vmem:[%s218 + $0xa8] sm:$0xff]
      %v1211 = vld [vmem:[%s218 + $0xb0] sm:$0xff]
      %v1212 = vld [vmem:[%s218 + $0xb8] sm:$0xff]
      %v1213 = vld [vmem:[%s218 + $0xc0] sm:$0xff]
      %v1214 = vld [vmem:[%s218 + $0xc8] sm:$0xff]
      %v1215 = vld [vmem:[%s218 + $0xd0] sm:$0xff]
      %v1216 = vld [vmem:[%s218 + $0xd8] sm:$0xff]
      %v1217 = vld [vmem:[%s218 + $0xe0] sm:$0xff]
      %v1218 = vld [vmem:[%s218 + $0xe8] sm:$0xff]
      %v1219 = vld [vmem:[%s218 + $0xf0] sm:$0xff]
      %v1220 = vld [vmem:[%s218 + $0xf8] sm:$0xff]
      %v1221 = vld [vmem:[%s3] sm:$0x1]
      %1223 = vset.pattern.permute.xlu0 0
      %1224 = vperm.xlu0 %1223, %v1189
      %v1225 = vpop.permute.xlu0 %1224
      %1228 = vset.pattern.permute.xlu0 0
      %1229 = vperm.xlu0 %1228, %v1190
      %v1230 = vpop.permute.xlu0 %1229
      %1233 = vset.pattern.permute.xlu0 0
      %1234 = vperm.xlu0 %1233, %v1191
      %v1235 = vpop.permute.xlu0 %1234
      %1238 = vset.pattern.permute.xlu0 0
      %1239 = vperm.xlu0 %1238, %v1192
      %v1240 = vpop.permute.xlu0 %1239
      %1243 = vset.pattern.permute.xlu0 0
      %1244 = vperm.xlu0 %1243, %v1193
      %v1245 = vpop.permute.xlu0 %1244
      %1248 = vset.pattern.permute.xlu0 0
      %1249 = vperm.xlu0 %1248, %v1194
      %v1250 = vpop.permute.xlu0 %1249
      %1253 = vset.pattern.permute.xlu0 0
      %1254 = vperm.xlu0 %1253, %v1195
      %v1255 = vpop.permute.xlu0 %1254
      %1258 = vset.pattern.permute.xlu0 0
      %1259 = vperm.xlu0 %1258, %v1196
      %v1260 = vpop.permute.xlu0 %1259
      %1263 = vset.pattern.permute.xlu0 0
      %1264 = vperm.xlu0 %1263, %v1197
      %v1265 = vpop.permute.xlu0 %1264
      %1268 = vset.pattern.permute.xlu0 0
      %1269 = vperm.xlu0 %1268, %v1198
      %v1270 = vpop.permute.xlu0 %1269
      %1273 = vset.pattern.permute.xlu0 0
      %1274 = vperm.xlu0 %1273, %v1199
      %v1275 = vpop.permute.xlu0 %1274
      %1278 = vset.pattern.permute.xlu0 0
      %1279 = vperm.xlu0 %1278, %v1200
      %v1280 = vpop.permute.xlu0 %1279
      %1283 = vset.pattern.permute.xlu0 0
      %1284 = vperm.xlu0 %1283, %v1201
      %v1285 = vpop.permute.xlu0 %1284
      %1288 = vset.pattern.permute.xlu0 0
      %1289 = vperm.xlu0 %1288, %v1202
      %v1290 = vpop.permute.xlu0 %1289
      %1293 = vset.pattern.permute.xlu0 0
      %1294 = vperm.xlu0 %1293, %v1203
      %v1295 = vpop.permute.xlu0 %1294
      %1298 = vset.pattern.permute.xlu0 0
      %1299 = vperm.xlu0 %1298, %v1204
      %v1300 = vpop.permute.xlu0 %1299
      %1303 = vset.pattern.permute.xlu0 0
      %1304 = vperm.xlu0 %1303, %v1205
      %v1305 = vpop.permute.xlu0 %1304
      %1308 = vset.pattern.permute.xlu0 0
      %1309 = vperm.xlu0 %1308, %v1206
      %v1310 = vpop.permute.xlu0 %1309
      %1313 = vset.pattern.permute.xlu0 0
      %1314 = vperm.xlu0 %1313, %v1207
      %v1315 = vpop.permute.xlu0 %1314
      %1318 = vset.pattern.permute.xlu0 0
      %1319 = vperm.xlu0 %1318, %v1208
      %v1320 = vpop.permute.xlu0 %1319
      %1323 = vset.pattern.permute.xlu0 0
      %1324 = vperm.xlu0 %1323, %v1209
      %v1325 = vpop.permute.xlu0 %1324
      %1328 = vset.pattern.permute.xlu0 0
      %1329 = vperm.xlu0 %1328, %v1210
      %v1330 = vpop.permute.xlu0 %1329
      %1333 = vset.pattern.permute.xlu0 0
      %1334 = vperm.xlu0 %1333, %v1211
      %v1335 = vpop.permute.xlu0 %1334
      %1338 = vset.pattern.permute.xlu0 0
      %1339 = vperm.xlu0 %1338, %v1212
      %v1340 = vpop.permute.xlu0 %1339
      %1343 = vset.pattern.permute.xlu0 0
      %1344 = vperm.xlu0 %1343, %v1213
      %v1345 = vpop.permute.xlu0 %1344
      %1348 = vset.pattern.permute.xlu0 0
      %1349 = vperm.xlu0 %1348, %v1214
      %v1350 = vpop.permute.xlu0 %1349
      %1353 = vset.pattern.permute.xlu0 0
      %1354 = vperm.xlu0 %1353, %v1215
      %v1355 = vpop.permute.xlu0 %1354
      %1358 = vset.pattern.permute.xlu0 0
      %1359 = vperm.xlu0 %1358, %v1216
      %v1360 = vpop.permute.xlu0 %1359
      %1363 = vset.pattern.permute.xlu0 0
      %1364 = vperm.xlu0 %1363, %v1217
      %v1365 = vpop.permute.xlu0 %1364
      %1368 = vset.pattern.permute.xlu0 0
      %1369 = vperm.xlu0 %1368, %v1218
      %v1370 = vpop.permute.xlu0 %1369
      %1373 = vset.pattern.permute.xlu0 0
      %1374 = vperm.xlu0 %1373, %v1219
      %v1375 = vpop.permute.xlu0 %1374
      %1378 = vset.pattern.permute.xlu0 0
      %1379 = vperm.xlu0 %1378, %v1220
      %v1380 = vpop.permute.xlu0 %1379
      %v1382 = vmul.f32 %v1063, %v1225
      %v1383 = vmul.f32 %v1066, %v1230
      %v1384 = vmul.f32 %v1071, %v1235
      %v1385 = vmul.f32 %v1074, %v1240
      %v1386 = vmul.f32 %v1079, %v1245
      %v1387 = vmul.f32 %v1082, %v1250
      %v1388 = vmul.f32 %v1087, %v1255
      %v1389 = vmul.f32 %v1090, %v1260
      %v1390 = vmul.f32 %v1095, %v1265
      %v1391 = vmul.f32 %v1098, %v1270
      %v1392 = vmul.f32 %v1103, %v1275
      %v1393 = vmul.f32 %v1106, %v1280
      %v1394 = vmul.f32 %v1111, %v1285
      %v1395 = vmul.f32 %v1114, %v1290
      %v1396 = vmul.f32 %v1119, %v1295
      %v1397 = vmul.f32 %v1122, %v1300
      %v1398 = vmul.f32 %v1127, %v1305
      %v1399 = vmul.f32 %v1130, %v1310
      %v1400 = vmul.f32 %v1135, %v1315
      %v1401 = vmul.f32 %v1138, %v1320
      %v1402 = vmul.f32 %v1143, %v1325
      %v1403 = vmul.f32 %v1146, %v1330
      %v1404 = vmul.f32 %v1151, %v1335
      %v1405 = vmul.f32 %v1154, %v1340
      %v1406 = vmul.f32 %v1159, %v1345
      %v1407 = vmul.f32 %v1162, %v1350
      %v1408 = vmul.f32 %v1167, %v1355
      %v1409 = vmul.f32 %v1170, %v1360
      %v1410 = vmul.f32 %v1175, %v1365
      %v1411 = vmul.f32 %v1178, %v1370
      %v1412 = vmul.f32 %v1183, %v1375
      %v1413 = vmul.f32 %v1186, %v1380
      %v1415 = vlaneseq
      %v1416 = vshrl.u32 %v1415, 7
      %v1417 = vsub.s32 0, %v1416
      %v1418 = vrot.slane %v1221, %v1417
      %v1420 = vadd.f32 %v1382, %v1418
      %v1421 = vadd.f32 %v1383, %v1418
      %v1422 = vadd.f32 %v1384, %v1418
      %v1423 = vadd.f32 %v1385, %v1418
      %v1424 = vadd.f32 %v1386, %v1418
      %v1425 = vadd.f32 %v1387, %v1418
      %v1426 = vadd.f32 %v1388, %v1418
      %v1427 = vadd.f32 %v1389, %v1418
      %v1428 = vadd.f32 %v1390, %v1418
      %v1429 = vadd.f32 %v1391, %v1418
      %v1430 = vadd.f32 %v1392, %v1418
      %v1431 = vadd.f32 %v1393, %v1418
      %v1432 = vadd.f32 %v1394, %v1418
      %v1433 = vadd.f32 %v1395, %v1418
      %v1434 = vadd.f32 %v1396, %v1418
      %v1435 = vadd.f32 %v1397, %v1418
      %v1436 = vadd.f32 %v1398, %v1418
      %v1437 = vadd.f32 %v1399, %v1418
      %v1438 = vadd.f32 %v1400, %v1418
      %v1439 = vadd.f32 %v1401, %v1418
      %v1440 = vadd.f32 %v1402, %v1418
      %v1441 = vadd.f32 %v1403, %v1418
      %v1442 = vadd.f32 %v1404, %v1418
      %v1443 = vadd.f32 %v1405, %v1418
      %v1444 = vadd.f32 %v1406, %v1418
      %v1445 = vadd.f32 %v1407, %v1418
      %v1446 = vadd.f32 %v1408, %v1418
      %v1447 = vadd.f32 %v1409, %v1418
      %v1448 = vadd.f32 %v1410, %v1418
      %v1449 = vadd.f32 %v1411, %v1418
      %v1450 = vadd.f32 %v1412, %v1418
      %v1451 = vadd.f32 %v1413, %v1418
      %v1452 = vlaneseq
      %v1453 = vand.u32 %v1452, 127
      %vm1454 = vcmp.lt.s32.totalorder %v1453, 7
      %v1455 = vsel %vm1454, %v1420, -1e+30
      %v1456 = vsel %vm1454, %v1421, -1e+30
      %v1457 = vsel %vm1454, %v1422, -1e+30
      %v1458 = vsel %vm1454, %v1423, -1e+30
      %v1459 = vsel %vm1454, %v1424, -1e+30
      %v1460 = vsel %vm1454, %v1425, -1e+30
      %v1461 = vsel %vm1454, %v1426, -1e+30
      %v1462 = vsel %vm1454, %v1427, -1e+30
      %v1463 = vsel %vm1454, %v1428, -1e+30
      %v1464 = vsel %vm1454, %v1429, -1e+30
      %v1465 = vsel %vm1454, %v1430, -1e+30
      %v1466 = vsel %vm1454, %v1431, -1e+30
      %v1467 = vsel %vm1454, %v1432, -1e+30
      %v1468 = vsel %vm1454, %v1433, -1e+30
      %v1469 = vsel %vm1454, %v1434, -1e+30
      %v1470 = vsel %vm1454, %v1435, -1e+30
      %v1471 = vsel %vm1454, %v1436, -1e+30
      %v1472 = vsel %vm1454, %v1437, -1e+30
      %v1473 = vsel %vm1454, %v1438, -1e+30
      %v1474 = vsel %vm1454, %v1439, -1e+30
      %v1475 = vsel %vm1454, %v1440, -1e+30
      %v1476 = vsel %vm1454, %v1441, -1e+30
      %v1477 = vsel %vm1454, %v1442, -1e+30
      %v1478 = vsel %vm1454, %v1443, -1e+30
      %v1479 = vsel %vm1454, %v1444, -1e+30
      %v1480 = vsel %vm1454, %v1445, -1e+30
      %v1481 = vsel %vm1454, %v1446, -1e+30
      %v1482 = vsel %vm1454, %v1447, -1e+30
      %v1483 = vsel %vm1454, %v1448, -1e+30
      %v1484 = vsel %vm1454, %v1449, -1e+30
      %v1485 = vsel %vm1454, %v1450, -1e+30
      %v1486 = vsel %vm1454, %v1451, -1e+30
      %1487 = vmax.xlane.f32.xlu0 %v1455
      %v1488 = vpop.xlane.xlu0 %1487
      %1489 = vmax.xlane.f32.xlu0 %v1456
      %v1490 = vpop.xlane.xlu0 %1489
      %1491 = vmax.xlane.f32.xlu0 %v1457
      %v1492 = vpop.xlane.xlu0 %1491
      %1493 = vmax.xlane.f32.xlu0 %v1458
      %v1494 = vpop.xlane.xlu0 %1493
      %1495 = vmax.xlane.f32.xlu0 %v1459
      %v1496 = vpop.xlane.xlu0 %1495
      %1497 = vmax.xlane.f32.xlu0 %v1460
      %v1498 = vpop.xlane.xlu0 %1497
      %1499 = vmax.xlane.f32.xlu0 %v1461
      %v1500 = vpop.xlane.xlu0 %1499
      %1501 = vmax.xlane.f32.xlu0 %v1462
      %v1502 = vpop.xlane.xlu0 %1501
      %1503 = vmax.xlane.f32.xlu0 %v1463
      %v1504 = vpop.xlane.xlu0 %1503
      %1505 = vmax.xlane.f32.xlu0 %v1464
      %v1506 = vpop.xlane.xlu0 %1505
      %1507 = vmax.xlane.f32.xlu0 %v1465
      %v1508 = vpop.xlane.xlu0 %1507
      %1509 = vmax.xlane.f32.xlu0 %v1466
      %v1510 = vpop.xlane.xlu0 %1509
      %1511 = vmax.xlane.f32.xlu0 %v1467
      %v1512 = vpop.xlane.xlu0 %1511
      %1513 = vmax.xlane.f32.xlu0 %v1468
      %v1514 = vpop.xlane.xlu0 %1513
      %1515 = vmax.xlane.f32.xlu0 %v1469
      %v1516 = vpop.xlane.xlu0 %1515
      %1517 = vmax.xlane.f32.xlu0 %v1470
      %v1518 = vpop.xlane.xlu0 %1517
      %1519 = vmax.xlane.f32.xlu0 %v1471
      %v1520 = vpop.xlane.xlu0 %1519
      %1521 = vmax.xlane.f32.xlu0 %v1472
      %v1522 = vpop.xlane.xlu0 %1521
      %1523 = vmax.xlane.f32.xlu0 %v1473
      %v1524 = vpop.xlane.xlu0 %1523
      %1525 = vmax.xlane.f32.xlu0 %v1474
      %v1526 = vpop.xlane.xlu0 %1525
      %1527 = vmax.xlane.f32.xlu0 %v1475
      %v1528 = vpop.xlane.xlu0 %1527
      %1529 = vmax.xlane.f32.xlu0 %v1476
      %v1530 = vpop.xlane.xlu0 %1529
      %1531 = vmax.xlane.f32.xlu0 %v1477
      %v1532 = vpop.xlane.xlu0 %1531
      %1533 = vmax.xlane.f32.xlu0 %v1478
      %v1534 = vpop.xlane.xlu0 %1533
      %1535 = vmax.xlane.f32.xlu0 %v1479
      %v1536 = vpop.xlane.xlu0 %1535
      %1537 = vmax.xlane.f32.xlu0 %v1480
      %v1538 = vpop.xlane.xlu0 %1537
      %1539 = vmax.xlane.f32.xlu0 %v1481
      %v1540 = vpop.xlane.xlu0 %1539
      %1541 = vmax.xlane.f32.xlu0 %v1482
      %v1542 = vpop.xlane.xlu0 %1541
      %1543 = vmax.xlane.f32.xlu0 %v1483
      %v1544 = vpop.xlane.xlu0 %1543
      %1545 = vmax.xlane.f32.xlu0 %v1484
      %v1546 = vpop.xlane.xlu0 %1545
      %1547 = vmax.xlane.f32.xlu0 %v1485
      %v1548 = vpop.xlane.xlu0 %1547
      %1549 = vmax.xlane.f32.xlu0 %v1486
      %v1550 = vpop.xlane.xlu0 %1549
      %v1551 = vsub.f32 %v1455, %v1488
      %v1552 = vsub.f32 %v1456, %v1490
      %v1553 = vsub.f32 %v1457, %v1492
      %v1554 = vsub.f32 %v1458, %v1494
      %v1555 = vsub.f32 %v1459, %v1496
      %v1556 = vsub.f32 %v1460, %v1498
      %v1557 = vsub.f32 %v1461, %v1500
      %v1558 = vsub.f32 %v1462, %v1502
      %v1559 = vsub.f32 %v1463, %v1504
      %v1560 = vsub.f32 %v1464, %v1506
      %v1561 = vsub.f32 %v1465, %v1508
      %v1562 = vsub.f32 %v1466, %v1510
      %v1563 = vsub.f32 %v1467, %v1512
      %v1564 = vsub.f32 %v1468, %v1514
      %v1565 = vsub.f32 %v1469, %v1516
      %v1566 = vsub.f32 %v1470, %v1518
      %v1567 = vsub.f32 %v1471, %v1520
      %v1568 = vsub.f32 %v1472, %v1522
      %v1569 = vsub.f32 %v1473, %v1524
      %v1570 = vsub.f32 %v1474, %v1526
      %v1571 = vsub.f32 %v1475, %v1528
      %v1572 = vsub.f32 %v1476, %v1530
      %v1573 = vsub.f32 %v1477, %v1532
      %v1574 = vsub.f32 %v1478, %v1534
      %v1575 = vsub.f32 %v1479, %v1536
      %v1576 = vsub.f32 %v1480, %v1538
      %v1577 = vsub.f32 %v1481, %v1540
      %v1578 = vsub.f32 %v1482, %v1542
      %v1579 = vsub.f32 %v1483, %v1544
      %v1580 = vsub.f32 %v1484, %v1546
      %v1581 = vsub.f32 %v1485, %v1548
      %v1582 = vsub.f32 %v1486, %v1550
      %v1583 = vmul.f32 %v1551, 1.442695
      %v1584 = vpow.pop %v1583
      %v1585 = vmul.f32 %v1552, 1.442695
      %v1586 = vpow.pop %v1585
      %v1587 = vmul.f32 %v1553, 1.442695
      %v1588 = vpow.pop %v1587
      %v1589 = vmul.f32 %v1554, 1.442695
      %v1590 = vpow.pop %v1589
      %v1591 = vmul.f32 %v1555, 1.442695
      %v1592 = vpow.pop %v1591
      %v1593 = vmul.f32 %v1556, 1.442695
      %v1594 = vpow.pop %v1593
      %v1595 = vmul.f32 %v1557, 1.442695
      %v1596 = vpow.pop %v1595
      %v1597 = vmul.f32 %v1558, 1.442695
      %v1598 = vpow.pop %v1597
      %v1599 = vmul.f32 %v1559, 1.442695
      %v1600 = vpow.pop %v1599
      %v1601 = vmul.f32 %v1560, 1.442695
      %v1602 = vpow.pop %v1601
      %v1603 = vmul.f32 %v1561, 1.442695
      %v1604 = vpow.pop %v1603
      %v1605 = vmul.f32 %v1562, 1.442695
      %v1606 = vpow.pop %v1605
      %v1607 = vmul.f32 %v1563, 1.442695
      %v1608 = vpow.pop %v1607
      %v1609 = vmul.f32 %v1564, 1.442695
      %v1610 = vpow.pop %v1609
      %v1611 = vmul.f32 %v1565, 1.442695
      %v1612 = vpow.pop %v1611
      %v1613 = vmul.f32 %v1566, 1.442695
      %v1614 = vpow.pop %v1613
      %v1615 = vmul.f32 %v1567, 1.442695
      %v1616 = vpow.pop %v1615
      %v1617 = vmul.f32 %v1568, 1.442695
      %v1618 = vpow.pop %v1617
      %v1619 = vmul.f32 %v1569, 1.442695
      %v1620 = vpow.pop %v1619
      %v1621 = vmul.f32 %v1570, 1.442695
      %v1622 = vpow.pop %v1621
      %v1623 = vmul.f32 %v1571, 1.442695
      %v1624 = vpow.pop %v1623
      %v1625 = vmul.f32 %v1572, 1.442695
      %v1626 = vpow.pop %v1625
      %v1627 = vmul.f32 %v1573, 1.442695
      %v1628 = vpow.pop %v1627
      %v1629 = vmul.f32 %v1574, 1.442695
      %v1630 = vpow.pop %v1629
      %v1631 = vmul.f32 %v1575, 1.442695
      %v1632 = vpow.pop %v1631
      %v1633 = vmul.f32 %v1576, 1.442695
      %v1634 = vpow.pop %v1633
      %v1635 = vmul.f32 %v1577, 1.442695
      %v1636 = vpow.pop %v1635
      %v1637 = vmul.f32 %v1578, 1.442695
      %v1638 = vpow.pop %v1637
      %v1639 = vmul.f32 %v1579, 1.442695
      %v1640 = vpow.pop %v1639
      %v1641 = vmul.f32 %v1580, 1.442695
      %v1642 = vpow.pop %v1641
      %v1643 = vmul.f32 %v1581, 1.442695
      %v1644 = vpow.pop %v1643
      %v1645 = vmul.f32 %v1582, 1.442695
      %v1646 = vpow.pop %v1645
      %v1647 = vsel %vm1454, %v1584, 0.0
      %v1648 = vsel %vm1454, %v1586, 0.0
      %v1649 = vsel %vm1454, %v1588, 0.0
      %v1650 = vsel %vm1454, %v1590, 0.0
      %v1651 = vsel %vm1454, %v1592, 0.0
      %v1652 = vsel %vm1454, %v1594, 0.0
      %v1653 = vsel %vm1454, %v1596, 0.0
      %v1654 = vsel %vm1454, %v1598, 0.0
      %v1655 = vsel %vm1454, %v1600, 0.0
      %v1656 = vsel %vm1454, %v1602, 0.0
      %v1657 = vsel %vm1454, %v1604, 0.0
      %v1658 = vsel %vm1454, %v1606, 0.0
      %v1659 = vsel %vm1454, %v1608, 0.0
      %v1660 = vsel %vm1454, %v1610, 0.0
      %v1661 = vsel %vm1454, %v1612, 0.0
      %v1662 = vsel %vm1454, %v1614, 0.0
      %v1663 = vsel %vm1454, %v1616, 0.0
      %v1664 = vsel %vm1454, %v1618, 0.0
      %v1665 = vsel %vm1454, %v1620, 0.0
      %v1666 = vsel %vm1454, %v1622, 0.0
      %v1667 = vsel %vm1454, %v1624, 0.0
      %v1668 = vsel %vm1454, %v1626, 0.0
      %v1669 = vsel %vm1454, %v1628, 0.0
      %v1670 = vsel %vm1454, %v1630, 0.0
      %v1671 = vsel %vm1454, %v1632, 0.0
      %v1672 = vsel %vm1454, %v1634, 0.0
      %v1673 = vsel %vm1454, %v1636, 0.0
      %v1674 = vsel %vm1454, %v1638, 0.0
      %v1675 = vsel %vm1454, %v1640, 0.0
      %v1676 = vsel %vm1454, %v1642, 0.0
      %v1677 = vsel %vm1454, %v1644, 0.0
      %v1678 = vsel %vm1454, %v1646, 0.0
      %1679 = vadd.xlane.f32.xlu0 %v1647
      %v1680 = vpop.xlane.xlu0 %1679
      %1681 = vadd.xlane.f32.xlu0 %v1648
      %v1682 = vpop.xlane.xlu0 %1681
      %1683 = vadd.xlane.f32.xlu0 %v1649
      %v1684 = vpop.xlane.xlu0 %1683
      %1685 = vadd.xlane.f32.xlu0 %v1650
      %v1686 = vpop.xlane.xlu0 %1685
      %1687 = vadd.xlane.f32.xlu0 %v1651
      %v1688 = vpop.xlane.xlu0 %1687
      %1689 = vadd.xlane.f32.xlu0 %v1652
      %v1690 = vpop.xlane.xlu0 %1689
      %1691 = vadd.xlane.f32.xlu0 %v1653
      %v1692 = vpop.xlane.xlu0 %1691
      %1693 = vadd.xlane.f32.xlu0 %v1654
      %v1694 = vpop.xlane.xlu0 %1693
      %1695 = vadd.xlane.f32.xlu0 %v1655
      %v1696 = vpop.xlane.xlu0 %1695
      %1697 = vadd.xlane.f32.xlu0 %v1656
      %v1698 = vpop.xlane.xlu0 %1697
      %1699 = vadd.xlane.f32.xlu0 %v1657
      %v1700 = vpop.xlane.xlu0 %1699
      %1701 = vadd.xlane.f32.xlu0 %v1658
      %v1702 = vpop.xlane.xlu0 %1701
      %1703 = vadd.xlane.f32.xlu0 %v1659
      %v1704 = vpop.xlane.xlu0 %1703
      %1705 = vadd.xlane.f32.xlu0 %v1660
      %v1706 = vpop.xlane.xlu0 %1705
      %1707 = vadd.xlane.f32.xlu0 %v1661
      %v1708 = vpop.xlane.xlu0 %1707
      %1709 = vadd.xlane.f32.xlu0 %v1662
      %v1710 = vpop.xlane.xlu0 %1709
      %1711 = vadd.xlane.f32.xlu0 %v1663
      %v1712 = vpop.xlane.xlu0 %1711
      %1713 = vadd.xlane.f32.xlu0 %v1664
      %v1714 = vpop.xlane.xlu0 %1713
      %1715 = vadd.xlane.f32.xlu0 %v1665
      %v1716 = vpop.xlane.xlu0 %1715
      %1717 = vadd.xlane.f32.xlu0 %v1666
      %v1718 = vpop.xlane.xlu0 %1717
      %1719 = vadd.xlane.f32.xlu0 %v1667
      %v1720 = vpop.xlane.xlu0 %1719
      %1721 = vadd.xlane.f32.xlu0 %v1668
      %v1722 = vpop.xlane.xlu0 %1721
      %1723 = vadd.xlane.f32.xlu0 %v1669
      %v1724 = vpop.xlane.xlu0 %1723
      %1725 = vadd.xlane.f32.xlu0 %v1670
      %v1726 = vpop.xlane.xlu0 %1725
      %1727 = vadd.xlane.f32.xlu0 %v1671
      %v1728 = vpop.xlane.xlu0 %1727
      %1729 = vadd.xlane.f32.xlu0 %v1672
      %v1730 = vpop.xlane.xlu0 %1729
      %1731 = vadd.xlane.f32.xlu0 %v1673
      %v1732 = vpop.xlane.xlu0 %1731
      %1733 = vadd.xlane.f32.xlu0 %v1674
      %v1734 = vpop.xlane.xlu0 %1733
      %1735 = vadd.xlane.f32.xlu0 %v1675
      %v1736 = vpop.xlane.xlu0 %1735
      %1737 = vadd.xlane.f32.xlu0 %v1676
      %v1738 = vpop.xlane.xlu0 %1737
      %1739 = vadd.xlane.f32.xlu0 %v1677
      %v1740 = vpop.xlane.xlu0 %1739
      %1741 = vadd.xlane.f32.xlu0 %v1678
      %v1742 = vpop.xlane.xlu0 %1741
      %v1743 = vlog2.pop %v1680
      %v1744 = vmul.f32 %v1743, 0.6931472
      %v1745 = vlog2.pop %v1682
      %v1746 = vmul.f32 %v1745, 0.6931472
      %v1747 = vlog2.pop %v1684
      %v1748 = vmul.f32 %v1747, 0.6931472
      %v1749 = vlog2.pop %v1686
      %v1750 = vmul.f32 %v1749, 0.6931472
      %v1751 = vlog2.pop %v1688
      %v1752 = vmul.f32 %v1751, 0.6931472
      %v1753 = vlog2.pop %v1690
      %v1754 = vmul.f32 %v1753, 0.6931472
      %v1755 = vlog2.pop %v1692
      %v1756 = vmul.f32 %v1755, 0.6931472
      %v1757 = vlog2.pop %v1694
      %v1758 = vmul.f32 %v1757, 0.6931472
      %v1759 = vlog2.pop %v1696
      %v1760 = vmul.f32 %v1759, 0.6931472
      %v1761 = vlog2.pop %v1698
      %v1762 = vmul.f32 %v1761, 0.6931472
      %v1763 = vlog2.pop %v1700
      %v1764 = vmul.f32 %v1763, 0.6931472
      %v1765 = vlog2.pop %v1702
      %v1766 = vmul.f32 %v1765, 0.6931472
      %v1767 = vlog2.pop %v1704
      %v1768 = vmul.f32 %v1767, 0.6931472
      %v1769 = vlog2.pop %v1706
      %v1770 = vmul.f32 %v1769, 0.6931472
      %v1771 = vlog2.pop %v1708
      %v1772 = vmul.f32 %v1771, 0.6931472
      %v1773 = vlog2.pop %v1710
      %v1774 = vmul.f32 %v1773, 0.6931472
      %v1775 = vlog2.pop %v1712
      %v1776 = vmul.f32 %v1775, 0.6931472
      %v1777 = vlog2.pop %v1714
      %v1778 = vmul.f32 %v1777, 0.6931472
      %v1779 = vlog2.pop %v1716
      %v1780 = vmul.f32 %v1779, 0.6931472
      %v1781 = vlog2.pop %v1718
      %v1782 = vmul.f32 %v1781, 0.6931472
      %v1783 = vlog2.pop %v1720
      %v1784 = vmul.f32 %v1783, 0.6931472
      %v1785 = vlog2.pop %v1722
      %v1786 = vmul.f32 %v1785, 0.6931472
      %v1787 = vlog2.pop %v1724
      %v1788 = vmul.f32 %v1787, 0.6931472
      %v1789 = vlog2.pop %v1726
      %v1790 = vmul.f32 %v1789, 0.6931472
      %v1791 = vlog2.pop %v1728
      %v1792 = vmul.f32 %v1791, 0.6931472
      %v1793 = vlog2.pop %v1730
      %v1794 = vmul.f32 %v1793, 0.6931472
      %v1795 = vlog2.pop %v1732
      %v1796 = vmul.f32 %v1795, 0.6931472
      %v1797 = vlog2.pop %v1734
      %v1798 = vmul.f32 %v1797, 0.6931472
      %v1799 = vlog2.pop %v1736
      %v1800 = vmul.f32 %v1799, 0.6931472
      %v1801 = vlog2.pop %v1738
      %v1802 = vmul.f32 %v1801, 0.6931472
      %v1803 = vlog2.pop %v1740
      %v1804 = vmul.f32 %v1803, 0.6931472
      %v1805 = vlog2.pop %v1742
      %v1806 = vmul.f32 %v1805, 0.6931472
      %v1807 = vsub.f32 %v1551, %v1744
      %v1808 = vsub.f32 %v1552, %v1746
      %v1809 = vsub.f32 %v1553, %v1748
      %v1810 = vsub.f32 %v1554, %v1750
      %v1811 = vsub.f32 %v1555, %v1752
      %v1812 = vsub.f32 %v1556, %v1754
      %v1813 = vsub.f32 %v1557, %v1756
      %v1814 = vsub.f32 %v1558, %v1758
      %v1815 = vsub.f32 %v1559, %v1760
      %v1816 = vsub.f32 %v1560, %v1762
      %v1817 = vsub.f32 %v1561, %v1764
      %v1818 = vsub.f32 %v1562, %v1766
      %v1819 = vsub.f32 %v1563, %v1768
      %v1820 = vsub.f32 %v1564, %v1770
      %v1821 = vsub.f32 %v1565, %v1772
      %v1822 = vsub.f32 %v1566, %v1774
      %v1823 = vsub.f32 %v1567, %v1776
      %v1824 = vsub.f32 %v1568, %v1778
      %v1825 = vsub.f32 %v1569, %v1780
      %v1826 = vsub.f32 %v1570, %v1782
      %v1827 = vsub.f32 %v1571, %v1784
      %v1828 = vsub.f32 %v1572, %v1786
      %v1829 = vsub.f32 %v1573, %v1788
      %v1830 = vsub.f32 %v1574, %v1790
      %v1831 = vsub.f32 %v1575, %v1792
      %v1832 = vsub.f32 %v1576, %v1794
      %v1833 = vsub.f32 %v1577, %v1796
      %v1834 = vsub.f32 %v1578, %v1798
      %v1835 = vsub.f32 %v1579, %v1800
      %v1836 = vsub.f32 %v1580, %v1802
      %v1837 = vsub.f32 %v1581, %v1804
      %v1838 = vsub.f32 %v1582, %v1806
      %1839 = vst [vmem:[%s224] sm:$0xff] %v1807
      %1840 = vst [vmem:[%s224 + $0x8] sm:$0xff] %v1808
      %1841 = vst [vmem:[%s224 + $0x10] sm:$0xff] %v1809
      %1842 = vst [vmem:[%s224 + $0x18] sm:$0xff] %v1810
      %1843 = vst [vmem:[%s224 + $0x20] sm:$0xff] %v1811
      %1844 = vst [vmem:[%s224 + $0x28] sm:$0xff] %v1812
      %1845 = vst [vmem:[%s224 + $0x30] sm:$0xff] %v1813
      %1846 = vst [vmem:[%s224 + $0x38] sm:$0xff] %v1814
      %1847 = vst [vmem:[%s224 + $0x40] sm:$0xff] %v1815
      %1848 = vst [vmem:[%s224 + $0x48] sm:$0xff] %v1816
      %1849 = vst [vmem:[%s224 + $0x50] sm:$0xff] %v1817
      %1850 = vst [vmem:[%s224 + $0x58] sm:$0xff] %v1818
      %1851 = vst [vmem:[%s224 + $0x60] sm:$0xff] %v1819
      %1852 = vst [vmem:[%s224 + $0x68] sm:$0xff] %v1820
      %1853 = vst [vmem:[%s224 + $0x70] sm:$0xff] %v1821
      %1854 = vst [vmem:[%s224 + $0x78] sm:$0xff] %v1822
      %1855 = vst [vmem:[%s224 + $0x80] sm:$0xff] %v1823
      %1856 = vst [vmem:[%s224 + $0x88] sm:$0xff] %v1824
      %1857 = vst [vmem:[%s224 + $0x90] sm:$0xff] %v1825
      %1858 = vst [vmem:[%s224 + $0x98] sm:$0xff] %v1826
      %1859 = vst [vmem:[%s224 + $0xa0] sm:$0xff] %v1827
      %1860 = vst [vmem:[%s224 + $0xa8] sm:$0xff] %v1828
      %1861 = vst [vmem:[%s224 + $0xb0] sm:$0xff] %v1829
      %1862 = vst [vmem:[%s224 + $0xb8] sm:$0xff] %v1830
      %1863 = vst [vmem:[%s224 + $0xc0] sm:$0xff] %v1831
      %1864 = vst [vmem:[%s224 + $0xc8] sm:$0xff] %v1832
      %1865 = vst [vmem:[%s224 + $0xd0] sm:$0xff] %v1833
      %1866 = vst [vmem:[%s224 + $0xd8] sm:$0xff] %v1834
      %1867 = vst [vmem:[%s224 + $0xe0] sm:$0xff] %v1835
      %1868 = vst [vmem:[%s224 + $0xe8] sm:$0xff] %v1836
      %1869 = vst [vmem:[%s224 + $0xf0] sm:$0xff] %v1837
      %1870 = vst [vmem:[%s224 + $0xf8] sm:$0xff] %v1838
      %s1871 = smul.u32 32, %s15
      %p1872 = scmp.lt.s32.totalorder %s1871, 63
      %s1873 = scalar_select %p1872, %s1871, 63
      %s1874 = smul.addr %s1873, 8
      %s1875 = scalar_lea.vmem %s4, %s1874
      // Predicated region
      $region37: #{gcn_forward.5} parent=35 // pred_check
        %p1876 = pneg %p127
      $region38: #{gcn_forward.5} parent=35 // pred_check_branch
        %1878 = sbr.rel (%p1876) target = $region40
      $region39: #{gcn_forward.5} parent=35 // pred_region
        %s1879 = smul.u32 32, %s15
      $region40: #{gcn_forward.5} parent=35 // pred_fallthru
        _
    $region36: #{gcn_forward.5} parent=5 // pred_fallthru
      _
    %p1880 = scmp.le.s32.totalorder 2, %s10
    // Predicated region
    $region41: #{gcn_forward.5} parent=5 // pred_check
      %p1881 = pneg %p1880
    $region42: #{gcn_forward.5} parent=5 // pred_check_branch
      %1883 = sbr.rel (%p1881) target = $region44
    $region43: #{gcn_forward.5} parent=5 // pred_region
      %s1884 = ssub.s32 %s10, 2
      // Predicated region
      $region45: #{gcn_forward.5} parent=43 // pred_check
        %p1885 = pneg %p133
      $region46: #{gcn_forward.5} parent=43 // pred_check_branch
        %1887 = sbr.rel (%p1885) target = $region48
      $region47: #{gcn_forward.5} parent=43 // pred_region
        %s1888 = smul.u32 32, %s16
        %p1889 = scmp.lt.s32.totalorder %s1888, 63
        %s1890 = scalar_select %p1889, %s1888, 63
        %s1891 = smul.addr %s1890, 8
        %s1892 = scalar_lea.vmem %s4, %s1891
      $region48: #{gcn_forward.5} parent=43 // pred_fallthru
        _
    $region44: #{gcn_forward.5} parent=5 // pred_fallthru
      _
  $region6: #{gcn_forward.5} parent=0 // loop_footer
    %s14 = sadd.s32 1, %s10
  $region7: #{gcn_forward.5} parent=0 // loop_footer_branch
    %9 = sbr.rel target = $region3
  $region8: #{gcn_forward.5} parent=0 // loop_exit
    _

// kernel: gcn_forward.4
$region0: #{gcn_forward.4}
  #allocation0 [shape = 'u32[]', space=smem, size = 0x4, offset = 0x4, fixed_abs, tag = 'smem constant byte address 0x4 - core index']
  #allocation1 [shape = 'u32[144,128]{1,0:T(1,128)}', space=vmem, size = 0x12000, scoped, tag = 'internal scratch']
  %s0 = inlined_call_operand.vmem [shape: bf16[512,512], index: 0, kind: input, shape index: {}]
  %s1 = inlined_call_operand.vmem [shape: bf16[512,128], index: 1, kind: input, shape index: {}]
  %s2 = inlined_call_operand.vmem [shape: f32[512,1], index: 2, kind: input, shape index: {}]
  %s3 = inlined_call_operand.vmem [shape: f32[1,128], index: 3, kind: input, shape index: {}]
  %s4 = inlined_call_operand.vmem [shape: bf16[128,128], index: 4, kind: input, shape index: {}]
  %s5 = inlined_call_operand.vmem [shape: bf16[512,128], index: 5, kind: output, shape index: {}]
  %s6 = sld [smem:[#allocation0]]
  $region53: #{gcn_forward.4} parent=0
    _
  %s8 = ssub.s32 1, %s6
  %s9 = scalar_select 0, %s8, %s6
  loop: start=0, step=1, limit=4
  $region2: #{gcn_forward.4} parent=0 // loop_pre_header
    _
  $region3: #{gcn_forward.4} parent=0 // loop_header
    %s11 = sphi 0, %s15
    %p12 = scmp.ge.s32.totalorder %s11, 4
    %s21 = sphi 0, %s23
    %s24 = sphi 0, %s21
    %s25 = sphi 0, %s24
    %s41 = sphi 0, %s25
    %s45 = sphi 0, %s45
    %s47 = sphi 0, %s45
    %s48 = sphi 0, %s47
    %s62 = sphi 0, %s48
    %s68 = sphi 0, %s70
    %s71 = sphi 0, %s68
    %s72 = sphi 0, %s71
    %s88 = sphi 0, %s72
    %s92 = sphi 0, %s92
    %s94 = sphi 0, %s92
    %s95 = sphi 0, %s94
    %s109 = sphi 0, %s95
    %s113 = sphi 0, %s113
    %s115 = sphi 0, %s113
    %s116 = sphi 0, %s115
    %s130 = sphi 0, %s116
    %s136 = sphi 0, %s138
    %s139 = sphi 0, %s136
    %s140 = sphi 0, %s139
    %s156 = sphi 0, %s140
  $region4: #{gcn_forward.4} parent=0 // loop_header_branch
    %14 = sbr.rel (%p12) target = $region8
  $region5: #{gcn_forward.4} parent=0 // loop_body
    %s16 = ssub.s32 %s11, 1
    %s17 = ssub.s32 %s11, 2
    %s18 = sadd.s32 %s11, 1
    %s19 = ssub.s32 %s11, %s18
    %p20 = scmp.eq.s32.totalorder %s19, 0
    %s22 = sadd.s32 %s21, 1
    %s23 = scalar_select %p20, %s21, %s22
    %p26 = pneg %p20
    %p27 = scmp.eq.s32.totalorder %s11, 1
    %p28 = por %p26, %p27
    %p29 = scmp.ne.s32.totalorder %s21, %s24
    %p30 = scmp.eq.s32.totalorder %s11, 0
    %p31 = por %p29, %p30
    %p32 = scmp.ne.s32.totalorder %s21, %s24
    %p33 = scmp.eq.s32.totalorder %s16, 1
    %p34 = por %p32, %p33
    %p35 = scmp.ne.s32.totalorder %s24, %s25
    %p36 = scmp.eq.s32.totalorder %s16, 0
    %p37 = por %p35, %p36
    %p38 = scmp.ne.s32.totalorder %s24, %s25
    %p39 = scmp.eq.s32.totalorder %s17, 1
    %p40 = por %p38, %p39
    %p42 = scmp.ne.s32.totalorder %s25, %s41
    %p43 = scmp.eq.s32.totalorder %s17, 0
    %p44 = por %p42, %p43
    %s46 = sadd.s32 %s45, 1
    %p49 = scmp.eq.s32.totalorder %s11, 1
    %p50 = scmp.ne.s32.totalorder %s45, %s47
    %p51 = scmp.eq.s32.totalorder %s11, 0
    %p52 = por %p50, %p51
    %p53 = scmp.ne.s32.totalorder %s45, %s47
    %p54 = scmp.eq.s32.totalorder %s16, 1
    %p55 = por %p53, %p54
    %p56 = scmp.ne.s32.totalorder %s47, %s48
    %p57 = scmp.eq.s32.totalorder %s16, 0
    %p58 = por %p56, %p57
    %p59 = scmp.ne.s32.totalorder %s47, %s48
    %p60 = scmp.eq.s32.totalorder %s17, 1
    %p61 = por %p59, %p60
    %p63 = scmp.ne.s32.totalorder %s48, %s62
    %p64 = scmp.eq.s32.totalorder %s17, 0
    %p65 = por %p63, %p64
    %s66 = ssub.s32 %s11, %s18
    %p67 = scmp.eq.s32.totalorder %s66, 0
    %s69 = sadd.s32 %s68, 1
    %s70 = scalar_select %p67, %s68, %s69
    %p73 = pneg %p67
    %p74 = scmp.eq.s32.totalorder %s11, 1
    %p75 = por %p73, %p74
    %p76 = scmp.ne.s32.totalorder %s68, %s71
    %p77 = scmp.eq.s32.totalorder %s11, 0
    %p78 = por %p76, %p77
    %p79 = scmp.ne.s32.totalorder %s68, %s71
    %p80 = scmp.eq.s32.totalorder %s16, 1
    %p81 = por %p79, %p80
    %p82 = scmp.ne.s32.totalorder %s71, %s72
    %p83 = scmp.eq.s32.totalorder %s16, 0
    %p84 = por %p82, %p83
    %p85 = scmp.ne.s32.totalorder %s71, %s72
    %p86 = scmp.eq.s32.totalorder %s17, 1
    %p87 = por %p85, %p86
    %p89 = scmp.ne.s32.totalorder %s72, %s88
    %p90 = scmp.eq.s32.totalorder %s17, 0
    %p91 = por %p89, %p90
    %s93 = sadd.s32 %s92, 1
    %p96 = scmp.eq.s32.totalorder %s11, 1
    %p97 = scmp.ne.s32.totalorder %s92, %s94
    %p98 = scmp.eq.s32.totalorder %s11, 0
    %p99 = por %p97, %p98
    %p100 = scmp.ne.s32.totalorder %s92, %s94
    %p101 = scmp.eq.s32.totalorder %s16, 1
    %p102 = por %p100, %p101
    %p103 = scmp.ne.s32.totalorder %s94, %s95
    %p104 = scmp.eq.s32.totalorder %s16, 0
    %p105 = por %p103, %p104
    %p106 = scmp.ne.s32.totalorder %s94, %s95
    %p107 = scmp.eq.s32.totalorder %s17, 1
    %p108 = por %p106, %p107
    %p110 = scmp.ne.s32.totalorder %s95, %s109
    %p111 = scmp.eq.s32.totalorder %s17, 0
    %p112 = por %p110, %p111
    %s114 = sadd.s32 %s113, 1
    %p117 = scmp.eq.s32.totalorder %s11, 1
    %p118 = scmp.ne.s32.totalorder %s113, %s115
    %p119 = scmp.eq.s32.totalorder %s11, 0
    %p120 = por %p118, %p119
    %p121 = scmp.ne.s32.totalorder %s113, %s115
    %p122 = scmp.eq.s32.totalorder %s16, 1
    %p123 = por %p121, %p122
    %p124 = scmp.ne.s32.totalorder %s115, %s116
    %p125 = scmp.eq.s32.totalorder %s16, 0
    %p126 = por %p124, %p125
    %p127 = scmp.ne.s32.totalorder %s115, %s116
    %p128 = scmp.eq.s32.totalorder %s17, 1
    %p129 = por %p127, %p128
    %p131 = scmp.ne.s32.totalorder %s116, %s130
    %p132 = scmp.eq.s32.totalorder %s17, 0
    %p133 = por %p131, %p132
    %s134 = ssub.s32 %s11, %s18
    %p135 = scmp.eq.s32.totalorder %s134, 0
    %s137 = sadd.s32 %s136, 1
    %s138 = scalar_select %p135, %s136, %s137
    %p141 = pneg %p135
    %p142 = scmp.eq.s32.totalorder %s11, 1
    %p143 = por %p141, %p142
    %p144 = scmp.ne.s32.totalorder %s136, %s139
    %p145 = scmp.eq.s32.totalorder %s11, 0
    %p146 = por %p144, %p145
    %p147 = scmp.ne.s32.totalorder %s136, %s139
    %p148 = scmp.eq.s32.totalorder %s16, 1
    %p149 = por %p147, %p148
    %p150 = scmp.ne.s32.totalorder %s139, %s140
    %p151 = scmp.eq.s32.totalorder %s16, 0
    %p152 = por %p150, %p151
    %p153 = scmp.ne.s32.totalorder %s139, %s140
    %p154 = scmp.eq.s32.totalorder %s17, 1
    %p155 = por %p153, %p154
    %p157 = scmp.ne.s32.totalorder %s140, %s156
    %p158 = scmp.eq.s32.totalorder %s17, 0
    %p159 = por %p157, %p158
    %p160 = scmp.le.s32.totalorder 1, %s11
    %p161 = scmp.lt.s32.totalorder %s11, 3
    %p162 = pnand %p160, %p161
    %p163 = pneg %p162
    // Predicated region
    $region9: #{gcn_forward.4} parent=5 // pred_check
      _
    $region10: #{gcn_forward.4} parent=5 // pred_check_branch
      %165 = sbr.rel (%p162) target = $region12
    $region11: #{gcn_forward.4} parent=5 // pred_region
      %s166 = ssub.s32 %s11, 1
      // Predicated region
      $region13: #{gcn_forward.4} parent=11 // pred_check
        %p167 = pneg %p58
      $region14: #{gcn_forward.4} parent=11 // pred_check_branch
        %169 = sbr.rel (%p167) target = $region16
      $region15: #{gcn_forward.4} parent=11 // pred_region
        _
      $region16: #{gcn_forward.4} parent=11 // pred_fallthru
        _
      // Predicated region
      $region17: #{gcn_forward.4} parent=11 // pred_check
        %p170 = pneg %p105
      $region18: #{gcn_forward.4} parent=11 // pred_check_branch
        %172 = sbr.rel (%p170) target = $region20
      $region19: #{gcn_forward.4} parent=11 // pred_region
        _
      $region20: #{gcn_forward.4} parent=11 // pred_fallthru
        _
      // Predicated region
      $region21: #{gcn_forward.4} parent=11 // pred_check
        %p173 = pneg %p126
      $region22: #{gcn_forward.4} parent=11 // pred_check_branch
        %175 = sbr.rel (%p173) target = $region24
      $region23: #{gcn_forward.4} parent=11 // pred_region
        _
      $region24: #{gcn_forward.4} parent=11 // pred_fallthru
        _
    $region12: #{gcn_forward.4} parent=5 // pred_fallthru
      _
    %p176 = scmp.lt.s32.totalorder %s11, 2
    // Predicated region
    $region25: #{gcn_forward.4} parent=5 // pred_check
      %p177 = pneg %p176
    $region26: #{gcn_forward.4} parent=5 // pred_check_branch
      %179 = sbr.rel (%p177) target = $region28
    $region27: #{gcn_forward.4} parent=5 // pred_region
      // Predicated region
      $region29: #{gcn_forward.4} parent=27 // pred_check
        %p180 = pneg %p31
      $region30: #{gcn_forward.4} parent=27 // pred_check_branch
        %182 = sbr.rel (%p180) target = $region32
      $region31: #{gcn_forward.4} parent=27 // pred_region
        %s183 = smul.u32 32, %s11
        %p184 = scmp.lt.s32.totalorder %s183, 63
        %s185 = scalar_select %p184, %s183, 63
        %s186 = smul.addr %s185, 4
        %s187 = smul.addr %s186, 4
        %s188 = scalar_lea.vmem %s0, %s187
        %s189 = smul.u32 32, %s11
      $region32: #{gcn_forward.4} parent=27 // pred_fallthru
        _
      // Predicated region
      $region33: #{gcn_forward.4} parent=27 // pred_check
        %p190 = pneg %p78
      $region34: #{gcn_forward.4} parent=27 // pred_check_branch
        %192 = sbr.rel (%p190) target = $region36
      $region35: #{gcn_forward.4} parent=27 // pred_region
        %s193 = smul.u32 32, %s11
        %p194 = scmp.lt.s32.totalorder %s193, 63
        %s195 = scalar_select %p194, %s193, 63
        %s196 = smul.addr %s195, 8
        %s197 = scalar_lea.vmem %s2, %s196
        %s198 = smul.u32 32, %s11
      $region36: #{gcn_forward.4} parent=27 // pred_fallthru
        _
    $region28: #{gcn_forward.4} parent=5 // pred_fallthru
      _
    %p199 = scmp.le.s32.totalorder 1, %s11
    %p200 = scmp.lt.s32.totalorder %s11, 3
    %p201 = pnand %p199, %p200
    %p202 = pneg %p201
    // Predicated region
    $region37: #{gcn_forward.4} parent=5 // pred_check
      _
    $region38: #{gcn_forward.4} parent=5 // pred_check_branch
      %204 = sbr.rel (%p201) target = $region40
    $region39: #{gcn_forward.4} parent=5 // pred_region
      %s205 = ssub.s32 %s11, 1
      %s206 = smul.u32 32, %s16
      %p207 = scmp.lt.s32.totalorder %s206, 63
      %s208 = scalar_select %p207, %s206, 63
      %s209 = smul.addr %s208, 4
      %s210 = smul.addr %s209, 4
      %s211 = scalar_lea.vmem %s0, %s210
      %p212 = pneg %p37
      %p213 = pneg %p34
      %p214 = pneg %p58
      %p215 = pneg %p55
      %s216 = smul.u32 32, %s16
      %p217 = scmp.lt.s32.totalorder %s216, 63
      %s218 = scalar_select %p217, %s216, 63
      %s219 = smul.addr %s218, 8
      %s220 = scalar_lea.vmem %s2, %s219
      %p221 = pneg %p84
      %p222 = pneg %p81
      %p223 = pneg %p105
      %p224 = pneg %p102
      %p225 = pneg %p126
      %p226 = pneg %p123
      %p227 = pneg %p152
      %p228 = pneg %p149
      %s229 = smul.u32 32, %s16
      %p230 = scmp.lt.s32.totalorder %s229, 63
      %s231 = scalar_select %p230, %s229, 63
      %s232 = smul.addr %s231, 4
      %s233 = scalar_lea.vmem %s5, %s232
      %s234 = smul.u32 32, %s16
      %p235 = scmp.lt.s32.totalorder %s234, 63
      %s236 = scalar_select %p235, %s234, 63
      %s237 = smul.addr %s236, 4
      %s238 = smul.addr %s237, 4
      %s239 = scalar_lea.vmem %s0, %s238
      %s240 = smul.u32 32, %s16
      %s241 = smul.u32 32, %s16
      %p242 = scmp.lt.s32.totalorder %s241, 63
      %s243 = scalar_select %p242, %s241, 63
      %s244 = smul.addr %s243, 8
      %s245 = scalar_lea.vmem %s2, %s244
      %s246 = smul.u32 32, %s16
      %s247 = smul.u32 32, %s16
      %p248 = scmp.lt.s32.totalorder %s247, 63
      %s249 = scalar_select %p248, %s247, 63
      %s250 = smul.addr %s249, 4
      %s251 = scalar_lea.vmem %s5, %s250
      %s252 = smul.u32 32, %s16
      %v254 = vld [vmem:[%s239] sm:$0xff]
      %v255 = vld [vmem:[%s239 + $0x8] sm:$0xff]
      %v256 = vld [vmem:[%s239 + $0x10] sm:$0xff]
      %v257 = vld [vmem:[%s239 + $0x18] sm:$0xff]
      %v258 = vld [vmem:[%s239 + $0x20] sm:$0xff]
      %v259 = vld [vmem:[%s239 + $0x28] sm:$0xff]
      %v260 = vld [vmem:[%s239 + $0x30] sm:$0xff]
      %v261 = vld [vmem:[%s239 + $0x38] sm:$0xff]
      %v262 = vld [vmem:[%s239 + $0x40] sm:$0xff]
      %v263 = vld [vmem:[%s239 + $0x48] sm:$0xff]
      %v264 = vld [vmem:[%s239 + $0x50] sm:$0xff]
      %v265 = vld [vmem:[%s239 + $0x58] sm:$0xff]
      %v266 = vld [vmem:[%s239 + $0x60] sm:$0xff]
      %v267 = vld [vmem:[%s239 + $0x68] sm:$0xff]
      %v268 = vld [vmem:[%s239 + $0x70] sm:$0xff]
      %v269 = vld [vmem:[%s239 + $0x78] sm:$0xff]
      %v270 = vld [vmem:[%s239 + $0x80] sm:$0xff]
      %v271 = vld [vmem:[%s239 + $0x88] sm:$0xff]
      %v272 = vld [vmem:[%s239 + $0x90] sm:$0xff]
      %v273 = vld [vmem:[%s239 + $0x98] sm:$0xff]
      %v274 = vld [vmem:[%s239 + $0xa0] sm:$0xff]
      %v275 = vld [vmem:[%s239 + $0xa8] sm:$0xff]
      %v276 = vld [vmem:[%s239 + $0xb0] sm:$0xff]
      %v277 = vld [vmem:[%s239 + $0xb8] sm:$0xff]
      %v278 = vld [vmem:[%s239 + $0xc0] sm:$0xff]
      %v279 = vld [vmem:[%s239 + $0xc8] sm:$0xff]
      %v280 = vld [vmem:[%s239 + $0xd0] sm:$0xff]
      %v281 = vld [vmem:[%s239 + $0xd8] sm:$0xff]
      %v282 = vld [vmem:[%s239 + $0xe0] sm:$0xff]
      %v283 = vld [vmem:[%s239 + $0xe8] sm:$0xff]
      %v284 = vld [vmem:[%s239 + $0xf0] sm:$0xff]
      %v285 = vld [vmem:[%s239 + $0xf8] sm:$0xff]
      %v286 = vld [vmem:[%s239 + $0x100] sm:$0xff]
      %v287 = vld [vmem:[%s239 + $0x108] sm:$0xff]
      %v288 = vld [vmem:[%s239 + $0x110] sm:$0xff]
      %v289 = vld [vmem:[%s239 + $0x118] sm:$0xff]
      %v290 = vld [vmem:[%s239 + $0x120] sm:$0xff]
      %v291 = vld [vmem:[%s239 + $0x128] sm:$0xff]
      %v292 = vld [vmem:[%s239 + $0x130] sm:$0xff]
      %v293 = vld [vmem:[%s239 + $0x138] sm:$0xff]
      %v294 = vld [vmem:[%s239 + $0x140] sm:$0xff]
      %v295 = vld [vmem:[%s239 + $0x148] sm:$0xff]
      %v296 = vld [vmem:[%s239 + $0x150] sm:$0xff]
      %v297 = vld [vmem:[%s239 + $0x158] sm:$0xff]
      %v298 = vld [vmem:[%s239 + $0x160] sm:$0xff]
      %v299 = vld [vmem:[%s239 + $0x168] sm:$0xff]
      %v300 = vld [vmem:[%s239 + $0x170] sm:$0xff]
      %v301 = vld [vmem:[%s239 + $0x178] sm:$0xff]
      %v302 = vld [vmem:[%s239 + $0x180] sm:$0xff]
      %v303 = vld [vmem:[%s239 + $0x188] sm:$0xff]
      %v304 = vld [vmem:[%s239 + $0x190] sm:$0xff]
      %v305 = vld [vmem:[%s239 + $0x198] sm:$0xff]
      %v306 = vld [vmem:[%s239 + $0x1a0] sm:$0xff]
      %v307 = vld [vmem:[%s239 + $0x1a8] sm:$0xff]
      %v308 = vld [vmem:[%s239 + $0x1b0] sm:$0xff]
      %v309 = vld [vmem:[%s239 + $0x1b8] sm:$0xff]
      %v310 = vld [vmem:[%s239 + $0x1c0] sm:$0xff]
      %v311 = vld [vmem:[%s239 + $0x1c8] sm:$0xff]
      %v312 = vld [vmem:[%s239 + $0x1d0] sm:$0xff]
      %v313 = vld [vmem:[%s239 + $0x1d8] sm:$0xff]
      %v314 = vld [vmem:[%s239 + $0x1e0] sm:$0xff]
      %v315 = vld [vmem:[%s239 + $0x1e8] sm:$0xff]
      %v316 = vld [vmem:[%s239 + $0x1f0] sm:$0xff]
      %v317 = vld [vmem:[%s239 + $0x1f8] sm:$0xff]
      %v318 = vld [vmem:[%s1] sm:$0xf]
      %v319 = vld [vmem:[%s1 + $0x4] sm:$0xf]
      %v320 = vld [vmem:[%s1 + $0x8] sm:$0xf]
      %v321 = vld [vmem:[%s1 + $0xc] sm:$0xf]
      %v322 = vld [vmem:[%s1 + $0x10] sm:$0xf]
      %v323 = vld [vmem:[%s1 + $0x14] sm:$0xf]
      %v324 = vld [vmem:[%s1 + $0x18] sm:$0xf]
      %v325 = vld [vmem:[%s1 + $0x1c] sm:$0xf]
      %v326 = vld [vmem:[%s1 + $0x20] sm:$0xf]
      %v327 = vld [vmem:[%s1 + $0x24] sm:$0xf]
      %v328 = vld [vmem:[%s1 + $0x28] sm:$0xf]
      %v329 = vld [vmem:[%s1 + $0x2c] sm:$0xf]
      %v330 = vld [vmem:[%s1 + $0x30] sm:$0xf]
      %v331 = vld [vmem:[%s1 + $0x34] sm:$0xf]
      %v332 = vld [vmem:[%s1 + $0x38] sm:$0xf]
      %v333 = vld [vmem:[%s1 + $0x3c] sm:$0xf]
      %v334 = vld [vmem:[%s1 + $0x40] sm:$0xf]
      %v335 = vld [vmem:[%s1 + $0x44] sm:$0xf]
      %v336 = vld [vmem:[%s1 + $0x48] sm:$0xf]
      %v337 = vld [vmem:[%s1 + $0x4c] sm:$0xf]
      %v338 = vld [vmem:[%s1 + $0x50] sm:$0xf]
      %v339 = vld [vmem:[%s1 + $0x54] sm:$0xf]
      %v340 = vld [vmem:[%s1 + $0x58] sm:$0xf]
      %v341 = vld [vmem:[%s1 + $0x5c] sm:$0xf]
      %v342 = vld [vmem:[%s1 + $0x60] sm:$0xf]
      %v343 = vld [vmem:[%s1 + $0x64] sm:$0xf]
      %v344 = vld [vmem:[%s1 + $0x68] sm:$0xf]
      %v345 = vld [vmem:[%s1 + $0x6c] sm:$0xf]
      %v346 = vld [vmem:[%s1 + $0x70] sm:$0xf]
      %v347 = vld [vmem:[%s1 + $0x74] sm:$0xf]
      %v348 = vld [vmem:[%s1 + $0x78] sm:$0xf]
      %v349 = vld [vmem:[%s1 + $0x7c] sm:$0xf]
      %v350 = vld [vmem:[%s1 + $0x80] sm:$0xf]
      %v351 = vld [vmem:[%s1 + $0x84] sm:$0xf]
      %v352 = vld [vmem:[%s1 + $0x88] sm:$0xf]
      %v353 = vld [vmem:[%s1 + $0x8c] sm:$0xf]
      %v354 = vld [vmem:[%s1 + $0x90] sm:$0xf]
      %v355 = vld [vmem:[%s1 + $0x94] sm:$0xf]
      %v356 = vld [vmem:[%s1 + $0x98] sm:$0xf]
      %v357 = vld [vmem:[%s1 + $0x9c] sm:$0xf]
      %v358 = vld [vmem:[%s1 + $0xa0] sm:$0xf]
      %v359 = vld [vmem:[%s1 + $0xa4] sm:$0xf]
      %v360 = vld [vmem:[%s1 + $0xa8] sm:$0xf]
      %v361 = vld [vmem:[%s1 + $0xac] sm:$0xf]
      %v362 = vld [vmem:[%s1 + $0xb0] sm:$0xf]
      %v363 = vld [vmem:[%s1 + $0xb4] sm:$0xf]
      %v364 = vld [vmem:[%s1 + $0xb8] sm:$0xf]
      %v365 = vld [vmem:[%s1 + $0xbc] sm:$0xf]
      %v366 = vld [vmem:[%s1 + $0xc0] sm:$0xf]
      %v367 = vld [vmem:[%s1 + $0xc4] sm:$0xf]
      %v368 = vld [vmem:[%s1 + $0xc8] sm:$0xf]
      %v369 = vld [vmem:[%s1 + $0xcc] sm:$0xf]
      %v370 = vld [vmem:[%s1 + $0xd0] sm:$0xf]
      %v371 = vld [vmem:[%s1 + $0xd4] sm:$0xf]
      %v372 = vld [vmem:[%s1 + $0xd8] sm:$0xf]
      %v373 = vld [vmem:[%s1 + $0xdc] sm:$0xf]
      %v374 = vld [vmem:[%s1 + $0xe0] sm:$0xf]
      %v375 = vld [vmem:[%s1 + $0xe4] sm:$0xf]
      %v376 = vld [vmem:[%s1 + $0xe8] sm:$0xf]
      %v377 = vld [vmem:[%s1 + $0xec] sm:$0xf]
      %v378 = vld [vmem:[%s1 + $0xf0] sm:$0xf]
      %v379 = vld [vmem:[%s1 + $0xf4] sm:$0xf]
      %v380 = vld [vmem:[%s1 + $0xf8] sm:$0xf]
      %v381 = vld [vmem:[%s1 + $0xfc] sm:$0xf]
      %v446 = vunpack.c.l.b16 %v254
      %v447 = vunpack.c.h.b16 %v254
      %v448 = vunpack.c.l.b16 %v255
      %v449 = vunpack.c.h.b16 %v255
      %v450 = vunpack.c.l.b16 %v256
      %v451 = vunpack.c.h.b16 %v256
      %v452 = vunpack.c.l.b16 %v257
      %v453 = vunpack.c.h.b16 %v257
      %v454 = vunpack.c.l.b16 %v258
      %v455 = vunpack.c.h.b16 %v258
      %v456 = vunpack.c.l.b16 %v259
      %v457 = vunpack.c.h.b16 %v259
      %v458 = vunpack.c.l.b16 %v260
      %v459 = vunpack.c.h.b16 %v260
      %v460 = vunpack.c.l.b16 %v261
      %v461 = vunpack.c.h.b16 %v261
      %v462 = vunpack.c.l.b16 %v262
      %v463 = vunpack.c.h.b16 %v262
      %v464 = vunpack.c.l.b16 %v263
      %v465 = vunpack.c.h.b16 %v263
      %v466 = vunpack.c.l.b16 %v264
      %v467 = vunpack.c.h.b16 %v264
      %v468 = vunpack.c.l.b16 %v265
      %v469 = vunpack.c.h.b16 %v265
      %v470 = vunpack.c.l.b16 %v266
      %v471 = vunpack.c.h.b16 %v266
      %v472 = vunpack.c.l.b16 %v267
      %v473 = vunpack.c.h.b16 %v267
      %v474 = vunpack.c.l.b16 %v268
      %v475 = vunpack.c.h.b16 %v268
      %v476 = vunpack.c.l.b16 %v269
      %v477 = vunpack.c.h.b16 %v269
      %v478 = vunpack.c.l.b16 %v270
      %v479 = vunpack.c.h.b16 %v270
      %v480 = vunpack.c.l.b16 %v271
      %v481 = vunpack.c.h.b16 %v271
      %v482 = vunpack.c.l.b16 %v272
      %v483 = vunpack.c.h.b16 %v272
      %v484 = vunpack.c.l.b16 %v273
      %v485 = vunpack.c.h.b16 %v273
      %v486 = vunpack.c.l.b16 %v274
      %v487 = vunpack.c.h.b16 %v274
      %v488 = vunpack.c.l.b16 %v275
      %v489 = vunpack.c.h.b16 %v275
      %v490 = vunpack.c.l.b16 %v276
      %v491 = vunpack.c.h.b16 %v276
      %v492 = vunpack.c.l.b16 %v277
      %v493 = vunpack.c.h.b16 %v277
      %v494 = vunpack.c.l.b16 %v278
      %v495 = vunpack.c.h.b16 %v278
      %v496 = vunpack.c.l.b16 %v279
      %v497 = vunpack.c.h.b16 %v279
      %v498 = vunpack.c.l.b16 %v280
      %v499 = vunpack.c.h.b16 %v280
      %v500 = vunpack.c.l.b16 %v281
      %v501 = vunpack.c.h.b16 %v281
      %v502 = vunpack.c.l.b16 %v282
      %v503 = vunpack.c.h.b16 %v282
      %v504 = vunpack.c.l.b16 %v283
      %v505 = vunpack.c.h.b16 %v283
      %v506 = vunpack.c.l.b16 %v284
      %v507 = vunpack.c.h.b16 %v284
      %v508 = vunpack.c.l.b16 %v285
      %v509 = vunpack.c.h.b16 %v285
      %v510 = vunpack.c.l.b16 %v286
      %v511 = vunpack.c.h.b16 %v286
      %v512 = vunpack.c.l.b16 %v287
      %v513 = vunpack.c.h.b16 %v287
      %v514 = vunpack.c.l.b16 %v288
      %v515 = vunpack.c.h.b16 %v288
      %v516 = vunpack.c.l.b16 %v289
      %v517 = vunpack.c.h.b16 %v289
      %v518 = vunpack.c.l.b16 %v290
      %v519 = vunpack.c.h.b16 %v290
      %v520 = vunpack.c.l.b16 %v291
      %v521 = vunpack.c.h.b16 %v291
      %v522 = vunpack.c.l.b16 %v292
      %v523 = vunpack.c.h.b16 %v292
      %v524 = vunpack.c.l.b16 %v293
      %v525 = vunpack.c.h.b16 %v293
      %v526 = vunpack.c.l.b16 %v294
      %v527 = vunpack.c.h.b16 %v294
      %v528 = vunpack.c.l.b16 %v295
      %v529 = vunpack.c.h.b16 %v295
      %v530 = vunpack.c.l.b16 %v296
      %v531 = vunpack.c.h.b16 %v296
      %v532 = vunpack.c.l.b16 %v297
      %v533 = vunpack.c.h.b16 %v297
      %v534 = vunpack.c.l.b16 %v298
      %v535 = vunpack.c.h.b16 %v298
      %v536 = vunpack.c.l.b16 %v299
      %v537 = vunpack.c.h.b16 %v299
      %v538 = vunpack.c.l.b16 %v300
      %v539 = vunpack.c.h.b16 %v300
      %v540 = vunpack.c.l.b16 %v301
      %v541 = vunpack.c.h.b16 %v301
      %v542 = vunpack.c.l.b16 %v302
      %v543 = vunpack.c.h.b16 %v302
      %v544 = vunpack.c.l.b16 %v303
      %v545 = vunpack.c.h.b16 %v303
      %v546 = vunpack.c.l.b16 %v304
      %v547 = vunpack.c.h.b16 %v304
      %v548 = vunpack.c.l.b16 %v305
      %v549 = vunpack.c.h.b16 %v305
      %v550 = vunpack.c.l.b16 %v306
      %v551 = vunpack.c.h.b16 %v306
      %v552 = vunpack.c.l.b16 %v307
      %v553 = vunpack.c.h.b16 %v307
      %v554 = vunpack.c.l.b16 %v308
      %v555 = vunpack.c.h.b16 %v308
      %v556 = vunpack.c.l.b16 %v309
      %v557 = vunpack.c.h.b16 %v309
      %v558 = vunpack.c.l.b16 %v310
      %v559 = vunpack.c.h.b16 %v310
      %v560 = vunpack.c.l.b16 %v311
      %v561 = vunpack.c.h.b16 %v311
      %v562 = vunpack.c.l.b16 %v312
      %v563 = vunpack.c.h.b16 %v312
      %v564 = vunpack.c.l.b16 %v313
      %v565 = vunpack.c.h.b16 %v313
      %v566 = vunpack.c.l.b16 %v314
      %v567 = vunpack.c.h.b16 %v314
      %v568 = vunpack.c.l.b16 %v315
      %v569 = vunpack.c.h.b16 %v315
      %v570 = vunpack.c.l.b16 %v316
      %v571 = vunpack.c.h.b16 %v316
      %v572 = vunpack.c.l.b16 %v317
      %v573 = vunpack.c.h.b16 %v317
      %v574 = vpack.c.b16 %v450, %v446
      %v575 = vpack.c.b16 %v451, %v447
      %v576 = vpack.c.b16 %v452, %v448
      %v577 = vpack.c.b16 %v453, %v449
      %v578 = vpack.c.b16 %v458, %v454
      %v579 = vpack.c.b16 %v459, %v455
      %v580 = vpack.c.b16 %v460, %v456
      %v581 = vpack.c.b16 %v461, %v457
      %v582 = vpack.c.b16 %v466, %v462
      %v583 = vpack.c.b16 %v467, %v463
      %v584 = vpack.c.b16 %v468, %v464
      %v585 = vpack.c.b16 %v469, %v465
      %v586 = vpack.c.b16 %v474, %v470
      %v587 = vpack.c.b16 %v475, %v471
      %v588 = vpack.c.b16 %v476, %v472
      %v589 = vpack.c.b16 %v477, %v473
      %v590 = vpack.c.b16 %v482, %v478
      %v591 = vpack.c.b16 %v483, %v479
      %v592 = vpack.c.b16 %v484, %v480
      %v593 = vpack.c.b16 %v485, %v481
      %v594 = vpack.c.b16 %v490, %v486
      %v595 = vpack.c.b16 %v491, %v487
      %v596 = vpack.c.b16 %v492, %v488
      %v597 = vpack.c.b16 %v493, %v489
      %v598 = vpack.c.b16 %v498, %v494
      %v599 = vpack.c.b16 %v499, %v495
      %v600 = vpack.c.b16 %v500, %v496
      %v601 = vpack.c.b16 %v501, %v497
      %v602 = vpack.c.b16 %v506, %v502
      %v603 = vpack.c.b16 %v507, %v503
      %v604 = vpack.c.b16 %v508, %v504
      %v605 = vpack.c.b16 %v509, %v505
      %v606 = vpack.c.b16 %v514, %v510
      %v607 = vpack.c.b16 %v515, %v511
      %v608 = vpack.c.b16 %v516, %v512
      %v609 = vpack.c.b16 %v517, %v513
      %v610 = vpack.c.b16 %v522, %v518
      %v611 = vpack.c.b16 %v523, %v519
      %v612 = vpack.c.b16 %v524, %v520
      %v613 = vpack.c.b16 %v525, %v521
      %v614 = vpack.c.b16 %v530, %v526
      %v615 = vpack.c.b16 %v531, %v527
      %v616 = vpack.c.b16 %v532, %v528
      %v617 = vpack.c.b16 %v533, %v529
      %v618 = vpack.c.b16 %v538, %v534
      %v619 = vpack.c.b16 %v539, %v535
      %v620 = vpack.c.b16 %v540, %v536
      %v621 = vpack.c.b16 %v541, %v537
      %v622 = vpack.c.b16 %v546, %v542
      %v623 = vpack.c.b16 %v547, %v543
      %v624 = vpack.c.b16 %v548, %v544
      %v625 = vpack.c.b16 %v549, %v545
      %v626 = vpack.c.b16 %v554, %v550
      %v627 = vpack.c.b16 %v555, %v551
      %v628 = vpack.c.b16 %v556, %v552
      %v629 = vpack.c.b16 %v557, %v553
      %v630 = vpack.c.b16 %v562, %v558
      %v631 = vpack.c.b16 %v563, %v559
      %v632 = vpack.c.b16 %v564, %v560
      %v633 = vpack.c.b16 %v565, %v561
      %v634 = vpack.c.b16 %v570, %v566
      %v635 = vpack.c.b16 %v571, %v567
      %v636 = vpack.c.b16 %v572, %v568
      %v637 = vpack.c.b16 %v573, %v569
      %v766 = vunpack.c.l.b16 %v318
      %v767 = vunpack.c.l.b16 %v319
      %v768 = vunpack.c.l.b16 %v320
      %v769 = vunpack.c.l.b16 %v321
      %v770 = vunpack.c.l.b16 %v322
      %v771 = vunpack.c.l.b16 %v323
      %v772 = vunpack.c.l.b16 %v324
      %v773 = vunpack.c.l.b16 %v325
      %v774 = vunpack.c.l.b16 %v326
      %v775 = vunpack.c.l.b16 %v327
      %v776 = vunpack.c.l.b16 %v328
      %v777 = vunpack.c.l.b16 %v329
      %v778 = vunpack.c.l.b16 %v330
      %v779 = vunpack.c.l.b16 %v331
      %v780 = vunpack.c.l.b16 %v332
      %v781 = vunpack.c.l.b16 %v333
      %v782 = vunpack.c.l.b16 %v334
      %v783 = vunpack.c.l.b16 %v335
      %v784 = vunpack.c.l.b16 %v336
      %v785 = vunpack.c.l.b16 %v337
      %v786 = vunpack.c.l.b16 %v338
      %v787 = vunpack.c.l.b16 %v339
      %v788 = vunpack.c.l.b16 %v340
      %v789 = vunpack.c.l.b16 %v341
      %v790 = vunpack.c.l.b16 %v342
      %v791 = vunpack.c.l.b16 %v343
      %v792 = vunpack.c.l.b16 %v344
      %v793 = vunpack.c.l.b16 %v345
      %v794 = vunpack.c.l.b16 %v346
      %v795 = vunpack.c.l.b16 %v347
      %v796 = vunpack.c.l.b16 %v348
      %v797 = vunpack.c.l.b16 %v349
      %v798 = vunpack.c.l.b16 %v350
      %v799 = vunpack.c.l.b16 %v351
      %v800 = vunpack.c.l.b16 %v352
      %v801 = vunpack.c.l.b16 %v353
      %v802 = vunpack.c.l.b16 %v354
      %v803 = vunpack.c.l.b16 %v355
      %v804 = vunpack.c.l.b16 %v356
      %v805 = vunpack.c.l.b16 %v357
      %v806 = vunpack.c.l.b16 %v358
      %v807 = vunpack.c.l.b16 %v359
      %v808 = vunpack.c.l.b16 %v360
      %v809 = vunpack.c.l.b16 %v361
      %v810 = vunpack.c.l.b16 %v362
      %v811 = vunpack.c.l.b16 %v363
      %v812 = vunpack.c.l.b16 %v364
      %v813 = vunpack.c.l.b16 %v365
      %v814 = vunpack.c.l.b16 %v366
      %v815 = vunpack.c.l.b16 %v367
      %v816 = vunpack.c.l.b16 %v368
      %v817 = vunpack.c.l.b16 %v369
      %v818 = vunpack.c.l.b16 %v370
      %v819 = vunpack.c.l.b16 %v371
      %v820 = vunpack.c.l.b16 %v372
      %v821 = vunpack.c.l.b16 %v373
      %v822 = vunpack.c.l.b16 %v374
      %v823 = vunpack.c.l.b16 %v375
      %v824 = vunpack.c.l.b16 %v376
      %v825 = vunpack.c.l.b16 %v377
      %v826 = vunpack.c.l.b16 %v378
      %v827 = vunpack.c.l.b16 %v379
      %v828 = vunpack.c.l.b16 %v380
      %v829 = vunpack.c.l.b16 %v381
      %v830 = vpack.c.b16 %v767, %v766
      %v831 = vpack.c.b16 %v769, %v768
      %v832 = vpack.c.b16 %v771, %v770
      %v833 = vpack.c.b16 %v773, %v772
      %v834 = vpack.c.b16 %v775, %v774
      %v835 = vpack.c.b16 %v777, %v776
      %v836 = vpack.c.b16 %v779, %v778
      %v837 = vpack.c.b16 %v781, %v780
      %v838 = vpack.c.b16 %v783, %v782
      %v839 = vpack.c.b16 %v785, %v784
      %v840 = vpack.c.b16 %v787, %v786
      %v841 = vpack.c.b16 %v789, %v788
      %v842 = vpack.c.b16 %v791, %v790
      %v843 = vpack.c.b16 %v793, %v792
      %v844 = vpack.c.b16 %v795, %v794
      %v845 = vpack.c.b16 %v797, %v796
      %v846 = vpack.c.b16 %v799, %v798
      %v847 = vpack.c.b16 %v801, %v800
      %v848 = vpack.c.b16 %v803, %v802
      %v849 = vpack.c.b16 %v805, %v804
      %v850 = vpack.c.b16 %v807, %v806
      %v851 = vpack.c.b16 %v809, %v808
      %v852 = vpack.c.b16 %v811, %v810
      %v853 = vpack.c.b16 %v813, %v812
      %v854 = vpack.c.b16 %v815, %v814
      %v855 = vpack.c.b16 %v817, %v816
      %v856 = vpack.c.b16 %v819, %v818
      %v857 = vpack.c.b16 %v821, %v820
      %v858 = vpack.c.b16 %v823, %v822
      %v859 = vpack.c.b16 %v825, %v824
      %v860 = vpack.c.b16 %v827, %v826
      %v861 = vpack.c.b16 %v829, %v828
      %894 = vmatprep.subr.bf16.mxu0 0
      %895 = vmatpush1.bf16.msra.mxu0 %v837
      %896 = vmatprep.subr.bf16.mxu0 0
      %897 = vmatpush1.bf16.msra.mxu0 %v836
      %898 = vmatprep.subr.bf16.mxu0 0
      %899 = vmatpush1.bf16.msra.mxu0 %v835
      %900 = vmatprep.subr.bf16.mxu0 0
      %901 = vmatpush1.bf16.msra.mxu0 %v834
      %902 = vmatprep.subr.bf16.mxu0 0
      %903 = vmatpush1.bf16.msra.mxu0 %v833
      %904 = vmatprep.subr.bf16.mxu0 0
      %905 = vmatpush1.bf16.msra.mxu0 %v832
      %906 = vmatprep.subr.bf16.mxu0 0
      %907 = vmatpush1.bf16.msra.mxu0 %v831
      %908 = vmatprep.subr.bf16.mxu0 0
      %909 = vmatpush1.bf16.msra.mxu0 %v830
      %910 = vmatprep.subr.bf16.mxu0 0
      %911 = vmatpush2.bf16.msra.mxu0 %v845
      %912 = vmatprep.subr.bf16.mxu0 0
      %913 = vmatpush2.bf16.msra.mxu0 %v844
      %914 = vmatprep.subr.bf16.mxu0 0
      %915 = vmatpush2.bf16.msra.mxu0 %v843
      %916 = vmatprep.subr.bf16.mxu0 0
      %917 = vmatpush2.bf16.msra.mxu0 %v842
      %918 = vmatprep.subr.bf16.mxu0 0
      %919 = vmatpush2.bf16.msra.mxu0 %v841
      %920 = vmatprep.subr.bf16.mxu0 0
      %921 = vmatpush2.bf16.msra.mxu0 %v840
      %922 = vmatprep.subr.bf16.mxu0 0
      %923 = vmatpush2.bf16.msra.mxu0 %v839
      %924 = vmatprep.subr.bf16.mxu0 0
      %925 = vmatpush2.bf16.msra.mxu0 %v838
      %926 = vmatprep.mubr.bf16.mxu0 %v575
      %927 = vmatmul.mubr.bf16.gmra.mxu0 %v574
      %v928 = vpop.f32.mrf.mxu0
      %v929 = vadd.f32 0.0, %v928
      %v930 = vpop.f32.mrf.mxu0
      %v931 = vpop.f32.mrf.mxu0
      %v932 = vadd.f32 0.0, %v931
      %v933 = vpop.f32.mrf.mxu0
      %934 = vmatprep.mubr.bf16.mxu0 %v579
      %935 = vmatmul.mubr.bf16.gmra.mxu0 %v578
      %v936 = vpop.f32.mrf.mxu0
      %v937 = vadd.f32 0.0, %v936
      %v938 = vpop.f32.mrf.mxu0
      %v939 = vpop.f32.mrf.mxu0
      %v940 = vadd.f32 0.0, %v939
      %v941 = vpop.f32.mrf.mxu0
      %942 = vmatprep.mubr.bf16.mxu0 %v583
      %943 = vmatmul.mubr.bf16.gmra.mxu0 %v582
      %v944 = vpop.f32.mrf.mxu0
      %v945 = vadd.f32 0.0, %v944
      %v946 = vpop.f32.mrf.mxu0
      %v947 = vpop.f32.mrf.mxu0
      %v948 = vadd.f32 0.0, %v947
      %v949 = vpop.f32.mrf.mxu0
      %950 = vmatprep.mubr.bf16.mxu0 %v587
      %951 = vmatmul.mubr.bf16.gmra.mxu0 %v586
      %v952 = vpop.f32.mrf.mxu0
      %v953 = vadd.f32 0.0, %v952
      %v954 = vpop.f32.mrf.mxu0
      %v955 = vpop.f32.mrf.mxu0
      %v956 = vadd.f32 0.0, %v955
      %v957 = vpop.f32.mrf.mxu0
      %958 = vmatprep.mubr.bf16.mxu0 %v591
      %959 = vmatmul.mubr.bf16.gmra.mxu0 %v590
      %v960 = vpop.f32.mrf.mxu0
      %v961 = vadd.f32 0.0, %v960
      %v962 = vpop.f32.mrf.mxu0
      %v963 = vpop.f32.mrf.mxu0
      %v964 = vadd.f32 0.0, %v963
      %v965 = vpop.f32.mrf.mxu0
      %966 = vmatprep.mubr.bf16.mxu0 %v595
      %967 = vmatmul.mubr.bf16.gmra.mxu0 %v594
      %v968 = vpop.f32.mrf.mxu0
      %v969 = vadd.f32 0.0, %v968
      %v970 = vpop.f32.mrf.mxu0
      %v971 = vpop.f32.mrf.mxu0
      %v972 = vadd.f32 0.0, %v971
      %v973 = vpop.f32.mrf.mxu0
      %974 = vmatprep.mubr.bf16.mxu0 %v599
      %975 = vmatmul.mubr.bf16.gmra.mxu0 %v598
      %v976 = vpop.f32.mrf.mxu0
      %v977 = vadd.f32 0.0, %v976
      %v978 = vpop.f32.mrf.mxu0
      %v979 = vpop.f32.mrf.mxu0
      %v980 = vadd.f32 0.0, %v979
      %v981 = vpop.f32.mrf.mxu0
      %982 = vmatprep.mubr.bf16.mxu0 %v603
      %983 = vmatmul.mubr.bf16.gmra.mxu0 %v602
      %v984 = vpop.f32.mrf.mxu0
      %v985 = vadd.f32 0.0, %v984
      %v986 = vpop.f32.mrf.mxu0
      %v987 = vpop.f32.mrf.mxu0
      %v988 = vadd.f32 0.0, %v987
      %v989 = vpop.f32.mrf.mxu0
      %990 = vmatprep.mubr.bf16.mxu0 %v607
      %991 = vmatmul.mubr.bf16.gmra.mxu0 %v606
      %v992 = vpop.f32.mrf.mxu0
      %v993 = vadd.f32 0.0, %v992
      %v994 = vpop.f32.mrf.mxu0
      %v995 = vpop.f32.mrf.mxu0
      %v996 = vadd.f32 0.0, %v995
      %v997 = vpop.f32.mrf.mxu0
      %998 = vmatprep.mubr.bf16.mxu0 %v611
      %999 = vmatmul.mubr.bf16.gmra.mxu0 %v610
      %v1000 = vpop.f32.mrf.mxu0
      %v1001 = vadd.f32 0.0, %v1000
      %v1002 = vpop.f32.mrf.mxu0
      %v1003 = vpop.f32.mrf.mxu0
      %v1004 = vadd.f32 0.0, %v1003
      %v1005 = vpop.f32.mrf.mxu0
      %1006 = vmatprep.mubr.bf16.mxu0 %v615
      %1007 = vmatmul.mubr.bf16.gmra.mxu0 %v614
      %v1008 = vpop.f32.mrf.mxu0
      %v1009 = vadd.f32 0.0, %v1008
      %v1010 = vpop.f32.mrf.mxu0
      %v1011 = vpop.f32.mrf.mxu0
      %v1012 = vadd.f32 0.0, %v1011
      %v1013 = vpop.f32.mrf.mxu0
      %1014 = vmatprep.mubr.bf16.mxu0 %v619
      %1015 = vmatmul.mubr.bf16.gmra.mxu0 %v618
      %v1016 = vpop.f32.mrf.mxu0
      %v1017 = vadd.f32 0.0, %v1016
      %v1018 = vpop.f32.mrf.mxu0
      %v1019 = vpop.f32.mrf.mxu0
      %v1020 = vadd.f32 0.0, %v1019
      %v1021 = vpop.f32.mrf.mxu0
      %1022 = vmatprep.mubr.bf16.mxu0 %v623
      %1023 = vmatmul.mubr.bf16.gmra.mxu0 %v622
      %v1024 = vpop.f32.mrf.mxu0
      %v1025 = vadd.f32 0.0, %v1024
      %v1026 = vpop.f32.mrf.mxu0
      %v1027 = vpop.f32.mrf.mxu0
      %v1028 = vadd.f32 0.0, %v1027
      %v1029 = vpop.f32.mrf.mxu0
      %1030 = vmatprep.mubr.bf16.mxu0 %v627
      %1031 = vmatmul.mubr.bf16.gmra.mxu0 %v626
      %v1032 = vpop.f32.mrf.mxu0
      %v1033 = vadd.f32 0.0, %v1032
      %v1034 = vpop.f32.mrf.mxu0
      %v1035 = vpop.f32.mrf.mxu0
      %v1036 = vadd.f32 0.0, %v1035
      %v1037 = vpop.f32.mrf.mxu0
      %1038 = vmatprep.mubr.bf16.mxu0 %v631
      %1039 = vmatmul.mubr.bf16.gmra.mxu0 %v630
      %v1040 = vpop.f32.mrf.mxu0
      %v1041 = vadd.f32 0.0, %v1040
      %v1042 = vpop.f32.mrf.mxu0
      %v1043 = vpop.f32.mrf.mxu0
      %v1044 = vadd.f32 0.0, %v1043
      %v1045 = vpop.f32.mrf.mxu0
      %1046 = vmatprep.mubr.bf16.mxu0 %v635
      %1047 = vmatmul.mubr.bf16.gmra.mxu0 %v634
      %v1048 = vpop.f32.mrf.mxu0
      %v1049 = vadd.f32 0.0, %v1048
      %v1050 = vpop.f32.mrf.mxu0
      %v1051 = vpop.f32.mrf.mxu0
      %v1052 = vadd.f32 0.0, %v1051
      %v1053 = vpop.f32.mrf.mxu0
      %1054 = vdwg.mxu0
      %1055 = vmatprep.subr.bf16.mxu0 0
      %1056 = vmatpush1.bf16.msra.mxu0 %v853
      %1057 = vmatprep.subr.bf16.mxu0 0
      %1058 = vmatpush1.bf16.msra.mxu0 %v852
      %1059 = vmatprep.subr.bf16.mxu0 0
      %1060 = vmatpush1.bf16.msra.mxu0 %v851
      %1061 = vmatprep.subr.bf16.mxu0 0
      %1062 = vmatpush1.bf16.msra.mxu0 %v850
      %1063 = vmatprep.subr.bf16.mxu0 0
      %1064 = vmatpush1.bf16.msra.mxu0 %v849
      %1065 = vmatprep.subr.bf16.mxu0 0
      %1066 = vmatpush1.bf16.msra.mxu0 %v848
      %1067 = vmatprep.subr.bf16.mxu0 0
      %1068 = vmatpush1.bf16.msra.mxu0 %v847
      %1069 = vmatprep.subr.bf16.mxu0 0
      %1070 = vmatpush1.bf16.msra.mxu0 %v846
      %1071 = vmatprep.subr.bf16.mxu0 0
      %1072 = vmatpush2.bf16.msra.mxu0 %v861
      %1073 = vmatprep.subr.bf16.mxu0 0
      %1074 = vmatpush2.bf16.msra.mxu0 %v860
      %1075 = vmatprep.subr.bf16.mxu0 0
      %1076 = vmatpush2.bf16.msra.mxu0 %v859
      %1077 = vmatprep.subr.bf16.mxu0 0
      %1078 = vmatpush2.bf16.msra.mxu0 %v858
      %1079 = vmatprep.subr.bf16.mxu0 0
      %1080 = vmatpush2.bf16.msra.mxu0 %v857
      %1081 = vmatprep.subr.bf16.mxu0 0
      %1082 = vmatpush2.bf16.msra.mxu0 %v856
      %1083 = vmatprep.subr.bf16.mxu0 0
      %1084 = vmatpush2.bf16.msra.mxu0 %v855
      %1085 = vmatprep.subr.bf16.mxu0 0
      %1086 = vmatpush2.bf16.msra.mxu0 %v854
      %1087 = vmatprep.mubr.bf16.mxu0 %v577
      %1088 = vmatmul.mubr.bf16.gmra.mxu0 %v576
      %v1089 = vpop.f32.mrf.mxu0
      %v1090 = vadd.f32 %v929, %v1089
      %v1091 = vpop.f32.mrf.mxu0
      %v1092 = vpop.f32.mrf.mxu0
      %v1093 = vadd.f32 %v932, %v1092
      %v1094 = vpop.f32.mrf.mxu0
      %1095 = vmatprep.mubr.bf16.mxu0 %v581
      %1096 = vmatmul.mubr.bf16.gmra.mxu0 %v580
      %v1097 = vpop.f32.mrf.mxu0
      %v1098 = vadd.f32 %v937, %v1097
      %v1099 = vpop.f32.mrf.mxu0
      %v1100 = vpop.f32.mrf.mxu0
      %v1101 = vadd.f32 %v940, %v1100
      %v1102 = vpop.f32.mrf.mxu0
      %1103 = vmatprep.mubr.bf16.mxu0 %v585
      %1104 = vmatmul.mubr.bf16.gmra.mxu0 %v584
      %v1105 = vpop.f32.mrf.mxu0
      %v1106 = vadd.f32 %v945, %v1105
      %v1107 = vpop.f32.mrf.mxu0
      %v1108 = vpop.f32.mrf.mxu0
      %v1109 = vadd.f32 %v948, %v1108
      %v1110 = vpop.f32.mrf.mxu0
      %1111 = vmatprep.mubr.bf16.mxu0 %v589
      %1112 = vmatmul.mubr.bf16.gmra.mxu0 %v588
      %v1113 = vpop.f32.mrf.mxu0
      %v1114 = vadd.f32 %v953, %v1113
      %v1115 = vpop.f32.mrf.mxu0
      %v1116 = vpop.f32.mrf.mxu0
      %v1117 = vadd.f32 %v956, %v1116
      %v1118 = vpop.f32.mrf.mxu0
      %1119 = vmatprep.mubr.bf16.mxu0 %v593
      %1120 = vmatmul.mubr.bf16.gmra.mxu0 %v592
      %v1121 = vpop.f32.mrf.mxu0
      %v1122 = vadd.f32 %v961, %v1121
      %v1123 = vpop.f32.mrf.mxu0
      %v1124 = vpop.f32.mrf.mxu0
      %v1125 = vadd.f32 %v964, %v1124
      %v1126 = vpop.f32.mrf.mxu0
      %1127 = vmatprep.mubr.bf16.mxu0 %v597
      %1128 = vmatmul.mubr.bf16.gmra.mxu0 %v596
      %v1129 = vpop.f32.mrf.mxu0
      %v1130 = vadd.f32 %v969, %v1129
      %v1131 = vpop.f32.mrf.mxu0
      %v1132 = vpop.f32.mrf.mxu0
      %v1133 = vadd.f32 %v972, %v1132
      %v1134 = vpop.f32.mrf.mxu0
      %1135 = vmatprep.mubr.bf16.mxu0 %v601
      %1136 = vmatmul.mubr.bf16.gmra.mxu0 %v600
      %v1137 = vpop.f32.mrf.mxu0
      %v1138 = vadd.f32 %v977, %v1137
      %v1139 = vpop.f32.mrf.mxu0
      %v1140 = vpop.f32.mrf.mxu0
      %v1141 = vadd.f32 %v980, %v1140
      %v1142 = vpop.f32.mrf.mxu0
      %1143 = vmatprep.mubr.bf16.mxu0 %v605
      %1144 = vmatmul.mubr.bf16.gmra.mxu0 %v604
      %v1145 = vpop.f32.mrf.mxu0
      %v1146 = vadd.f32 %v985, %v1145
      %v1147 = vpop.f32.mrf.mxu0
      %v1148 = vpop.f32.mrf.mxu0
      %v1149 = vadd.f32 %v988, %v1148
      %v1150 = vpop.f32.mrf.mxu0
      %1151 = vmatprep.mubr.bf16.mxu0 %v609
      %1152 = vmatmul.mubr.bf16.gmra.mxu0 %v608
      %v1153 = vpop.f32.mrf.mxu0
      %v1154 = vadd.f32 %v993, %v1153
      %v1155 = vpop.f32.mrf.mxu0
      %v1156 = vpop.f32.mrf.mxu0
      %v1157 = vadd.f32 %v996, %v1156
      %v1158 = vpop.f32.mrf.mxu0
      %1159 = vmatprep.mubr.bf16.mxu0 %v613
      %1160 = vmatmul.mubr.bf16.gmra.mxu0 %v612
      %v1161 = vpop.f32.mrf.mxu0
      %v1162 = vadd.f32 %v1001, %v1161
      %v1163 = vpop.f32.mrf.mxu0
      %v1164 = vpop.f32.mrf.mxu0
      %v1165 = vadd.f32 %v1004, %v1164
      %v1166 = vpop.f32.mrf.mxu0
      %1167 = vmatprep.mubr.bf16.mxu0 %v617
      %1168 = vmatmul.mubr.bf16.gmra.mxu0 %v616
      %v1169 = vpop.f32.mrf.mxu0
      %v1170 = vadd.f32 %v1009, %v1169
      %v1171 = vpop.f32.mrf.mxu0
      %v1172 = vpop.f32.mrf.mxu0
      %v1173 = vadd.f32 %v1012, %v1172
      %v1174 = vpop.f32.mrf.mxu0
      %1175 = vmatprep.mubr.bf16.mxu0 %v621
      %1176 = vmatmul.mubr.bf16.gmra.mxu0 %v620
      %v1177 = vpop.f32.mrf.mxu0
      %v1178 = vadd.f32 %v1017, %v1177
      %v1179 = vpop.f32.mrf.mxu0
      %v1180 = vpop.f32.mrf.mxu0
      %v1181 = vadd.f32 %v1020, %v1180
      %v1182 = vpop.f32.mrf.mxu0
      %1183 = vmatprep.mubr.bf16.mxu0 %v625
      %1184 = vmatmul.mubr.bf16.gmra.mxu0 %v624
      %v1185 = vpop.f32.mrf.mxu0
      %v1186 = vadd.f32 %v1025, %v1185
      %v1187 = vpop.f32.mrf.mxu0
      %v1188 = vpop.f32.mrf.mxu0
      %v1189 = vadd.f32 %v1028, %v1188
      %v1190 = vpop.f32.mrf.mxu0
      %1191 = vmatprep.mubr.bf16.mxu0 %v629
      %1192 = vmatmul.mubr.bf16.gmra.mxu0 %v628
      %v1193 = vpop.f32.mrf.mxu0
      %v1194 = vadd.f32 %v1033, %v1193
      %v1195 = vpop.f32.mrf.mxu0
      %v1196 = vpop.f32.mrf.mxu0
      %v1197 = vadd.f32 %v1036, %v1196
      %v1198 = vpop.f32.mrf.mxu0
      %1199 = vmatprep.mubr.bf16.mxu0 %v633
      %1200 = vmatmul.mubr.bf16.gmra.mxu0 %v632
      %v1201 = vpop.f32.mrf.mxu0
      %v1202 = vadd.f32 %v1041, %v1201
      %v1203 = vpop.f32.mrf.mxu0
      %v1204 = vpop.f32.mrf.mxu0
      %v1205 = vadd.f32 %v1044, %v1204
      %v1206 = vpop.f32.mrf.mxu0
      %1207 = vmatprep.mubr.bf16.mxu0 %v637
      %1208 = vmatmul.mubr.bf16.gmra.mxu0 %v636
      %v1209 = vpop.f32.mrf.mxu0
      %v1210 = vadd.f32 %v1049, %v1209
      %v1211 = vpop.f32.mrf.mxu0
      %v1212 = vpop.f32.mrf.mxu0
      %v1213 = vadd.f32 %v1052, %v1212
      %v1214 = vpop.f32.mrf.mxu0
      %1215 = vdwg.mxu0
      %v1216 = vld [vmem:[%s245] sm:$0xff]
      %v1217 = vld [vmem:[%s245 + $0x8] sm:$0xff]
      %v1218 = vld [vmem:[%s245 + $0x10] sm:$0xff]
      %v1219 = vld [vmem:[%s245 + $0x18] sm:$0xff]
      %v1220 = vld [vmem:[%s245 + $0x20] sm:$0xff]
      %v1221 = vld [vmem:[%s245 + $0x28] sm:$0xff]
      %v1222 = vld [vmem:[%s245 + $0x30] sm:$0xff]
      %v1223 = vld [vmem:[%s245 + $0x38] sm:$0xff]
      %v1224 = vld [vmem:[%s245 + $0x40] sm:$0xff]
      %v1225 = vld [vmem:[%s245 + $0x48] sm:$0xff]
      %v1226 = vld [vmem:[%s245 + $0x50] sm:$0xff]
      %v1227 = vld [vmem:[%s245 + $0x58] sm:$0xff]
      %v1228 = vld [vmem:[%s245 + $0x60] sm:$0xff]
      %v1229 = vld [vmem:[%s245 + $0x68] sm:$0xff]
      %v1230 = vld [vmem:[%s245 + $0x70] sm:$0xff]
      %v1231 = vld [vmem:[%s245 + $0x78] sm:$0xff]
      %v1232 = vld [vmem:[%s245 + $0x80] sm:$0xff]
      %v1233 = vld [vmem:[%s245 + $0x88] sm:$0xff]
      %v1234 = vld [vmem:[%s245 + $0x90] sm:$0xff]
      %v1235 = vld [vmem:[%s245 + $0x98] sm:$0xff]
      %v1236 = vld [vmem:[%s245 + $0xa0] sm:$0xff]
      %v1237 = vld [vmem:[%s245 + $0xa8] sm:$0xff]
      %v1238 = vld [vmem:[%s245 + $0xb0] sm:$0xff]
      %v1239 = vld [vmem:[%s245 + $0xb8] sm:$0xff]
      %v1240 = vld [vmem:[%s245 + $0xc0] sm:$0xff]
      %v1241 = vld [vmem:[%s245 + $0xc8] sm:$0xff]
      %v1242 = vld [vmem:[%s245 + $0xd0] sm:$0xff]
      %v1243 = vld [vmem:[%s245 + $0xd8] sm:$0xff]
      %v1244 = vld [vmem:[%s245 + $0xe0] sm:$0xff]
      %v1245 = vld [vmem:[%s245 + $0xe8] sm:$0xff]
      %v1246 = vld [vmem:[%s245 + $0xf0] sm:$0xff]
      %v1247 = vld [vmem:[%s245 + $0xf8] sm:$0xff]
      %v1248 = vld [vmem:[%s3] sm:$0x1]
      %v1249 = vld [vmem:[%s4] sm:$0xf]
      %v1250 = vld [vmem:[%s4 + $0x4] sm:$0xf]
      %v1251 = vld [vmem:[%s4 + $0x8] sm:$0xf]
      %v1252 = vld [vmem:[%s4 + $0xc] sm:$0xf]
      %v1253 = vld [vmem:[%s4 + $0x10] sm:$0xf]
      %v1254 = vld [vmem:[%s4 + $0x14] sm:$0xf]
      %v1255 = vld [vmem:[%s4 + $0x18] sm:$0xf]
      %v1256 = vld [vmem:[%s4 + $0x1c] sm:$0xf]
      %v1257 = vld [vmem:[%s4 + $0x20] sm:$0xf]
      %v1258 = vld [vmem:[%s4 + $0x24] sm:$0xf]
      %v1259 = vld [vmem:[%s4 + $0x28] sm:$0xf]
      %v1260 = vld [vmem:[%s4 + $0x2c] sm:$0xf]
      %v1261 = vld [vmem:[%s4 + $0x30] sm:$0xf]
      %v1262 = vld [vmem:[%s4 + $0x34] sm:$0xf]
      %v1263 = vld [vmem:[%s4 + $0x38] sm:$0xf]
      %v1264 = vld [vmem:[%s4 + $0x3c] sm:$0xf]
      %1266 = vset.pattern.permute.xlu0 0
      %1267 = vperm.xlu0 %1266, %v1216
      %v1268 = vpop.permute.xlu0 %1267
      %1271 = vset.pattern.permute.xlu0 0
      %1272 = vperm.xlu0 %1271, %v1217
      %v1273 = vpop.permute.xlu0 %1272
      %1276 = vset.pattern.permute.xlu0 0
      %1277 = vperm.xlu0 %1276, %v1218
      %v1278 = vpop.permute.xlu0 %1277
      %1281 = vset.pattern.permute.xlu0 0
      %1282 = vperm.xlu0 %1281, %v1219
      %v1283 = vpop.permute.xlu0 %1282
      %1286 = vset.pattern.permute.xlu0 0
      %1287 = vperm.xlu0 %1286, %v1220
      %v1288 = vpop.permute.xlu0 %1287
      %1291 = vset.pattern.permute.xlu0 0
      %1292 = vperm.xlu0 %1291, %v1221
      %v1293 = vpop.permute.xlu0 %1292
      %1296 = vset.pattern.permute.xlu0 0
      %1297 = vperm.xlu0 %1296, %v1222
      %v1298 = vpop.permute.xlu0 %1297
      %1301 = vset.pattern.permute.xlu0 0
      %1302 = vperm.xlu0 %1301, %v1223
      %v1303 = vpop.permute.xlu0 %1302
      %1306 = vset.pattern.permute.xlu0 0
      %1307 = vperm.xlu0 %1306, %v1224
      %v1308 = vpop.permute.xlu0 %1307
      %1311 = vset.pattern.permute.xlu0 0
      %1312 = vperm.xlu0 %1311, %v1225
      %v1313 = vpop.permute.xlu0 %1312
      %1316 = vset.pattern.permute.xlu0 0
      %1317 = vperm.xlu0 %1316, %v1226
      %v1318 = vpop.permute.xlu0 %1317
      %1321 = vset.pattern.permute.xlu0 0
      %1322 = vperm.xlu0 %1321, %v1227
      %v1323 = vpop.permute.xlu0 %1322
      %1326 = vset.pattern.permute.xlu0 0
      %1327 = vperm.xlu0 %1326, %v1228
      %v1328 = vpop.permute.xlu0 %1327
      %1331 = vset.pattern.permute.xlu0 0
      %1332 = vperm.xlu0 %1331, %v1229
      %v1333 = vpop.permute.xlu0 %1332
      %1336 = vset.pattern.permute.xlu0 0
      %1337 = vperm.xlu0 %1336, %v1230
      %v1338 = vpop.permute.xlu0 %1337
      %1341 = vset.pattern.permute.xlu0 0
      %1342 = vperm.xlu0 %1341, %v1231
      %v1343 = vpop.permute.xlu0 %1342
      %1346 = vset.pattern.permute.xlu0 0
      %1347 = vperm.xlu0 %1346, %v1232
      %v1348 = vpop.permute.xlu0 %1347
      %1351 = vset.pattern.permute.xlu0 0
      %1352 = vperm.xlu0 %1351, %v1233
      %v1353 = vpop.permute.xlu0 %1352
      %1356 = vset.pattern.permute.xlu0 0
      %1357 = vperm.xlu0 %1356, %v1234
      %v1358 = vpop.permute.xlu0 %1357
      %1361 = vset.pattern.permute.xlu0 0
      %1362 = vperm.xlu0 %1361, %v1235
      %v1363 = vpop.permute.xlu0 %1362
      %1366 = vset.pattern.permute.xlu0 0
      %1367 = vperm.xlu0 %1366, %v1236
      %v1368 = vpop.permute.xlu0 %1367
      %1371 = vset.pattern.permute.xlu0 0
      %1372 = vperm.xlu0 %1371, %v1237
      %v1373 = vpop.permute.xlu0 %1372
      %1376 = vset.pattern.permute.xlu0 0
      %1377 = vperm.xlu0 %1376, %v1238
      %v1378 = vpop.permute.xlu0 %1377
      %1381 = vset.pattern.permute.xlu0 0
      %1382 = vperm.xlu0 %1381, %v1239
      %v1383 = vpop.permute.xlu0 %1382
      %1386 = vset.pattern.permute.xlu0 0
      %1387 = vperm.xlu0 %1386, %v1240
      %v1388 = vpop.permute.xlu0 %1387
      %1391 = vset.pattern.permute.xlu0 0
      %1392 = vperm.xlu0 %1391, %v1241
      %v1393 = vpop.permute.xlu0 %1392
      %1396 = vset.pattern.permute.xlu0 0
      %1397 = vperm.xlu0 %1396, %v1242
      %v1398 = vpop.permute.xlu0 %1397
      %1401 = vset.pattern.permute.xlu0 0
      %1402 = vperm.xlu0 %1401, %v1243
      %v1403 = vpop.permute.xlu0 %1402
      %1406 = vset.pattern.permute.xlu0 0
      %1407 = vperm.xlu0 %1406, %v1244
      %v1408 = vpop.permute.xlu0 %1407
      %1411 = vset.pattern.permute.xlu0 0
      %1412 = vperm.xlu0 %1411, %v1245
      %v1413 = vpop.permute.xlu0 %1412
      %1416 = vset.pattern.permute.xlu0 0
      %1417 = vperm.xlu0 %1416, %v1246
      %v1418 = vpop.permute.xlu0 %1417
      %1421 = vset.pattern.permute.xlu0 0
      %1422 = vperm.xlu0 %1421, %v1247
      %v1423 = vpop.permute.xlu0 %1422
      %v1425 = vmul.f32 %v1090, %v1268
      %v1426 = vmul.f32 %v1093, %v1273
      %v1427 = vmul.f32 %v1098, %v1278
      %v1428 = vmul.f32 %v1101, %v1283
      %v1429 = vmul.f32 %v1106, %v1288
      %v1430 = vmul.f32 %v1109, %v1293
      %v1431 = vmul.f32 %v1114, %v1298
      %v1432 = vmul.f32 %v1117, %v1303
      %v1433 = vmul.f32 %v1122, %v1308
      %v1434 = vmul.f32 %v1125, %v1313
      %v1435 = vmul.f32 %v1130, %v1318
      %v1436 = vmul.f32 %v1133, %v1323
      %v1437 = vmul.f32 %v1138, %v1328
      %v1438 = vmul.f32 %v1141, %v1333
      %v1439 = vmul.f32 %v1146, %v1338
      %v1440 = vmul.f32 %v1149, %v1343
      %v1441 = vmul.f32 %v1154, %v1348
      %v1442 = vmul.f32 %v1157, %v1353
      %v1443 = vmul.f32 %v1162, %v1358
      %v1444 = vmul.f32 %v1165, %v1363
      %v1445 = vmul.f32 %v1170, %v1368
      %v1446 = vmul.f32 %v1173, %v1373
      %v1447 = vmul.f32 %v1178, %v1378
      %v1448 = vmul.f32 %v1181, %v1383
      %v1449 = vmul.f32 %v1186, %v1388
      %v1450 = vmul.f32 %v1189, %v1393
      %v1451 = vmul.f32 %v1194, %v1398
      %v1452 = vmul.f32 %v1197, %v1403
      %v1453 = vmul.f32 %v1202, %v1408
      %v1454 = vmul.f32 %v1205, %v1413
      %v1455 = vmul.f32 %v1210, %v1418
      %v1456 = vmul.f32 %v1213, %v1423
      %v1458 = vlaneseq
      %v1459 = vshrl.u32 %v1458, 7
      %v1460 = vsub.s32 0, %v1459
      %v1461 = vrot.slane %v1248, %v1460
      %v1463 = vadd.f32 %v1425, %v1461
      %v1464 = vadd.f32 %v1426, %v1461
      %v1465 = vadd.f32 %v1427, %v1461
      %v1466 = vadd.f32 %v1428, %v1461
      %v1467 = vadd.f32 %v1429, %v1461
      %v1468 = vadd.f32 %v1430, %v1461
      %v1469 = vadd.f32 %v1431, %v1461
      %v1470 = vadd.f32 %v1432, %v1461
      %v1471 = vadd.f32 %v1433, %v1461
      %v1472 = vadd.f32 %v1434, %v1461
      %v1473 = vadd.f32 %v1435, %v1461
      %v1474 = vadd.f32 %v1436, %v1461
      %v1475 = vadd.f32 %v1437, %v1461
      %v1476 = vadd.f32 %v1438, %v1461
      %v1477 = vadd.f32 %v1439, %v1461
      %v1478 = vadd.f32 %v1440, %v1461
      %v1479 = vadd.f32 %v1441, %v1461
      %v1480 = vadd.f32 %v1442, %v1461
      %v1481 = vadd.f32 %v1443, %v1461
      %v1482 = vadd.f32 %v1444, %v1461
      %v1483 = vadd.f32 %v1445, %v1461
      %v1484 = vadd.f32 %v1446, %v1461
      %v1485 = vadd.f32 %v1447, %v1461
      %v1486 = vadd.f32 %v1448, %v1461
      %v1487 = vadd.f32 %v1449, %v1461
      %v1488 = vadd.f32 %v1450, %v1461
      %v1489 = vadd.f32 %v1451, %v1461
      %v1490 = vadd.f32 %v1452, %v1461
      %v1491 = vadd.f32 %v1453, %v1461
      %v1492 = vadd.f32 %v1454, %v1461
      %v1493 = vadd.f32 %v1455, %v1461
      %v1494 = vadd.f32 %v1456, %v1461
      %v1495 = vmax.f32 %v1463, 0.0
      %v1496 = vmax.f32 %v1464, 0.0
      %v1497 = vmax.f32 %v1465, 0.0
      %v1498 = vmax.f32 %v1466, 0.0
      %v1499 = vmax.f32 %v1467, 0.0
      %v1500 = vmax.f32 %v1468, 0.0
      %v1501 = vmax.f32 %v1469, 0.0
      %v1502 = vmax.f32 %v1470, 0.0
      %v1503 = vmax.f32 %v1471, 0.0
      %v1504 = vmax.f32 %v1472, 0.0
      %v1505 = vmax.f32 %v1473, 0.0
      %v1506 = vmax.f32 %v1474, 0.0
      %v1507 = vmax.f32 %v1475, 0.0
      %v1508 = vmax.f32 %v1476, 0.0
      %v1509 = vmax.f32 %v1477, 0.0
      %v1510 = vmax.f32 %v1478, 0.0
      %v1511 = vmax.f32 %v1479, 0.0
      %v1512 = vmax.f32 %v1480, 0.0
      %v1513 = vmax.f32 %v1481, 0.0
      %v1514 = vmax.f32 %v1482, 0.0
      %v1515 = vmax.f32 %v1483, 0.0
      %v1516 = vmax.f32 %v1484, 0.0
      %v1517 = vmax.f32 %v1485, 0.0
      %v1518 = vmax.f32 %v1486, 0.0
      %v1519 = vmax.f32 %v1487, 0.0
      %v1520 = vmax.f32 %v1488, 0.0
      %v1521 = vmax.f32 %v1489, 0.0
      %v1522 = vmax.f32 %v1490, 0.0
      %v1523 = vmax.f32 %v1491, 0.0
      %v1524 = vmax.f32 %v1492, 0.0
      %v1525 = vmax.f32 %v1493, 0.0
      %v1526 = vmax.f32 %v1494, 0.0
      %v1527 = vmul.f32 %v1495, %v1268
      %v1528 = vmul.f32 %v1496, %v1273
      %v1529 = vmul.f32 %v1497, %v1278
      %v1530 = vmul.f32 %v1498, %v1283
      %v1531 = vmul.f32 %v1499, %v1288
      %v1532 = vmul.f32 %v1500, %v1293
      %v1533 = vmul.f32 %v1501, %v1298
      %v1534 = vmul.f32 %v1502, %v1303
      %v1535 = vmul.f32 %v1503, %v1308
      %v1536 = vmul.f32 %v1504, %v1313
      %v1537 = vmul.f32 %v1505, %v1318
      %v1538 = vmul.f32 %v1506, %v1323
      %v1539 = vmul.f32 %v1507, %v1328
      %v1540 = vmul.f32 %v1508, %v1333
      %v1541 = vmul.f32 %v1509, %v1338
      %v1542 = vmul.f32 %v1510, %v1343
      %v1543 = vmul.f32 %v1511, %v1348
      %v1544 = vmul.f32 %v1512, %v1353
      %v1545 = vmul.f32 %v1513, %v1358
      %v1546 = vmul.f32 %v1514, %v1363
      %v1547 = vmul.f32 %v1515, %v1368
      %v1548 = vmul.f32 %v1516, %v1373
      %v1549 = vmul.f32 %v1517, %v1378
      %v1550 = vmul.f32 %v1518, %v1383
      %v1551 = vmul.f32 %v1519, %v1388
      %v1552 = vmul.f32 %v1520, %v1393
      %v1553 = vmul.f32 %v1521, %v1398
      %v1554 = vmul.f32 %v1522, %v1403
      %v1555 = vmul.f32 %v1523, %v1408
      %v1556 = vmul.f32 %v1524, %v1413
      %v1557 = vmul.f32 %v1525, %v1418
      %v1558 = vmul.f32 %v1526, %v1423
      %v1559 = vpack.c.bf16 %v1528, %v1527
      %v1560 = vpack.c.bf16 %v1530, %v1529
      %v1561 = vpack.c.bf16 %v1532, %v1531
      %v1562 = vpack.c.bf16 %v1534, %v1533
      %v1563 = vpack.c.bf16 %v1536, %v1535
      %v1564 = vpack.c.bf16 %v1538, %v1537
      %v1565 = vpack.c.bf16 %v1540, %v1539
      %v1566 = vpack.c.bf16 %v1542, %v1541
      %v1567 = vpack.c.bf16 %v1544, %v1543
      %v1568 = vpack.c.bf16 %v1546, %v1545
      %v1569 = vpack.c.bf16 %v1548, %v1547
      %v1570 = vpack.c.bf16 %v1550, %v1549
      %v1571 = vpack.c.bf16 %v1552, %v1551
      %v1572 = vpack.c.bf16 %v1554, %v1553
      %v1573 = vpack.c.bf16 %v1556, %v1555
      %v1574 = vpack.c.bf16 %v1558, %v1557
      %v1591 = vunpack.c.l.b16 %v1249
      %v1592 = vunpack.c.l.b16 %v1250
      %v1593 = vunpack.c.l.b16 %v1251
      %v1594 = vunpack.c.l.b16 %v1252
      %v1595 = vunpack.c.l.b16 %v1253
      %v1596 = vunpack.c.l.b16 %v1254
      %v1597 = vunpack.c.l.b16 %v1255
      %v1598 = vunpack.c.l.b16 %v1256
      %v1599 = vunpack.c.l.b16 %v1257
      %v1600 = vunpack.c.l.b16 %v1258
      %v1601 = vunpack.c.l.b16 %v1259
      %v1602 = vunpack.c.l.b16 %v1260
      %v1603 = vunpack.c.l.b16 %v1261
      %v1604 = vunpack.c.l.b16 %v1262
      %v1605 = vunpack.c.l.b16 %v1263
      %v1606 = vunpack.c.l.b16 %v1264
      %v1607 = vpack.c.b16 %v1592, %v1591
      %v1608 = vpack.c.b16 %v1594, %v1593
      %v1609 = vpack.c.b16 %v1596, %v1595
      %v1610 = vpack.c.b16 %v1598, %v1597
      %v1611 = vpack.c.b16 %v1600, %v1599
      %v1612 = vpack.c.b16 %v1602, %v1601
      %v1613 = vpack.c.b16 %v1604, %v1603
      %v1614 = vpack.c.b16 %v1606, %v1605
      %1623 = vmatprep.subr.bf16.mxu0 0
      %1624 = vmatpush1.bf16.msra.mxu0 %v1614
      %1625 = vmatprep.subr.bf16.mxu0 0
      %1626 = vmatpush1.bf16.msra.mxu0 %v1613
      %1627 = vmatprep.subr.bf16.mxu0 0
      %1628 = vmatpush1.bf16.msra.mxu0 %v1612
      %1629 = vmatprep.subr.bf16.mxu0 0
      %1630 = vmatpush1.bf16.msra.mxu0 %v1611
      %1631 = vmatprep.subr.bf16.mxu0 0
      %1632 = vmatpush1.bf16.msra.mxu0 %v1610
      %1633 = vmatprep.subr.bf16.mxu0 0
      %1634 = vmatpush1.bf16.msra.mxu0 %v1609
      %1635 = vmatprep.subr.bf16.mxu0 0
      %1636 = vmatpush1.bf16.msra.mxu0 %v1608
      %1637 = vmatprep.subr.bf16.mxu0 0
      %1638 = vmatpush1.bf16.msra.mxu0 %v1607
      %1639 = vmatprep.subr.bf16.mxu0 0
      %1640 = vmatpush2.bf16.msra.mxu0 0
      %1641 = vmatprep.subr.bf16.mxu0 0
      %1642 = vmatpush2.bf16.msra.mxu0 0
      %1643 = vmatprep.subr.bf16.mxu0 0
      %1644 = vmatpush2.bf16.msra.mxu0 0
      %1645 = vmatprep.subr.bf16.mxu0 0
      %1646 = vmatpush2.bf16.msra.mxu0 0
      %1647 = vmatprep.subr.bf16.mxu0 0
      %1648 = vmatpush2.bf16.msra.mxu0 0
      %1649 = vmatprep.subr.bf16.mxu0 0
      %1650 = vmatpush2.bf16.msra.mxu0 0
      %1651 = vmatprep.subr.bf16.mxu0 0
      %1652 = vmatpush2.bf16.msra.mxu0 0
      %1653 = vmatprep.subr.bf16.mxu0 0
      %1654 = vmatpush2.bf16.msra.mxu0 0
      %1655 = vmatprep.mubr.bf16.mxu0 0
      %1656 = vmatmul.mubr.bf16.gmra.mxu0 %v1559
      %v1657 = vpop.f32.mrf.mxu0
      %v1658 = vadd.f32 0.0, %v1657
      %v1659 = vpop.f32.mrf.mxu0
      %v1660 = vpop.f32.mrf.mxu0
      %v1661 = vadd.f32 0.0, %v1660
      %v1662 = vpop.f32.mrf.mxu0
      %1663 = vmatprep.mubr.bf16.mxu0 0
      %1664 = vmatmul.mubr.bf16.gmra.mxu0 %v1560
      %v1665 = vpop.f32.mrf.mxu0
      %v1666 = vadd.f32 0.0, %v1665
      %v1667 = vpop.f32.mrf.mxu0
      %v1668 = vpop.f32.mrf.mxu0
      %v1669 = vadd.f32 0.0, %v1668
      %v1670 = vpop.f32.mrf.mxu0
      %1671 = vmatprep.mubr.bf16.mxu0 0
      %1672 = vmatmul.mubr.bf16.gmra.mxu0 %v1561
      %v1673 = vpop.f32.mrf.mxu0
      %v1674 = vadd.f32 0.0, %v1673
      %v1675 = vpop.f32.mrf.mxu0
      %v1676 = vpop.f32.mrf.mxu0
      %v1677 = vadd.f32 0.0, %v1676
      %v1678 = vpop.f32.mrf.mxu0
      %1679 = vmatprep.mubr.bf16.mxu0 0
      %1680 = vmatmul.mubr.bf16.gmra.mxu0 %v1562
      %v1681 = vpop.f32.mrf.mxu0
      %v1682 = vadd.f32 0.0, %v1681
      %v1683 = vpop.f32.mrf.mxu0
      %v1684 = vpop.f32.mrf.mxu0
      %v1685 = vadd.f32 0.0, %v1684
      %v1686 = vpop.f32.mrf.mxu0
      %1687 = vmatprep.mubr.bf16.mxu0 0
      %1688 = vmatmul.mubr.bf16.gmra.mxu0 %v1563
      %v1689 = vpop.f32.mrf.mxu0
      %v1690 = vadd.f32 0.0, %v1689
      %v1691 = vpop.f32.mrf.mxu0
      %v1692 = vpop.f32.mrf.mxu0
      %v1693 = vadd.f32 0.0, %v1692
      %v1694 = vpop.f32.mrf.mxu0
      %1695 = vmatprep.mubr.bf16.mxu0 0
      %1696 = vmatmul.mubr.bf16.gmra.mxu0 %v1564
      %v1697 = vpop.f32.mrf.mxu0
      %v1698 = vadd.f32 0.0, %v1697
      %v1699 = vpop.f32.mrf.mxu0
      %v1700 = vpop.f32.mrf.mxu0
      %v1701 = vadd.f32 0.0, %v1700
      %v1702 = vpop.f32.mrf.mxu0
      %1703 = vmatprep.mubr.bf16.mxu0 0
      %1704 = vmatmul.mubr.bf16.gmra.mxu0 %v1565
      %v1705 = vpop.f32.mrf.mxu0
      %v1706 = vadd.f32 0.0, %v1705
      %v1707 = vpop.f32.mrf.mxu0
      %v1708 = vpop.f32.mrf.mxu0
      %v1709 = vadd.f32 0.0, %v1708
      %v1710 = vpop.f32.mrf.mxu0
      %1711 = vmatprep.mubr.bf16.mxu0 0
      %1712 = vmatmul.mubr.bf16.gmra.mxu0 %v1566
      %v1713 = vpop.f32.mrf.mxu0
      %v1714 = vadd.f32 0.0, %v1713
      %v1715 = vpop.f32.mrf.mxu0
      %v1716 = vpop.f32.mrf.mxu0
      %v1717 = vadd.f32 0.0, %v1716
      %v1718 = vpop.f32.mrf.mxu0
      %1719 = vmatprep.mubr.bf16.mxu0 0
      %1720 = vmatmul.mubr.bf16.gmra.mxu0 %v1567
      %v1721 = vpop.f32.mrf.mxu0
      %v1722 = vadd.f32 0.0, %v1721
      %v1723 = vpop.f32.mrf.mxu0
      %v1724 = vpop.f32.mrf.mxu0
      %v1725 = vadd.f32 0.0, %v1724
      %v1726 = vpop.f32.mrf.mxu0
      %1727 = vmatprep.mubr.bf16.mxu0 0
      %1728 = vmatmul.mubr.bf16.gmra.mxu0 %v1568
      %v1729 = vpop.f32.mrf.mxu0
      %v1730 = vadd.f32 0.0, %v1729
      %v1731 = vpop.f32.mrf.mxu0
      %v1732 = vpop.f32.mrf.mxu0
      %v1733 = vadd.f32 0.0, %v1732
      %v1734 = vpop.f32.mrf.mxu0
      %1735 = vmatprep.mubr.bf16.mxu0 0
      %1736 = vmatmul.mubr.bf16.gmra.mxu0 %v1569
      %v1737 = vpop.f32.mrf.mxu0
      %v1738 = vadd.f32 0.0, %v1737
      %v1739 = vpop.f32.mrf.mxu0
      %v1740 = vpop.f32.mrf.mxu0
      %v1741 = vadd.f32 0.0, %v1740
      %v1742 = vpop.f32.mrf.mxu0
      %1743 = vmatprep.mubr.bf16.mxu0 0
      %1744 = vmatmul.mubr.bf16.gmra.mxu0 %v1570
      %v1745 = vpop.f32.mrf.mxu0
      %v1746 = vadd.f32 0.0, %v1745
      %v1747 = vpop.f32.mrf.mxu0
      %v1748 = vpop.f32.mrf.mxu0
      %v1749 = vadd.f32 0.0, %v1748
      %v1750 = vpop.f32.mrf.mxu0
      %1751 = vmatprep.mubr.bf16.mxu0 0
      %1752 = vmatmul.mubr.bf16.gmra.mxu0 %v1571
      %v1753 = vpop.f32.mrf.mxu0
      %v1754 = vadd.f32 0.0, %v1753
      %v1755 = vpop.f32.mrf.mxu0
      %v1756 = vpop.f32.mrf.mxu0
      %v1757 = vadd.f32 0.0, %v1756
      %v1758 = vpop.f32.mrf.mxu0
      %1759 = vmatprep.mubr.bf16.mxu0 0
      %1760 = vmatmul.mubr.bf16.gmra.mxu0 %v1572
      %v1761 = vpop.f32.mrf.mxu0
      %v1762 = vadd.f32 0.0, %v1761
      %v1763 = vpop.f32.mrf.mxu0
      %v1764 = vpop.f32.mrf.mxu0
      %v1765 = vadd.f32 0.0, %v1764
      %v1766 = vpop.f32.mrf.mxu0
      %1767 = vmatprep.mubr.bf16.mxu0 0
      %1768 = vmatmul.mubr.bf16.gmra.mxu0 %v1573
      %v1769 = vpop.f32.mrf.mxu0
      %v1770 = vadd.f32 0.0, %v1769
      %v1771 = vpop.f32.mrf.mxu0
      %v1772 = vpop.f32.mrf.mxu0
      %v1773 = vadd.f32 0.0, %v1772
      %v1774 = vpop.f32.mrf.mxu0
      %1775 = vmatprep.mubr.bf16.mxu0 0
      %1776 = vmatmul.mubr.bf16.gmra.mxu0 %v1574
      %v1777 = vpop.f32.mrf.mxu0
      %v1778 = vadd.f32 0.0, %v1777
      %v1779 = vpop.f32.mrf.mxu0
      %v1780 = vpop.f32.mrf.mxu0
      %v1781 = vadd.f32 0.0, %v1780
      %v1782 = vpop.f32.mrf.mxu0
      %1783 = vdwg.mxu0
      %v1784 = vpack.c.bf16 %v1661, %v1658
      %v1785 = vpack.c.bf16 %v1669, %v1666
      %v1786 = vpack.c.bf16 %v1677, %v1674
      %v1787 = vpack.c.bf16 %v1685, %v1682
      %v1788 = vpack.c.bf16 %v1693, %v1690
      %v1789 = vpack.c.bf16 %v1701, %v1698
      %v1790 = vpack.c.bf16 %v1709, %v1706
      %v1791 = vpack.c.bf16 %v1717, %v1714
      %v1792 = vpack.c.bf16 %v1725, %v1722
      %v1793 = vpack.c.bf16 %v1733, %v1730
      %v1794 = vpack.c.bf16 %v1741, %v1738
      %v1795 = vpack.c.bf16 %v1749, %v1746
      %v1796 = vpack.c.bf16 %v1757, %v1754
      %v1797 = vpack.c.bf16 %v1765, %v1762
      %v1798 = vpack.c.bf16 %v1773, %v1770
      %v1799 = vpack.c.bf16 %v1781, %v1778
      %v1816 = vunpack.c.l.b16 %v1784
      %v1817 = vunpack.c.h.b16 %v1784
      %v1818 = vunpack.c.l.b16 %v1785
      %v1819 = vunpack.c.h.b16 %v1785
      %v1820 = vunpack.c.l.b16 %v1786
      %v1821 = vunpack.c.h.b16 %v1786
      %v1822 = vunpack.c.l.b16 %v1787
      %v1823 = vunpack.c.h.b16 %v1787
      %v1824 = vunpack.c.l.b16 %v1788
      %v1825 = vunpack.c.h.b16 %v1788
      %v1826 = vunpack.c.l.b16 %v1789
      %v1827 = vunpack.c.h.b16 %v1789
      %v1828 = vunpack.c.l.b16 %v1790
      %v1829 = vunpack.c.h.b16 %v1790
      %v1830 = vunpack.c.l.b16 %v1791
      %v1831 = vunpack.c.h.b16 %v1791
      %v1832 = vunpack.c.l.b16 %v1792
      %v1833 = vunpack.c.h.b16 %v1792
      %v1834 = vunpack.c.l.b16 %v1793
      %v1835 = vunpack.c.h.b16 %v1793
      %v1836 = vunpack.c.l.b16 %v1794
      %v1837 = vunpack.c.h.b16 %v1794
      %v1838 = vunpack.c.l.b16 %v1795
      %v1839 = vunpack.c.h.b16 %v1795
      %v1840 = vunpack.c.l.b16 %v1796
      %v1841 = vunpack.c.h.b16 %v1796
      %v1842 = vunpack.c.l.b16 %v1797
      %v1843 = vunpack.c.h.b16 %v1797
      %v1844 = vunpack.c.l.b16 %v1798
      %v1845 = vunpack.c.h.b16 %v1798
      %v1846 = vunpack.c.l.b16 %v1799
      %v1847 = vunpack.c.h.b16 %v1799
      %v1848 = vpack.c.b16 %v1816, %v1816
      %v1849 = vpack.c.b16 %v1817, %v1817
      %v1850 = vpack.c.b16 %v1818, %v1818
      %v1851 = vpack.c.b16 %v1819, %v1819
      %v1852 = vpack.c.b16 %v1820, %v1820
      %v1853 = vpack.c.b16 %v1821, %v1821
      %v1854 = vpack.c.b16 %v1822, %v1822
      %v1855 = vpack.c.b16 %v1823, %v1823
      %v1856 = vpack.c.b16 %v1824, %v1824
      %v1857 = vpack.c.b16 %v1825, %v1825
      %v1858 = vpack.c.b16 %v1826, %v1826
      %v1859 = vpack.c.b16 %v1827, %v1827
      %v1860 = vpack.c.b16 %v1828, %v1828
      %v1861 = vpack.c.b16 %v1829, %v1829
      %v1862 = vpack.c.b16 %v1830, %v1830
      %v1863 = vpack.c.b16 %v1831, %v1831
      %v1864 = vpack.c.b16 %v1832, %v1832
      %v1865 = vpack.c.b16 %v1833, %v1833
      %v1866 = vpack.c.b16 %v1834, %v1834
      %v1867 = vpack.c.b16 %v1835, %v1835
      %v1868 = vpack.c.b16 %v1836, %v1836
      %v1869 = vpack.c.b16 %v1837, %v1837
      %v1870 = vpack.c.b16 %v1838, %v1838
      %v1871 = vpack.c.b16 %v1839, %v1839
      %v1872 = vpack.c.b16 %v1840, %v1840
      %v1873 = vpack.c.b16 %v1841, %v1841
      %v1874 = vpack.c.b16 %v1842, %v1842
      %v1875 = vpack.c.b16 %v1843, %v1843
      %v1876 = vpack.c.b16 %v1844, %v1844
      %v1877 = vpack.c.b16 %v1845, %v1845
      %v1878 = vpack.c.b16 %v1846, %v1846
      %v1879 = vpack.c.b16 %v1847, %v1847
      %1912 = vst [vmem:[%s251] sm:$0xf] %v1848
      %1913 = vst [vmem:[%s251 + $0x4] sm:$0xf] %v1849
      %1914 = vst [vmem:[%s251 + $0x8] sm:$0xf] %v1850
      %1915 = vst [vmem:[%s251 + $0xc] sm:$0xf] %v1851
      %1916 = vst [vmem:[%s251 + $0x10] sm:$0xf] %v1852
      %1917 = vst [vmem:[%s251 + $0x14] sm:$0xf] %v1853
      %1918 = vst [vmem:[%s251 + $0x18] sm:$0xf] %v1854
      %1919 = vst [vmem:[%s251 + $0x1c] sm:$0xf] %v1855
      %1920 = vst [vmem:[%s251 + $0x20] sm:$0xf] %v1856
      %1921 = vst [vmem:[%s251 + $0x24] sm:$0xf] %v1857
      %1922 = vst [vmem:[%s251 + $0x28] sm:$0xf] %v1858
      %1923 = vst [vmem:[%s251 + $0x2c] sm:$0xf] %v1859
      %1924 = vst [vmem:[%s251 + $0x30] sm:$0xf] %v1860
      %1925 = vst [vmem:[%s251 + $0x34] sm:$0xf] %v1861
      %1926 = vst [vmem:[%s251 + $0x38] sm:$0xf] %v1862
      %1927 = vst [vmem:[%s251 + $0x3c] sm:$0xf] %v1863
      %1928 = vst [vmem:[%s251 + $0x40] sm:$0xf] %v1864
      %1929 = vst [vmem:[%s251 + $0x44] sm:$0xf] %v1865
      %1930 = vst [vmem:[%s251 + $0x48] sm:$0xf] %v1866
      %1931 = vst [vmem:[%s251 + $0x4c] sm:$0xf] %v1867
      %1932 = vst [vmem:[%s251 + $0x50] sm:$0xf] %v1868
      %1933 = vst [vmem:[%s251 + $0x54] sm:$0xf] %v1869
      %1934 = vst [vmem:[%s251 + $0x58] sm:$0xf] %v1870
      %1935 = vst [vmem:[%s251 + $0x5c] sm:$0xf] %v1871
      %1936 = vst [vmem:[%s251 + $0x60] sm:$0xf] %v1872
      %1937 = vst [vmem:[%s251 + $0x64] sm:$0xf] %v1873
      %1938 = vst [vmem:[%s251 + $0x68] sm:$0xf] %v1874
      %1939 = vst [vmem:[%s251 + $0x6c] sm:$0xf] %v1875
      %1940 = vst [vmem:[%s251 + $0x70] sm:$0xf] %v1876
      %1941 = vst [vmem:[%s251 + $0x74] sm:$0xf] %v1877
      %1942 = vst [vmem:[%s251 + $0x78] sm:$0xf] %v1878
      %1943 = vst [vmem:[%s251 + $0x7c] sm:$0xf] %v1879
      %s1944 = smul.u32 32, %s16
      %p1945 = scmp.lt.s32.totalorder %s1944, 63
      %s1946 = scalar_select %p1945, %s1944, 63
      %s1947 = smul.addr %s1946, 4
      %s1948 = scalar_lea.vmem %s5, %s1947
      // Predicated region
      $region41: #{gcn_forward.4} parent=39 // pred_check
        %p1949 = pneg %p149
      $region42: #{gcn_forward.4} parent=39 // pred_check_branch
        %1951 = sbr.rel (%p1949) target = $region44
      $region43: #{gcn_forward.4} parent=39 // pred_region
        %s1952 = smul.u32 32, %s16
      $region44: #{gcn_forward.4} parent=39 // pred_fallthru
        _
    $region40: #{gcn_forward.4} parent=5 // pred_fallthru
      _
    %p1953 = scmp.le.s32.totalorder 2, %s11
    // Predicated region
    $region45: #{gcn_forward.4} parent=5 // pred_check
      %p1954 = pneg %p1953
    $region46: #{gcn_forward.4} parent=5 // pred_check_branch
      %1956 = sbr.rel (%p1954) target = $region48
    $region47: #{gcn_forward.4} parent=5 // pred_region
      %s1957 = ssub.s32 %s11, 2
      // Predicated region
      $region49: #{gcn_forward.4} parent=47 // pred_check
        %p1958 = pneg %p155
      $region50: #{gcn_forward.4} parent=47 // pred_check_branch
        %1960 = sbr.rel (%p1958) target = $region52
      $region51: #{gcn_forward.4} parent=47 // pred_region
        %s1961 = smul.u32 32, %s17
        %p1962 = scmp.lt.s32.totalorder %s1961, 63
        %s1963 = scalar_select %p1962, %s1961, 63
        %s1964 = smul.addr %s1963, 4
        %s1965 = scalar_lea.vmem %s5, %s1964
      $region52: #{gcn_forward.4} parent=47 // pred_fallthru
        _
    $region48: #{gcn_forward.4} parent=5 // pred_fallthru
      _
  $region6: #{gcn_forward.4} parent=0 // loop_footer
    %s15 = sadd.s32 1, %s11
  $region7: #{gcn_forward.4} parent=0 // loop_footer_branch
    %10 = sbr.rel target = $region3
  $region8: #{gcn_forward.4} parent=0 // loop_exit
    _

</llo_original>
